<compile_context>
chip_gen: v6e
topology: v6e:2x2x1
jax: 0.10.0
libtpu: 0.0.40
codegen_flags: <defaults>
</compile_context>

<pallas_src>
import functools

import jax
import jax.numpy as jnp
import numpy as np
from jax.experimental import pallas as pl
from jax.experimental.pallas import tpu as pltpu


def _resblock2_kernel(x_ref, w1_ref, w2_ref, p_ref, sel_ref, selt_ref,
                      gb1_ref, gb2_ref, o_ref, hpad_ref, *, eps: float):
    """One grid step = one block of B samples, fully fused ResBlock2.

    Layouts (WC = W*C = lane dim, S = H+2 padded rows per sample, BS = B*S):
      x_ref    : (1, BS, WC) f32   per-sample H-padded samples stacked on rows
                                   (row b*S+j = padded row j of sample b; halo
                                    rows already zero, written by the wrapper)
      w*_ref   : (3, WC, WC) bf16  block-tridiagonal conv weights (one per kh)
      p_ref    : (WC, WC)    f32   lane -> group-mean projection (1/n folded in)
      sel_ref  : (B, M)      f32   valid-row selector, M = BS-2 conv slab rows
      selt_ref : (M, B)      f32   transpose of sel (per-sample stats -> rows)
      gb*_ref  : (2, WC)     f32   gamma (row 0) / beta (row 1), tiled over W
      o_ref    : (1, BS, WC) f32   output slab (row r = sample r//S, row r%S)
      hpad_ref : (BS, WC)    f32   VMEM scratch: padded stage-1 activation
    """
    BS, WC = hpad_ref.shape
    M = BS - 2                       # conv slab rows: valid rows + seam rows

    xin = x_ref[0]                   # (BS, WC) f32, halo rows already zero
    sel = sel_ref[...]
    selt = selt_ref[...]
    proj = p_ref[...]

    def conv3x3(src, w_ref):
        # kw-shift + W-boundary masking live inside the (WC, WC) weights, so the
        # conv is 3 kh-shifted, K=WC bf16 matmuls with f32 accumulation.  The
        # accumulator starts from the kh=0 dot (no zero-init add), and the
        # operands are cast to bf16 right at the dot (MXU-only bf16).
        acc = jnp.dot(src[0:M, :].astype(jnp.bfloat16), w_ref[0],
                      preferred_element_type=jnp.float32)
        for kh in (1, 2):
            acc = acc + jnp.dot(src[kh:kh + M, :].astype(jnp.bfloat16), w_ref[kh],
                                preferred_element_type=jnp.float32)
        return acc

    def group_norm(acc, gb_ref):
        # Per-sample GroupNorm over the whole B-sample slab; all stats in f32.
        # `sel` excludes the 2 seam rows per sample boundary; `proj` folds the
        # lane->group->lane round trip and 1/n into one matmul per statistic.
        sums = jnp.dot(sel, acc, preferred_element_type=jnp.float32)          # (B, WC)
        sumsq = jnp.dot(sel, acc * acc, preferred_element_type=jnp.float32)   # (B, WC)
        mean = jnp.dot(sums, proj, preferred_element_type=jnp.float32)        # (B, WC)
        meansq = jnp.dot(sumsq, proj, preferred_element_type=jnp.float32)     # (B, WC)
        inv = jax.lax.rsqrt(meansq - mean * mean + eps)
        scale = inv * gb_ref[0:1, :]                  # fold gamma into (B, WC)
        shift = gb_ref[1:2, :] - mean * scale         # fold beta & mean into (B, WC)
        scale_rows = jnp.dot(selt, scale, preferred_element_type=jnp.float32)  # (M, WC)
        shift_rows = jnp.dot(selt, shift, preferred_element_type=jnp.float32)  # (M, WC)
        return acc * scale_rows + shift_rows          # seam rows come out exactly 0

    # ---- stage 1: conv1 -> GN1 -> ReLU ---------------------------------------
    h = jnp.maximum(group_norm(conv3x3(xin, w1_ref), gb1_ref), 0.0)

    # h never leaves VMEM.  Its seam rows are exactly zero, so storing it at row
    # offset 1 reproduces every inter-sample halo; only the outermost two halo
    # rows need explicit zeroing, done every step (megacore/parallel-safe).
    zrow = jnp.zeros((1, WC), jnp.float32)
    hpad_ref[0:1, :] = zrow
    hpad_ref[BS - 1:BS, :] = zrow
    hpad_ref[1:M + 1, :] = h

    # ---- stage 2: conv2 -> GN2 -> +identity -> ReLU --------------------------
    out = group_norm(conv3x3(hpad_ref, w2_ref), gb2_ref)
    out = jnp.maximum(out + xin[1:M + 1, :], 0.0)     # identity add in f32
    o_ref[0, 0:M, :] = out
    o_ref[0, M:BS, :] = jnp.zeros((2, WC), jnp.float32)   # unused trailing rows


def resblock2_forward(x_nchw, params):
    """Pallas implementation of ResBlock2.forward. Input/output are NCHW float32."""
    N, C, H, W = x_nchw.shape
    WC = W * C
    S = H + 2
    B = int(params["block_batch"])
    steps = pl.cdiv(N, B)
    Np = steps * B
    M = B * S - 2

    # NCHW -> packed (N, H, W*C); pure layout glue (transpose/reshape/pad only).
    x = jnp.transpose(x_nchw.astype(jnp.float32), (0, 2, 3, 1)).reshape(N, H, WC)
    if Np != N:
        x = jnp.concatenate([x, jnp.zeros((Np - N, H, WC), x.dtype)], axis=0)
    # Bake the per-sample H halo rows into the stacked layout so the kernel
    # needs no input pad scratch at all.
    x = jnp.pad(x.reshape(steps, B, H, WC),
                ((0, 0), (0, 0), (1, 1), (0, 0))).reshape(steps, B * S, WC)

    kernel = functools.partial(_resblock2_kernel, eps=1e-5)
    # TODO(synk): for production shapes (W*C >> 128 or large H) band along W with
    # an im2col K=9C layout per 128-lane slab and re-derive B / the H band from
    # pltpu.get_tpu_info().vmem_capacity_bytes (v7x has 64 MiB, not 128 MiB).
    # TODO(synk): mark the constant-index weight/projection specs single-buffered
    # (pipeline_mode=pl.Buffered(1)) to halve resident weight VMEM once that path
    # is validated on this JAX pin.
    out = pl.pallas_call(
        kernel,
        out_shape=jax.ShapeDtypeStruct((steps, B * S, WC), jnp.float32),
        grid_spec=pltpu.PrefetchScalarGridSpec(
            num_scalar_prefetch=0,
            grid=(steps,),
            in_specs=[
                pl.BlockSpec((1, B * S, WC), lambda s: (s, 0, 0)),   # x (stacked, padded)
                pl.BlockSpec((3, WC, WC), lambda s: (0, 0, 0)),      # conv1 weights (bf16)
                pl.BlockSpec((3, WC, WC), lambda s: (0, 0, 0)),      # conv2 weights (bf16)
                pl.BlockSpec((WC, WC), lambda s: (0, 0)),            # group-mean projection
                pl.BlockSpec((B, M), lambda s: (0, 0)),              # valid-row selector
                pl.BlockSpec((M, B), lambda s: (0, 0)),              # selector transpose
                pl.BlockSpec((2, WC), lambda s: (0, 0)),             # gamma/beta 1
                pl.BlockSpec((2, WC), lambda s: (0, 0)),             # gamma/beta 2
            ],
            out_specs=pl.BlockSpec((1, B * S, WC), lambda s: (s, 0, 0)),
            scratch_shapes=[pltpu.VMEM((B * S, WC), jnp.float32)],
        ),
        compiler_params=pltpu.CompilerParams(
            dimension_semantics=("parallel",),
            vmem_limit_bytes=32 * 1024 * 1024),
    )(x, params["w1"], params["w2"], params["P"], params["sel"], params["selT"],
      params["gb1"], params["gb2"])

    # Drop halo / seam rows and unpack back to NCHW.
    out = out.reshape(steps, B, S, WC)[:, :, :H, :].reshape(Np, H, W, C)
    return jnp.transpose(out[:N], (0, 3, 1, 2))


def build_params(w1_oihw, g1, b1, w2_oihw, g2, b2, *, H, W, groups, block_batch):
    """Precompute packed weights / GN projections / selectors (one-time, host side)."""
    C = int(np.asarray(w1_oihw).shape[0])
    cg = C // groups
    WC = W * C
    S = H + 2
    B = int(block_batch)
    M = B * S - 2

    def row_weights(w_oihw):
        # (Cout, Cin, 3, 3) torch layout -> 3 block-tridiagonal (WC, WC) matrices:
        #   Wrow[kh][wi*C+ci, wo*C+co] = K[co, ci, kh, kw]  with  wi = wo + kw - 1
        # (out-of-range wi blocks stay zero -> W-boundary handled by the weight).
        taps = np.transpose(np.asarray(w_oihw, np.float32), (2, 3, 1, 0))  # kh,kw,ci,co
        rows = np.zeros((3, WC, WC), np.float32)
        for kh in range(3):
            for wo in range(W):
                for kw in range(3):
                    wi = wo + kw - 1
                    if 0 <= wi < W:
                        rows[kh, wi * C:(wi + 1) * C, wo * C:(wo + 1) * C] = taps[kh, kw]
        return jnp.asarray(rows, jnp.bfloat16)            # MXU operand dtype

    # (s @ P)[l] = group mean of s for lane l's group (1/n folded in).
    lane_group = (np.arange(WC) % C) // cg
    P = (lane_group[:, None] == lane_group[None, :]).astype(np.float32) / float(H * W * cg)

    # Valid-row selector for the stacked conv slab (skips the 2 seam rows/sample).
    sel = np.zeros((B, M), np.float32)
    for b in range(B):
        sel[b, b * S:b * S + H] = 1.0

    def gb(gamma, beta):
        return jnp.stack([jnp.tile(jnp.asarray(gamma, jnp.float32), W),
                          jnp.tile(jnp.asarray(beta, jnp.float32), W)])

    return {"w1": row_weights(w1_oihw), "w2": row_weights(w2_oihw),
            "P": jnp.asarray(P), "sel": jnp.asarray(sel),
            "selT": jnp.asarray(np.ascontiguousarray(sel.T)),
            "gb1": gb(g1, b1), "gb2": gb(g2, b2), "block_batch": B}


# ---------------- pure-JAX reference (for correctness check) ----------------
def _ref_forward(x_nchw, w1, g1, b1, w2, g2, b2, groups):
    def conv(x, w):
        return jax.lax.conv_general_dilated(
            x, w, (1, 1), ((1, 1), (1, 1)),
            dimension_numbers=("NCHW", "OIHW", "NCHW"))

    def gn(x, g, b):
        N, C, H, W = x.shape
        xg = x.reshape(N, groups, C // groups, H, W)
        mean = xg.mean(axis=(2, 3, 4), keepdims=True)
        var = xg.var(axis=(2, 3, 4), keepdims=True)
        xn = ((xg - mean) / jnp.sqrt(var + 1e-5)).reshape(N, C, H, W)
        return xn * g[None, :, None, None] + b[None, :, None, None]

    h = jax.nn.relu(gn(conv(x_nchw, w1), g1, b1))
    return jax.nn.relu(gn(conv(h, w2), g2, b2) + x_nchw)


if __name__ == "__main__":
    # W * C = 128 -> lane-dense packing; B=8 samples/step -> conv M = 8*18-2 = 142
    # rows per matmul and an even 2-step "parallel" grid (one step per v7x TC).
    N, C, H, W = 16, 8, 16, 16
    groups = 8

    key = jax.random.PRNGKey(0)
    ks = jax.random.split(key, 7)

    def bf16_repr(a):
        # Snap conv inputs/weights to bf16-representable values so the kernel's
        # MXU-operand casts are exact; the f32 reference uses the same values.
        return a.astype(jnp.bfloat16).astype(jnp.float32)

    x = bf16_repr(jax.random.normal(ks[0], (N, C, H, W), jnp.float32))
    w1_t = bf16_repr(jax.random.normal(ks[1], (C, C, 3, 3), jnp.float32) * 0.1)
    w2_t = bf16_repr(jax.random.normal(ks[2], (C, C, 3, 3), jnp.float32) * 0.1)
    g1 = 1.0 + 0.1 * jax.random.normal(ks[3], (C,), jnp.float32)
    b1 = 0.1 * jax.random.normal(ks[4], (C,), jnp.float32)
    g2 = 1.0 + 0.1 * jax.random.normal(ks[5], (C,), jnp.float32)
    b2 = 0.1 * jax.random.normal(ks[6], (C,), jnp.float32)

    params = build_params(w1_t, g1, b1, w2_t, g2, b2,
                          H=H, W=W, groups=groups, block_batch=8)

    out = jax.block_until_ready(resblock2_forward(x, params))

    ref = _ref_forward(x, w1_t, g1, b1, w2_t, g2, b2, groups)
    # Tolerance covers the bf16 cast of the stage-1 activation fed to conv2
    # (all GroupNorm statistics and accumulations remain f32).
    np.testing.assert_allclose(np.asarray(out), np.asarray(ref),
                               rtol=2e-2, atol=2e-2)
    print("KERNEL_OK")
</pallas_src>

<mosaic_0001>
module attributes {stable_mosaic.version = 11 : i64} {
  func.func @_resblock2_kernel(%arg0: i32, %arg1: memref<1x144x128xf32, #tpu.memory_space<vmem>>, %arg2: memref<3x128x128xbf16, #tpu.memory_space<vmem>>, %arg3: memref<3x128x128xbf16, #tpu.memory_space<vmem>>, %arg4: memref<128x128xf32, #tpu.memory_space<vmem>>, %arg5: memref<8x142xf32, #tpu.memory_space<vmem>>, %arg6: memref<142x8xf32, #tpu.memory_space<vmem>>, %arg7: memref<2x128xf32, #tpu.memory_space<vmem>>, %arg8: memref<2x128xf32, #tpu.memory_space<vmem>>, %arg9: memref<1x144x128xf32, #tpu.memory_space<vmem>>, %arg10: memref<144x128xf32, #tpu.memory_space<vmem>>) attributes {dimension_semantics = [#tpu.dimension_semantics<parallel>], iteration_bounds = array<i64: 2>, scalar_prefetch = 0 : i64, scratch_operands = 1 : i64, tpu.core_type = #tpu.core_type<tc>, window_params = [{transform_indices = @transform_0, window_bounds = array<i64: 1, 144, 128>}, {pipeline_mode = #tpu.pipeline_mode<synchronous>, transform_indices = @transform_1, window_bounds = array<i64: 3, 128, 128>}, {pipeline_mode = #tpu.pipeline_mode<synchronous>, transform_indices = @transform_2, window_bounds = array<i64: 3, 128, 128>}, {pipeline_mode = #tpu.pipeline_mode<synchronous>, transform_indices = @transform_3, window_bounds = array<i64: 128, 128>}, {pipeline_mode = #tpu.pipeline_mode<synchronous>, transform_indices = @transform_4, window_bounds = array<i64: 8, 142>}, {pipeline_mode = #tpu.pipeline_mode<synchronous>, transform_indices = @transform_5, window_bounds = array<i64: 142, 8>}, {pipeline_mode = #tpu.pipeline_mode<synchronous>, transform_indices = @transform_6, window_bounds = array<i64: 2, 128>}, {pipeline_mode = #tpu.pipeline_mode<synchronous>, transform_indices = @transform_7, window_bounds = array<i64: 2, 128>}, {transform_indices = @transform_8, window_bounds = array<i64: 1, 144, 128>}]} {
    %c0 = arith.constant 0 : index
    %c0_0 = arith.constant 0 : index
    %c0_1 = arith.constant 0 : index
    %0 = vector.load %arg1[%c0, %c0_0, %c0_1] : memref<1x144x128xf32, #tpu.memory_space<vmem>>, vector<1x144x128xf32>
    %1 = vector.shape_cast %0 : vector<1x144x128xf32> to vector<144x128xf32>
    %c0_2 = arith.constant 0 : index
    %c0_3 = arith.constant 0 : index
    %2 = vector.load %arg5[%c0_2, %c0_3] : memref<8x142xf32, #tpu.memory_space<vmem>>, vector<8x142xf32>
    %c0_4 = arith.constant 0 : index
    %c0_5 = arith.constant 0 : index
    %3 = vector.load %arg6[%c0_4, %c0_5] : memref<142x8xf32, #tpu.memory_space<vmem>>, vector<142x8xf32>
    %c0_6 = arith.constant 0 : index
    %c0_7 = arith.constant 0 : index
    %4 = vector.load %arg4[%c0_6, %c0_7] : memref<128x128xf32, #tpu.memory_space<vmem>>, vector<128x128xf32>
    %5 = vector.extract_strided_slice %1 {offsets = [0, 0], sizes = [142, 128], strides = [1, 1]} : vector<144x128xf32> to vector<142x128xf32>
    %6 = arith.truncf %5 : vector<142x128xf32> to vector<142x128xbf16>
    %c0_8 = arith.constant 0 : index
    %c0_9 = arith.constant 0 : index
    %c0_10 = arith.constant 0 : index
    %7 = vector.load %arg2[%c0_8, %c0_9, %c0_10] : memref<3x128x128xbf16, #tpu.memory_space<vmem>>, vector<1x128x128xbf16>
    %8 = vector.shape_cast %7 : vector<1x128x128xbf16> to vector<128x128xbf16>
    %cst = arith.constant dense<0.000000e+00> : vector<142x128xf32>
    %9 = tpu.matmul %6, %8, %cst {dimension_numbers = #tpu.dot_dimension_numbers<[1], [0], [0], [1], [0, 0, 1, 1], [], []>} : vector<142x128xbf16>, vector<128x128xbf16>, vector<142x128xf32> -> vector<142x128xf32>
    %10 = vector.extract_strided_slice %1 {offsets = [1, 0], sizes = [142, 128], strides = [1, 1]} : vector<144x128xf32> to vector<142x128xf32>
    %11 = arith.truncf %10 : vector<142x128xf32> to vector<142x128xbf16>
    %c1 = arith.constant 1 : index
    %c0_11 = arith.constant 0 : index
    %c0_12 = arith.constant 0 : index
    %12 = vector.load %arg2[%c1, %c0_11, %c0_12] : memref<3x128x128xbf16, #tpu.memory_space<vmem>>, vector<1x128x128xbf16>
    %13 = vector.shape_cast %12 : vector<1x128x128xbf16> to vector<128x128xbf16>
    %cst_13 = arith.constant dense<0.000000e+00> : vector<142x128xf32>
    %14 = tpu.matmul %11, %13, %cst_13 {dimension_numbers = #tpu.dot_dimension_numbers<[1], [0], [0], [1], [0, 0, 1, 1], [], []>} : vector<142x128xbf16>, vector<128x128xbf16>, vector<142x128xf32> -> vector<142x128xf32>
    %15 = arith.addf %9, %14 : vector<142x128xf32>
    %16 = vector.extract_strided_slice %1 {offsets = [2, 0], sizes = [142, 128], strides = [1, 1]} : vector<144x128xf32> to vector<142x128xf32>
    %17 = arith.truncf %16 : vector<142x128xf32> to vector<142x128xbf16>
    %c2 = arith.constant 2 : index
    %c0_14 = arith.constant 0 : index
    %c0_15 = arith.constant 0 : index
    %18 = vector.load %arg2[%c2, %c0_14, %c0_15] : memref<3x128x128xbf16, #tpu.memory_space<vmem>>, vector<1x128x128xbf16>
    %19 = vector.shape_cast %18 : vector<1x128x128xbf16> to vector<128x128xbf16>
    %cst_16 = arith.constant dense<0.000000e+00> : vector<142x128xf32>
    %20 = tpu.matmul %17, %19, %cst_16 {dimension_numbers = #tpu.dot_dimension_numbers<[1], [0], [0], [1], [0, 0, 1, 1], [], []>} : vector<142x128xbf16>, vector<128x128xbf16>, vector<142x128xf32> -> vector<142x128xf32>
    %21 = arith.addf %15, %20 : vector<142x128xf32>
    %cst_17 = arith.constant dense<0.000000e+00> : vector<8x128xf32>
    %22 = tpu.matmul %2, %21, %cst_17 {dimension_numbers = #tpu.dot_dimension_numbers<[1], [0], [0], [1], [0, 0, 1, 1], [], []>} : vector<8x142xf32>, vector<142x128xf32>, vector<8x128xf32> -> vector<8x128xf32>
    %23 = arith.mulf %21, %21 : vector<142x128xf32>
    %cst_18 = arith.constant dense<0.000000e+00> : vector<8x128xf32>
    %24 = tpu.matmul %2, %23, %cst_18 {dimension_numbers = #tpu.dot_dimension_numbers<[1], [0], [0], [1], [0, 0, 1, 1], [], []>} : vector<8x142xf32>, vector<142x128xf32>, vector<8x128xf32> -> vector<8x128xf32>
    %cst_19 = arith.constant dense<0.000000e+00> : vector<8x128xf32>
    %25 = tpu.matmul %22, %4, %cst_19 {dimension_numbers = #tpu.dot_dimension_numbers<[1], [0], [0], [1], [0, 0, 1, 1], [], []>} : vector<8x128xf32>, vector<128x128xf32>, vector<8x128xf32> -> vector<8x128xf32>
    %cst_20 = arith.constant dense<0.000000e+00> : vector<8x128xf32>
    %26 = tpu.matmul %24, %4, %cst_20 {dimension_numbers = #tpu.dot_dimension_numbers<[1], [0], [0], [1], [0, 0, 1, 1], [], []>} : vector<8x128xf32>, vector<128x128xf32>, vector<8x128xf32> -> vector<8x128xf32>
    %27 = arith.mulf %25, %25 : vector<8x128xf32>
    %28 = arith.subf %26, %27 : vector<8x128xf32>
    %cst_21 = arith.constant 9.99999974E-6 : f32
    %29 = vector.broadcast %cst_21 : f32 to vector<8x128xf32>
    %30 = arith.addf %28, %29 : vector<8x128xf32>
    %31 = math.rsqrt %30 : vector<8x128xf32>
    %c0_22 = arith.constant 0 : index
    %c0_23 = arith.constant 0 : index
    %32 = vector.load %arg7[%c0_22, %c0_23] : memref<2x128xf32, #tpu.memory_space<vmem>>, vector<1x128xf32>
    %33 = vector.broadcast %32 : vector<1x128xf32> to vector<8x128xf32>
    %34 = arith.mulf %31, %33 : vector<8x128xf32>
    %c1_24 = arith.constant 1 : index
    %c0_25 = arith.constant 0 : index
    %35 = vector.load %arg7[%c1_24, %c0_25] : memref<2x128xf32, #tpu.memory_space<vmem>>, vector<1x128xf32>
    %36 = arith.mulf %25, %34 : vector<8x128xf32>
    %37 = vector.broadcast %35 : vector<1x128xf32> to vector<8x128xf32>
    %38 = arith.subf %37, %36 : vector<8x128xf32>
    %cst_26 = arith.constant dense<0.000000e+00> : vector<142x128xf32>
    %39 = tpu.matmul %3, %34, %cst_26 {dimension_numbers = #tpu.dot_dimension_numbers<[1], [0], [0], [1], [0, 0, 1, 1], [], []>} : vector<142x8xf32>, vector<8x128xf32>, vector<142x128xf32> -> vector<142x128xf32>
    %cst_27 = arith.constant dense<0.000000e+00> : vector<142x128xf32>
    %40 = tpu.matmul %3, %38, %cst_27 {dimension_numbers = #tpu.dot_dimension_numbers<[1], [0], [0], [1], [0, 0, 1, 1], [], []>} : vector<142x8xf32>, vector<8x128xf32>, vector<142x128xf32> -> vector<142x128xf32>
    %41 = arith.mulf %21, %39 : vector<142x128xf32>
    %42 = arith.addf %41, %40 : vector<142x128xf32>
    %cst_28 = arith.constant 0.000000e+00 : f32
    %43 = vector.broadcast %cst_28 : f32 to vector<142x128xf32>
    %44 = arith.maximumf %42, %43 : vector<142x128xf32>
    %cst_29 = arith.constant 0.000000e+00 : f32
    %45 = vector.broadcast %cst_29 : f32 to vector<1x128xf32>
    %c0_30 = arith.constant 0 : index
    %c0_31 = arith.constant 0 : index
    %46 = vector.load %arg10[%c0_30, %c0_31] : memref<144x128xf32, #tpu.memory_space<vmem>>, vector<1x128xf32>
    tpu.vector_store %arg10[%c0_30, %c0_31], %45 {strides = array<i32>} : memref<144x128xf32, #tpu.memory_space<vmem>>, vector<1x128xf32>,
    %c143 = arith.constant 143 : index
    %c0_32 = arith.constant 0 : index
    %47 = vector.load %arg10[%c143, %c0_32] : memref<144x128xf32, #tpu.memory_space<vmem>>, vector<1x128xf32>
    tpu.vector_store %arg10[%c143, %c0_32], %45 {strides = array<i32>} : memref<144x128xf32, #tpu.memory_space<vmem>>, vector<1x128xf32>,
    %c1_33 = arith.constant 1 : index
    %c0_34 = arith.constant 0 : index
    %48 = vector.load %arg10[%c1_33, %c0_34] : memref<144x128xf32, #tpu.memory_space<vmem>>, vector<142x128xf32>
    tpu.vector_store %arg10[%c1_33, %c0_34], %44 {strides = array<i32>} : memref<144x128xf32, #tpu.memory_space<vmem>>, vector<142x128xf32>,
    %c0_35 = arith.constant 0 : index
    %c0_36 = arith.constant 0 : index
    %49 = vector.load %arg10[%c0_35, %c0_36] : memref<144x128xf32, #tpu.memory_space<vmem>>, vector<142x128xf32>
    %50 = arith.truncf %49 : vector<142x128xf32> to vector<142x128xbf16>
    %c0_37 = arith.constant 0 : index
    %c0_38 = arith.constant 0 : index
    %c0_39 = arith.constant 0 : index
    %51 = vector.load %arg3[%c0_37, %c0_38, %c0_39] : memref<3x128x128xbf16, #tpu.memory_space<vmem>>, vector<1x128x128xbf16>
    %52 = vector.shape_cast %51 : vector<1x128x128xbf16> to vector<128x128xbf16>
    %cst_40 = arith.constant dense<0.000000e+00> : vector<142x128xf32>
    %53 = tpu.matmul %50, %52, %cst_40 {dimension_numbers = #tpu.dot_dimension_numbers<[1], [0], [0], [1], [0, 0, 1, 1], [], []>} : vector<142x128xbf16>, vector<128x128xbf16>, vector<142x128xf32> -> vector<142x128xf32>
    %c1_41 = arith.constant 1 : index
    %c0_42 = arith.constant 0 : index
    %54 = vector.load %arg10[%c1_41, %c0_42] : memref<144x128xf32, #tpu.memory_space<vmem>>, vector<142x128xf32>
    %55 = arith.truncf %54 : vector<142x128xf32> to vector<142x128xbf16>
    %c1_43 = arith.constant 1 : index
    %c0_44 = arith.constant 0 : index
    %c0_45 = arith.constant 0 : index
    %56 = vector.load %arg3[%c1_43, %c0_44, %c0_45] : memref<3x128x128xbf16, #tpu.memory_space<vmem>>, vector<1x128x128xbf16>
    %57 = vector.shape_cast %56 : vector<1x128x128xbf16> to vector<128x128xbf16>
    %cst_46 = arith.constant dense<0.000000e+00> : vector<142x128xf32>
    %58 = tpu.matmul %55, %57, %cst_46 {dimension_numbers = #tpu.dot_dimension_numbers<[1], [0], [0], [1], [0, 0, 1, 1], [], []>} : vector<142x128xbf16>, vector<128x128xbf16>, vector<142x128xf32> -> vector<142x128xf32>
    %59 = arith.addf %53, %58 : vector<142x128xf32>
    %c2_47 = arith.constant 2 : index
    %c0_48 = arith.constant 0 : index
    %60 = vector.load %arg10[%c2_47, %c0_48] : memref<144x128xf32, #tpu.memory_space<vmem>>, vector<142x128xf32>
    %61 = arith.truncf %60 : vector<142x128xf32> to vector<142x128xbf16>
    %c2_49 = arith.constant 2 : index
    %c0_50 = arith.constant 0 : index
    %c0_51 = arith.constant 0 : index
    %62 = vector.load %arg3[%c2_49, %c0_50, %c0_51] : memref<3x128x128xbf16, #tpu.memory_space<vmem>>, vector<1x128x128xbf16>
    %63 = vector.shape_cast %62 : vector<1x128x128xbf16> to vector<128x128xbf16>
    %cst_52 = arith.constant dense<0.000000e+00> : vector<142x128xf32>
    %64 = tpu.matmul %61, %63, %cst_52 {dimension_numbers = #tpu.dot_dimension_numbers<[1], [0], [0], [1], [0, 0, 1, 1], [], []>} : vector<142x128xbf16>, vector<128x128xbf16>, vector<142x128xf32> -> vector<142x128xf32>
    %65 = arith.addf %59, %64 : vector<142x128xf32>
    %cst_53 = arith.constant dense<0.000000e+00> : vector<8x128xf32>
    %66 = tpu.matmul %2, %65, %cst_53 {dimension_numbers = #tpu.dot_dimension_numbers<[1], [0], [0], [1], [0, 0, 1, 1], [], []>} : vector<8x142xf32>, vector<142x128xf32>, vector<8x128xf32> -> vector<8x128xf32>
    %67 = arith.mulf %65, %65 : vector<142x128xf32>
    %cst_54 = arith.constant dense<0.000000e+00> : vector<8x128xf32>
    %68 = tpu.matmul %2, %67, %cst_54 {dimension_numbers = #tpu.dot_dimension_numbers<[1], [0], [0], [1], [0, 0, 1, 1], [], []>} : vector<8x142xf32>, vector<142x128xf32>, vector<8x128xf32> -> vector<8x128xf32>
    %cst_55 = arith.constant dense<0.000000e+00> : vector<8x128xf32>
    %69 = tpu.matmul %66, %4, %cst_55 {dimension_numbers = #tpu.dot_dimension_numbers<[1], [0], [0], [1], [0, 0, 1, 1], [], []>} : vector<8x128xf32>, vector<128x128xf32>, vector<8x128xf32> -> vector<8x128xf32>
    %cst_56 = arith.constant dense<0.000000e+00> : vector<8x128xf32>
    %70 = tpu.matmul %68, %4, %cst_56 {dimension_numbers = #tpu.dot_dimension_numbers<[1], [0], [0], [1], [0, 0, 1, 1], [], []>} : vector<8x128xf32>, vector<128x128xf32>, vector<8x128xf32> -> vector<8x128xf32>
    %71 = arith.mulf %69, %69 : vector<8x128xf32>
    %72 = arith.subf %70, %71 : vector<8x128xf32>
    %cst_57 = arith.constant 9.99999974E-6 : f32
    %73 = vector.broadcast %cst_57 : f32 to vector<8x128xf32>
    %74 = arith.addf %72, %73 : vector<8x128xf32>
    %75 = math.rsqrt %74 : vector<8x128xf32>
    %c0_58 = arith.constant 0 : index
    %c0_59 = arith.constant 0 : index
    %76 = vector.load %arg8[%c0_58, %c0_59] : memref<2x128xf32, #tpu.memory_space<vmem>>, vector<1x128xf32>
    %77 = vector.broadcast %76 : vector<1x128xf32> to vector<8x128xf32>
    %78 = arith.mulf %75, %77 : vector<8x128xf32>
    %c1_60 = arith.constant 1 : index
    %c0_61 = arith.constant 0 : index
    %79 = vector.load %arg8[%c1_60, %c0_61] : memref<2x128xf32, #tpu.memory_space<vmem>>, vector<1x128xf32>
    %80 = arith.mulf %69, %78 : vector<8x128xf32>
    %81 = vector.broadcast %79 : vector<1x128xf32> to vector<8x128xf32>
    %82 = arith.subf %81, %80 : vector<8x128xf32>
    %cst_62 = arith.constant dense<0.000000e+00> : vector<142x128xf32>
    %83 = tpu.matmul %3, %78, %cst_62 {dimension_numbers = #tpu.dot_dimension_numbers<[1], [0], [0], [1], [0, 0, 1, 1], [], []>} : vector<142x8xf32>, vector<8x128xf32>, vector<142x128xf32> -> vector<142x128xf32>
    %cst_63 = arith.constant dense<0.000000e+00> : vector<142x128xf32>
    %84 = tpu.matmul %3, %82, %cst_63 {dimension_numbers = #tpu.dot_dimension_numbers<[1], [0], [0], [1], [0, 0, 1, 1], [], []>} : vector<142x8xf32>, vector<8x128xf32>, vector<142x128xf32> -> vector<142x128xf32>
    %85 = arith.mulf %65, %83 : vector<142x128xf32>
    %86 = arith.addf %85, %84 : vector<142x128xf32>
    %87 = vector.extract_strided_slice %1 {offsets = [1, 0], sizes = [142, 128], strides = [1, 1]} : vector<144x128xf32> to vector<142x128xf32>
    %88 = arith.addf %86, %87 : vector<142x128xf32>
    %cst_64 = arith.constant 0.000000e+00 : f32
    %89 = vector.broadcast %cst_64 : f32 to vector<142x128xf32>
    %90 = arith.maximumf %88, %89 : vector<142x128xf32>
    %c0_65 = arith.constant 0 : index
    %c0_66 = arith.constant 0 : index
    %c0_67 = arith.constant 0 : index
    %91 = vector.load %arg9[%c0_65, %c0_66, %c0_67] : memref<1x144x128xf32, #tpu.memory_space<vmem>>, vector<1x142x128xf32>
    %92 = vector.shape_cast %91 : vector<1x142x128xf32> to vector<142x128xf32>
    %93 = vector.shape_cast %90 : vector<142x128xf32> to vector<1x142x128xf32>
    tpu.vector_store %arg9[%c0_65, %c0_66, %c0_67], %93 {strides = array<i32>} : memref<1x144x128xf32, #tpu.memory_space<vmem>>, vector<1x142x128xf32>,
    %cst_68 = arith.constant 0.000000e+00 : f32
    %94 = vector.broadcast %cst_68 : f32 to vector<2x128xf32>
    %c0_69 = arith.constant 0 : index
    %c142 = arith.constant 142 : index
    %c0_70 = arith.constant 0 : index
    %95 = vector.load %arg9[%c0_69, %c142, %c0_70] : memref<1x144x128xf32, #tpu.memory_space<vmem>>, vector<1x2x128xf32>
    %96 = vector.shape_cast %95 : vector<1x2x128xf32> to vector<2x128xf32>
    %97 = vector.shape_cast %94 : vector<2x128xf32> to vector<1x2x128xf32>
    tpu.vector_store %arg9[%c0_69, %c142, %c0_70], %97 {strides = array<i32>} : memref<1x144x128xf32, #tpu.memory_space<vmem>>, vector<1x2x128xf32>,
    return
  }
  func.func @transform_0(%arg0: i32) -> (i32, i32, i32) {
    %c0_i32 = arith.constant 0 : i32
    %c0_i32_0 = arith.constant 0 : i32
    %c0_i32_1 = arith.constant 0 : i32
    return %arg0, %c0_i32, %c0_i32_0 : i32, i32, i32
  }
  func.func @transform_1(%arg0: i32) -> (i32, i32, i32) {
    %c0_i32 = arith.constant 0 : i32
    %c0_i32_0 = arith.constant 0 : i32
    %c0_i32_1 = arith.constant 0 : i32
    %c0_i32_2 = arith.constant 0 : i32
    return %c0_i32, %c0_i32_0, %c0_i32_1 : i32, i32, i32
  }
  func.func @transform_2(%arg0: i32) -> (i32, i32, i32) {
    %c0_i32 = arith.constant 0 : i32
    %c0_i32_0 = arith.constant 0 : i32
    %c0_i32_1 = arith.constant 0 : i32
    %c0_i32_2 = arith.constant 0 : i32
    return %c0_i32, %c0_i32_0, %c0_i32_1 : i32, i32, i32
  }
  func.func @transform_3(%arg0: i32) -> (i32, i32) {
    %c0_i32 = arith.constant 0 : i32
    %c0_i32_0 = arith.constant 0 : i32
    %c0_i32_1 = arith.constant 0 : i32
    return %c0_i32, %c0_i32_0 : i32, i32
  }
  func.func @transform_4(%arg0: i32) -> (i32, i32) {
    %c0_i32 = arith.constant 0 : i32
    %c0_i32_0 = arith.constant 0 : i32
    %c0_i32_1 = arith.constant 0 : i32
    return %c0_i32, %c0_i32_0 : i32, i32
  }
  func.func @transform_5(%arg0: i32) -> (i32, i32) {
    %c0_i32 = arith.constant 0 : i32
    %c0_i32_0 = arith.constant 0 : i32
    %c0_i32_1 = arith.constant 0 : i32
    return %c0_i32, %c0_i32_0 : i32, i32
  }
  func.func @transform_6(%arg0: i32) -> (i32, i32) {
    %c0_i32 = arith.constant 0 : i32
    %c0_i32_0 = arith.constant 0 : i32
    %c0_i32_1 = arith.constant 0 : i32
    return %c0_i32, %c0_i32_0 : i32, i32
  }
  func.func @transform_7(%arg0: i32) -> (i32, i32) {
    %c0_i32 = arith.constant 0 : i32
    %c0_i32_0 = arith.constant 0 : i32
    %c0_i32_1 = arith.constant 0 : i32
    return %c0_i32, %c0_i32_0 : i32, i32
  }
  func.func @transform_8(%arg0: i32) -> (i32, i32, i32) {
    %c0_i32 = arith.constant 0 : i32
    %c0_i32_0 = arith.constant 0 : i32
    %c0_i32_1 = arith.constant 0 : i32
    return %arg0, %c0_i32, %c0_i32_0 : i32, i32, i32
  }
}

</mosaic_0001>

<llo_original>
// kernel: tpu_custom_call.1
$region0: #{tpu_custom_call.1}
  #allocation0 [shape = 'u32[]', space=smem, size = 0x4, offset = 0x4, fixed_abs, tag = 'smem constant byte address 0x4 - core index']
  #allocation1 [shape = 'u32[144,128]{1,0:T(1,128)}', space=vmem, size = 0x12000, scoped, tag = 'internal scratch']
  #allocation2 [shape = 'f32[144,128]{1,0:T(8,128)}', space=vmem, size = 0x12000, scoped, tag = 'scratch operand']
  %s0 = inlined_call_operand.hbm [shape: f32[2,144,128], index: 0, kind: input, shape index: {}]
  %s1 = inlined_call_operand.hbm [shape: bf16[3,128,128], index: 1, kind: input, shape index: {}]
  %s2 = inlined_call_operand.hbm [shape: bf16[3,128,128], index: 2, kind: input, shape index: {}]
  %s3 = inlined_call_operand.vmem [shape: f32[128,128], index: 3, kind: input, shape index: {}]
  %s4 = inlined_call_operand.vmem [shape: f32[8,142], index: 4, kind: input, shape index: {}]
  %s5 = inlined_call_operand.vmem [shape: f32[142,8], index: 5, kind: input, shape index: {}]
  %s6 = inlined_call_operand.vmem [shape: f32[2,128], index: 6, kind: input, shape index: {}]
  %s7 = inlined_call_operand.vmem [shape: f32[2,128], index: 7, kind: input, shape index: {}]
  %s8 = inlined_call_operand.hbm [shape: f32[2,144,128], index: 8, kind: output, shape index: {}]
  %s9 = sld [smem:[#allocation0]]
  $region77: #{tpu_custom_call.1} parent=0
    _
  %s11 = ssub.s32 1, %s9
  %s12 = scalar_select 0, %s11, %s9
  $region1: #{tpu_custom_call.1} parent=0
    #allocation3 [shape = 'u8[147456]{0}', space=vmem, size = 0x24000, scoped, tag = 'input window, operand 0']
    #allocation4 [shape = 's32[2]{0}', space=sflag, size = 0x8, scoped, tag = 'scoped memory for tpu_custom_call.1']
    #allocation5 [shape = 's32[2]{0}', space=sflag, size = 0x8, scoped, tag = 'scoped memory for tpu_custom_call.1']
    #allocation6 [shape = 'u8[98304]{0}', space=vmem, size = 0x18000, scoped, tag = 'input window, operand 1, single buffered']
    #allocation7 [shape = 's32[1]{0}', space=sflag, size = 0x4, scoped, tag = 'scoped memory for tpu_custom_call.1']
    #allocation8 [shape = 'u8[98304]{0}', space=vmem, size = 0x18000, scoped, tag = 'input window, operand 2, single buffered']
    #allocation9 [shape = 'u8[147456]{0}', space=vmem, size = 0x24000, scoped, tag = 'output window, operand 0']
    %13 = vsyncpa [#allocation4], 0
    %s14 = scalar_lea.sflag [#allocation4], 1
    %15 = vsyncpa %s14, 0
    %16 = vsyncpa [#allocation7], 0
    %17 = vsyncpa [#allocation5], 0
    %s18 = scalar_lea.sflag [#allocation5], 1
    %19 = vsyncpa %s18, 0
    loop: start=0, step=1, limit=4
    $region2: #{tpu_custom_call.1} parent=1 // loop_pre_header
      _
    $region3: #{tpu_custom_call.1} parent=1 // loop_header
      %s21 = sphi 0, %s25
      %p22 = scmp.ge.s32.totalorder %s21, 4
      %s31 = sphi 0, %s33
      %s34 = sphi 0, %s31
      %s35 = sphi 0, %s34
      %s51 = sphi 0, %s35
      %s55 = sphi 0, %s55
      %s57 = sphi 0, %s55
      %s58 = sphi 0, %s57
      %s72 = sphi 0, %s58
      %s76 = sphi 0, %s76
      %s78 = sphi 0, %s76
      %s79 = sphi 0, %s78
      %s93 = sphi 0, %s79
      %s97 = sphi 0, %s97
      %s99 = sphi 0, %s97
      %s100 = sphi 0, %s99
      %s114 = sphi 0, %s100
      %s118 = sphi 0, %s118
      %s120 = sphi 0, %s118
      %s121 = sphi 0, %s120
      %s135 = sphi 0, %s121
      %s139 = sphi 0, %s139
      %s141 = sphi 0, %s139
      %s142 = sphi 0, %s141
      %s156 = sphi 0, %s142
      %s160 = sphi 0, %s160
      %s162 = sphi 0, %s160
      %s163 = sphi 0, %s162
      %s177 = sphi 0, %s163
      %s181 = sphi 0, %s181
      %s183 = sphi 0, %s181
      %s184 = sphi 0, %s183
      %s198 = sphi 0, %s184
      %s204 = sphi 0, %s206
      %s207 = sphi 0, %s204
      %s208 = sphi 0, %s207
      %s224 = sphi 0, %s208
    $region4: #{tpu_custom_call.1} parent=1 // loop_header_branch
      %24 = sbr.rel (%p22) target = $region8
    $region5: #{tpu_custom_call.1} parent=1 // loop_body
      %s26 = ssub.s32 %s21, 1
      %s27 = ssub.s32 %s21, 2
      %s28 = sadd.s32 %s21, 1
      %s29 = ssub.s32 %s21, %s28
      %p30 = scmp.eq.s32.totalorder %s29, 0
      %s32 = sadd.s32 %s31, 1
      %s33 = scalar_select %p30, %s31, %s32
      %p36 = pneg %p30
      %p37 = scmp.eq.s32.totalorder %s21, 1
      %p38 = por %p36, %p37
      %p39 = scmp.ne.s32.totalorder %s31, %s34
      %p40 = scmp.eq.s32.totalorder %s21, 0
      %p41 = por %p39, %p40
      %p42 = scmp.ne.s32.totalorder %s31, %s34
      %p43 = scmp.eq.s32.totalorder %s26, 1
      %p44 = por %p42, %p43
      %p45 = scmp.ne.s32.totalorder %s34, %s35
      %p46 = scmp.eq.s32.totalorder %s26, 0
      %p47 = por %p45, %p46
      %p48 = scmp.ne.s32.totalorder %s34, %s35
      %p49 = scmp.eq.s32.totalorder %s27, 1
      %p50 = por %p48, %p49
      %p52 = scmp.ne.s32.totalorder %s35, %s51
      %p53 = scmp.eq.s32.totalorder %s27, 0
      %p54 = por %p52, %p53
      %s56 = sadd.s32 %s55, 1
      %p59 = scmp.eq.s32.totalorder %s21, 1
      %p60 = scmp.ne.s32.totalorder %s55, %s57
      %p61 = scmp.eq.s32.totalorder %s21, 0
      %p62 = por %p60, %p61
      %p63 = scmp.ne.s32.totalorder %s55, %s57
      %p64 = scmp.eq.s32.totalorder %s26, 1
      %p65 = por %p63, %p64
      %p66 = scmp.ne.s32.totalorder %s57, %s58
      %p67 = scmp.eq.s32.totalorder %s26, 0
      %p68 = por %p66, %p67
      %p69 = scmp.ne.s32.totalorder %s57, %s58
      %p70 = scmp.eq.s32.totalorder %s27, 1
      %p71 = por %p69, %p70
      %p73 = scmp.ne.s32.totalorder %s58, %s72
      %p74 = scmp.eq.s32.totalorder %s27, 0
      %p75 = por %p73, %p74
      %s77 = sadd.s32 %s76, 1
      %p80 = scmp.eq.s32.totalorder %s21, 1
      %p81 = scmp.ne.s32.totalorder %s76, %s78
      %p82 = scmp.eq.s32.totalorder %s21, 0
      %p83 = por %p81, %p82
      %p84 = scmp.ne.s32.totalorder %s76, %s78
      %p85 = scmp.eq.s32.totalorder %s26, 1
      %p86 = por %p84, %p85
      %p87 = scmp.ne.s32.totalorder %s78, %s79
      %p88 = scmp.eq.s32.totalorder %s26, 0
      %p89 = por %p87, %p88
      %p90 = scmp.ne.s32.totalorder %s78, %s79
      %p91 = scmp.eq.s32.totalorder %s27, 1
      %p92 = por %p90, %p91
      %p94 = scmp.ne.s32.totalorder %s79, %s93
      %p95 = scmp.eq.s32.totalorder %s27, 0
      %p96 = por %p94, %p95
      %s98 = sadd.s32 %s97, 1
      %p101 = scmp.eq.s32.totalorder %s21, 1
      %p102 = scmp.ne.s32.totalorder %s97, %s99
      %p103 = scmp.eq.s32.totalorder %s21, 0
      %p104 = por %p102, %p103
      %p105 = scmp.ne.s32.totalorder %s97, %s99
      %p106 = scmp.eq.s32.totalorder %s26, 1
      %p107 = por %p105, %p106
      %p108 = scmp.ne.s32.totalorder %s99, %s100
      %p109 = scmp.eq.s32.totalorder %s26, 0
      %p110 = por %p108, %p109
      %p111 = scmp.ne.s32.totalorder %s99, %s100
      %p112 = scmp.eq.s32.totalorder %s27, 1
      %p113 = por %p111, %p112
      %p115 = scmp.ne.s32.totalorder %s100, %s114
      %p116 = scmp.eq.s32.totalorder %s27, 0
      %p117 = por %p115, %p116
      %s119 = sadd.s32 %s118, 1
      %p122 = scmp.eq.s32.totalorder %s21, 1
      %p123 = scmp.ne.s32.totalorder %s118, %s120
      %p124 = scmp.eq.s32.totalorder %s21, 0
      %p125 = por %p123, %p124
      %p126 = scmp.ne.s32.totalorder %s118, %s120
      %p127 = scmp.eq.s32.totalorder %s26, 1
      %p128 = por %p126, %p127
      %p129 = scmp.ne.s32.totalorder %s120, %s121
      %p130 = scmp.eq.s32.totalorder %s26, 0
      %p131 = por %p129, %p130
      %p132 = scmp.ne.s32.totalorder %s120, %s121
      %p133 = scmp.eq.s32.totalorder %s27, 1
      %p134 = por %p132, %p133
      %p136 = scmp.ne.s32.totalorder %s121, %s135
      %p137 = scmp.eq.s32.totalorder %s27, 0
      %p138 = por %p136, %p137
      %s140 = sadd.s32 %s139, 1
      %p143 = scmp.eq.s32.totalorder %s21, 1
      %p144 = scmp.ne.s32.totalorder %s139, %s141
      %p145 = scmp.eq.s32.totalorder %s21, 0
      %p146 = por %p144, %p145
      %p147 = scmp.ne.s32.totalorder %s139, %s141
      %p148 = scmp.eq.s32.totalorder %s26, 1
      %p149 = por %p147, %p148
      %p150 = scmp.ne.s32.totalorder %s141, %s142
      %p151 = scmp.eq.s32.totalorder %s26, 0
      %p152 = por %p150, %p151
      %p153 = scmp.ne.s32.totalorder %s141, %s142
      %p154 = scmp.eq.s32.totalorder %s27, 1
      %p155 = por %p153, %p154
      %p157 = scmp.ne.s32.totalorder %s142, %s156
      %p158 = scmp.eq.s32.totalorder %s27, 0
      %p159 = por %p157, %p158
      %s161 = sadd.s32 %s160, 1
      %p164 = scmp.eq.s32.totalorder %s21, 1
      %p165 = scmp.ne.s32.totalorder %s160, %s162
      %p166 = scmp.eq.s32.totalorder %s21, 0
      %p167 = por %p165, %p166
      %p168 = scmp.ne.s32.totalorder %s160, %s162
      %p169 = scmp.eq.s32.totalorder %s26, 1
      %p170 = por %p168, %p169
      %p171 = scmp.ne.s32.totalorder %s162, %s163
      %p172 = scmp.eq.s32.totalorder %s26, 0
      %p173 = por %p171, %p172
      %p174 = scmp.ne.s32.totalorder %s162, %s163
      %p175 = scmp.eq.s32.totalorder %s27, 1
      %p176 = por %p174, %p175
      %p178 = scmp.ne.s32.totalorder %s163, %s177
      %p179 = scmp.eq.s32.totalorder %s27, 0
      %p180 = por %p178, %p179
      %s182 = sadd.s32 %s181, 1
      %p185 = scmp.eq.s32.totalorder %s21, 1
      %p186 = scmp.ne.s32.totalorder %s181, %s183
      %p187 = scmp.eq.s32.totalorder %s21, 0
      %p188 = por %p186, %p187
      %p189 = scmp.ne.s32.totalorder %s181, %s183
      %p190 = scmp.eq.s32.totalorder %s26, 1
      %p191 = por %p189, %p190
      %p192 = scmp.ne.s32.totalorder %s183, %s184
      %p193 = scmp.eq.s32.totalorder %s26, 0
      %p194 = por %p192, %p193
      %p195 = scmp.ne.s32.totalorder %s183, %s184
      %p196 = scmp.eq.s32.totalorder %s27, 1
      %p197 = por %p195, %p196
      %p199 = scmp.ne.s32.totalorder %s184, %s198
      %p200 = scmp.eq.s32.totalorder %s27, 0
      %p201 = por %p199, %p200
      %s202 = ssub.s32 %s21, %s28
      %p203 = scmp.eq.s32.totalorder %s202, 0
      %s205 = sadd.s32 %s204, 1
      %s206 = scalar_select %p203, %s204, %s205
      %p209 = pneg %p203
      %p210 = scmp.eq.s32.totalorder %s21, 1
      %p211 = por %p209, %p210
      %p212 = scmp.ne.s32.totalorder %s204, %s207
      %p213 = scmp.eq.s32.totalorder %s21, 0
      %p214 = por %p212, %p213
      %p215 = scmp.ne.s32.totalorder %s204, %s207
      %p216 = scmp.eq.s32.totalorder %s26, 1
      %p217 = por %p215, %p216
      %p218 = scmp.ne.s32.totalorder %s207, %s208
      %p219 = scmp.eq.s32.totalorder %s26, 0
      %p220 = por %p218, %p219
      %p221 = scmp.ne.s32.totalorder %s207, %s208
      %p222 = scmp.eq.s32.totalorder %s27, 1
      %p223 = por %p221, %p222
      %p225 = scmp.ne.s32.totalorder %s208, %s224
      %p226 = scmp.eq.s32.totalorder %s27, 0
      %p227 = por %p225, %p226
      %p228 = scmp.le.s32.totalorder 1, %s21
      %p229 = scmp.lt.s32.totalorder %s21, 3
      %p230 = pnand %p228, %p229
      %p231 = pneg %p230
      // Predicated region
      $region9: #{tpu_custom_call.1} parent=5 // pred_check
        _
      $region10: #{tpu_custom_call.1} parent=5 // pred_check_branch
        %233 = sbr.rel (%p230) target = $region12
      $region11: #{tpu_custom_call.1} parent=5 // pred_region
        %s234 = ssub.s32 %s21, 1
        // Predicated region
        $region13: #{tpu_custom_call.1} parent=11 // pred_check
          %p235 = pneg %p68
        $region14: #{tpu_custom_call.1} parent=11 // pred_check_branch
          %237 = sbr.rel (%p235) target = $region16
        $region15: #{tpu_custom_call.1} parent=11 // pred_region
          %s239 = ssub.s32 3072, 3072
          %240 = vsyncadd [#allocation7], %s239
          %s241 = sshll.u32 [#allocation6], 4
          %s242 = int_to_ptr.vmem [resolvable:$true] %s241
          %247 = dma.hbm_to_vmem [thread:$0]  %s1, 3072, %s242, [#allocation7], 64, 64, 4
        $region16: #{tpu_custom_call.1} parent=11 // pred_fallthru
          _
        // Predicated region
        $region17: #{tpu_custom_call.1} parent=11 // pred_check
          %p248 = pneg %p89
        $region18: #{tpu_custom_call.1} parent=11 // pred_check_branch
          %250 = sbr.rel (%p248) target = $region20
        $region19: #{tpu_custom_call.1} parent=11 // pred_region
          %s252 = ssub.s32 3072, 3072
          %253 = vsyncadd [#allocation7], %s252
          %s254 = sshll.u32 [#allocation8], 4
          %s255 = int_to_ptr.vmem [resolvable:$true] %s254
          %260 = dma.hbm_to_vmem [thread:$0]  %s2, 3072, %s255, [#allocation7], 64, 64, 4
        $region20: #{tpu_custom_call.1} parent=11 // pred_fallthru
          _
        // Predicated region
        $region21: #{tpu_custom_call.1} parent=11 // pred_check
          %p261 = pneg %p110
        $region22: #{tpu_custom_call.1} parent=11 // pred_check_branch
          %263 = sbr.rel (%p261) target = $region24
        $region23: #{tpu_custom_call.1} parent=11 // pred_region
          _
        $region24: #{tpu_custom_call.1} parent=11 // pred_fallthru
          _
        // Predicated region
        $region25: #{tpu_custom_call.1} parent=11 // pred_check
          %p264 = pneg %p131
        $region26: #{tpu_custom_call.1} parent=11 // pred_check_branch
          %266 = sbr.rel (%p264) target = $region28
        $region27: #{tpu_custom_call.1} parent=11 // pred_region
          _
        $region28: #{tpu_custom_call.1} parent=11 // pred_fallthru
          _
        // Predicated region
        $region29: #{tpu_custom_call.1} parent=11 // pred_check
          %p267 = pneg %p152
        $region30: #{tpu_custom_call.1} parent=11 // pred_check_branch
          %269 = sbr.rel (%p267) target = $region32
        $region31: #{tpu_custom_call.1} parent=11 // pred_region
          _
        $region32: #{tpu_custom_call.1} parent=11 // pred_fallthru
          _
        // Predicated region
        $region33: #{tpu_custom_call.1} parent=11 // pred_check
          %p270 = pneg %p173
        $region34: #{tpu_custom_call.1} parent=11 // pred_check_branch
          %272 = sbr.rel (%p270) target = $region36
        $region35: #{tpu_custom_call.1} parent=11 // pred_region
          _
        $region36: #{tpu_custom_call.1} parent=11 // pred_fallthru
          _
        // Predicated region
        $region37: #{tpu_custom_call.1} parent=11 // pred_check
          %p273 = pneg %p194
        $region38: #{tpu_custom_call.1} parent=11 // pred_check_branch
          %275 = sbr.rel (%p273) target = $region40
        $region39: #{tpu_custom_call.1} parent=11 // pred_region
          _
        $region40: #{tpu_custom_call.1} parent=11 // pred_fallthru
          _
      $region12: #{tpu_custom_call.1} parent=5 // pred_fallthru
        _
      %p276 = scmp.lt.s32.totalorder %s21, 2
      // Predicated region
      $region41: #{tpu_custom_call.1} parent=5 // pred_check
        %p277 = pneg %p276
      $region42: #{tpu_custom_call.1} parent=5 // pred_check_branch
        %279 = sbr.rel (%p277) target = $region44
      $region43: #{tpu_custom_call.1} parent=5 // pred_region
        // Predicated region
        $region45: #{tpu_custom_call.1} parent=43 // pred_check
          %p280 = pneg %p41
        $region46: #{tpu_custom_call.1} parent=43 // pred_check_branch
          %282 = sbr.rel (%p280) target = $region48
        $region47: #{tpu_custom_call.1} parent=43 // pred_region
          %s283 = sand.u32 %s31, 1
          %s284 = scalar_lea.sflag [#allocation4], %s283
          %s285 = sand.u32 %s31, 1
          %s286 = smul.addr %s285, 144
          %s287 = scalar_lea.vmem [#allocation3], %s286
          %s289 = ssub.s32 2304, 2304
          %290 = vsyncadd %s284, %s289
          %s291 = smul.addr %s21, 18
          %s292 = smul.addr %s291, 128
          %s293 = scalar_lea.hbm %s0, %s292
          %s294 = sshll.u32 %s287, 4
          %s295 = int_to_ptr.vmem [resolvable:$true] %s294
          %300 = dma.hbm_to_vmem [thread:$0]  %s293, 2304, %s295, %s284, 128, 128, 8
        $region48: #{tpu_custom_call.1} parent=43 // pred_fallthru
          _
      $region44: #{tpu_custom_call.1} parent=5 // pred_fallthru
        _
      %p301 = scmp.le.s32.totalorder 1, %s21
      %p302 = scmp.lt.s32.totalorder %s21, 3
      %p303 = pnand %p301, %p302
      %p304 = pneg %p303
      // Predicated region
      $region49: #{tpu_custom_call.1} parent=5 // pred_check
        _
      $region50: #{tpu_custom_call.1} parent=5 // pred_check_branch
        %306 = sbr.rel (%p303) target = $region52
      $region51: #{tpu_custom_call.1} parent=5 // pred_region
        %s307 = ssub.s32 %s21, 1
        %s308 = sand.u32 %s34, 1
        %s309 = scalar_lea.sflag [#allocation4], %s308
        %s310 = sand.u32 %s34, 1
        %s311 = smul.addr %s310, 144
        %s312 = scalar_lea.vmem [#allocation3], %s311
        // Predicated region
        $region53: #{tpu_custom_call.1} parent=51 // pred_check
          %p313 = pneg %p47
        $region54: #{tpu_custom_call.1} parent=51 // pred_check_branch
          %315 = sbr.rel (%p313) target = $region56
        $region55: #{tpu_custom_call.1} parent=51 // pred_region
          %316 = dma.done %s309, 2304
        $region56: #{tpu_custom_call.1} parent=51 // pred_fallthru
          _
        // Predicated region
        $region57: #{tpu_custom_call.1} parent=51 // pred_check
          %p317 = pneg %p68
        $region58: #{tpu_custom_call.1} parent=51 // pred_check_branch
          %319 = sbr.rel (%p317) target = $region60
        $region59: #{tpu_custom_call.1} parent=51 // pred_region
          %320 = dma.done [#allocation7], 3072
        $region60: #{tpu_custom_call.1} parent=51 // pred_fallthru
          _
        // Predicated region
        $region61: #{tpu_custom_call.1} parent=51 // pred_check
          %p321 = pneg %p89
        $region62: #{tpu_custom_call.1} parent=51 // pred_check_branch
          %323 = sbr.rel (%p321) target = $region64
        $region63: #{tpu_custom_call.1} parent=51 // pred_region
          %324 = dma.done [#allocation7], 3072
        $region64: #{tpu_custom_call.1} parent=51 // pred_fallthru
          _
        %s325 = sand.u32 %s34, 1
        %s326 = scalar_lea.sflag [#allocation4], %s325
        %s327 = sand.u32 %s34, 1
        %s328 = smul.addr %s327, 144
        %s329 = scalar_lea.vmem [#allocation3], %s328
        %p330 = pneg %p47
        %p331 = pneg %p44
        %p332 = pneg %p68
        %p333 = pneg %p65
        %p334 = pneg %p89
        %p335 = pneg %p86
        %p336 = pneg %p110
        %p337 = pneg %p107
        %p338 = pneg %p131
        %p339 = pneg %p128
        %p340 = pneg %p152
        %p341 = pneg %p149
        %p342 = pneg %p173
        %p343 = pneg %p170
        %p344 = pneg %p194
        %p345 = pneg %p191
        %p346 = pneg %p220
        %p347 = pneg %p217
        %s348 = sand.u32 %s207, 1
        %s349 = scalar_lea.sflag [#allocation5], %s348
        %s350 = sand.u32 %s207, 1
        %s351 = smul.addr %s350, 144
        %s352 = scalar_lea.vmem [#allocation9], %s351
        %v354 = vld [vmem:[%s312] sm:$0xff]
        %v355 = vld [vmem:[%s312 + $0x8] sm:$0xff]
        %v356 = vld [vmem:[%s312 + $0x10] sm:$0xff]
        %v357 = vld [vmem:[%s312 + $0x18] sm:$0xff]
        %v358 = vld [vmem:[%s312 + $0x20] sm:$0xff]
        %v359 = vld [vmem:[%s312 + $0x28] sm:$0xff]
        %v360 = vld [vmem:[%s312 + $0x30] sm:$0xff]
        %v361 = vld [vmem:[%s312 + $0x38] sm:$0xff]
        %v362 = vld [vmem:[%s312 + $0x40] sm:$0xff]
        %v363 = vld [vmem:[%s312 + $0x48] sm:$0xff]
        %v364 = vld [vmem:[%s312 + $0x50] sm:$0xff]
        %v365 = vld [vmem:[%s312 + $0x58] sm:$0xff]
        %v366 = vld [vmem:[%s312 + $0x60] sm:$0xff]
        %v367 = vld [vmem:[%s312 + $0x68] sm:$0xff]
        %v368 = vld [vmem:[%s312 + $0x70] sm:$0xff]
        %v369 = vld [vmem:[%s312 + $0x78] sm:$0xff]
        %v370 = vld [vmem:[%s312 + $0x80] sm:$0xff]
        %v371 = vld [vmem:[%s312 + $0x88] sm:$0xff]
        %v372 = vld [vmem:[%s4] sm:$0xff]
        %v373 = vld [vmem:[%s4 + $0x8] sm:$0xff]
        %v374 = vld [vmem:[%s5] sm:$0xff]
        %v375 = vld [vmem:[%s5 + $0x8] sm:$0xff]
        %v376 = vld [vmem:[%s5 + $0x10] sm:$0xff]
        %v377 = vld [vmem:[%s5 + $0x18] sm:$0xff]
        %v378 = vld [vmem:[%s5 + $0x20] sm:$0xff]
        %v379 = vld [vmem:[%s5 + $0x28] sm:$0xff]
        %v380 = vld [vmem:[%s5 + $0x30] sm:$0xff]
        %v381 = vld [vmem:[%s5 + $0x38] sm:$0xff]
        %v382 = vld [vmem:[%s5 + $0x40] sm:$0xff]
        %v383 = vld [vmem:[%s5 + $0x48] sm:$0xff]
        %v384 = vld [vmem:[%s5 + $0x50] sm:$0xff]
        %v385 = vld [vmem:[%s5 + $0x58] sm:$0xff]
        %v386 = vld [vmem:[%s5 + $0x60] sm:$0xff]
        %v387 = vld [vmem:[%s5 + $0x68] sm:$0xff]
        %v388 = vld [vmem:[%s5 + $0x70] sm:$0xff]
        %v389 = vld [vmem:[%s5 + $0x78] sm:$0xff]
        %v390 = vld [vmem:[%s5 + $0x80] sm:$0xff]
        %v391 = vld [vmem:[%s5 + $0x88] sm:$0x3f]
        %v392 = vld [vmem:[%s3] sm:$0xff]
        %v393 = vld [vmem:[%s3 + $0x8] sm:$0xff]
        %v394 = vld [vmem:[%s3 + $0x10] sm:$0xff]
        %v395 = vld [vmem:[%s3 + $0x18] sm:$0xff]
        %v396 = vld [vmem:[%s3 + $0x20] sm:$0xff]
        %v397 = vld [vmem:[%s3 + $0x28] sm:$0xff]
        %v398 = vld [vmem:[%s3 + $0x30] sm:$0xff]
        %v399 = vld [vmem:[%s3 + $0x38] sm:$0xff]
        %v400 = vld [vmem:[%s3 + $0x40] sm:$0xff]
        %v401 = vld [vmem:[%s3 + $0x48] sm:$0xff]
        %v402 = vld [vmem:[%s3 + $0x50] sm:$0xff]
        %v403 = vld [vmem:[%s3 + $0x58] sm:$0xff]
        %v404 = vld [vmem:[%s3 + $0x60] sm:$0xff]
        %v405 = vld [vmem:[%s3 + $0x68] sm:$0xff]
        %v406 = vld [vmem:[%s3 + $0x70] sm:$0xff]
        %v407 = vld [vmem:[%s3 + $0x78] sm:$0xff]
        %v408 = vpack.c.bf16 %v355, %v354
        %v409 = vpack.c.bf16 %v357, %v356
        %v410 = vpack.c.bf16 %v359, %v358
        %v411 = vpack.c.bf16 %v361, %v360
        %v412 = vpack.c.bf16 %v363, %v362
        %v413 = vpack.c.bf16 %v365, %v364
        %v414 = vpack.c.bf16 %v367, %v366
        %v415 = vpack.c.bf16 %v369, %v368
        %v416 = vpack.c.bf16 %v371, %v370
        %v417 = vld [vmem:[#allocation6] sm:$0xf]
        %v418 = vld [vmem:[#allocation6 + $0x4] sm:$0xf]
        %v419 = vld [vmem:[#allocation6 + $0x8] sm:$0xf]
        %v420 = vld [vmem:[#allocation6 + $0xc] sm:$0xf]
        %v421 = vld [vmem:[#allocation6 + $0x10] sm:$0xf]
        %v422 = vld [vmem:[#allocation6 + $0x14] sm:$0xf]
        %v423 = vld [vmem:[#allocation6 + $0x18] sm:$0xf]
        %v424 = vld [vmem:[#allocation6 + $0x1c] sm:$0xf]
        %v425 = vld [vmem:[#allocation6 + $0x20] sm:$0xf]
        %v426 = vld [vmem:[#allocation6 + $0x24] sm:$0xf]
        %v427 = vld [vmem:[#allocation6 + $0x28] sm:$0xf]
        %v428 = vld [vmem:[#allocation6 + $0x2c] sm:$0xf]
        %v429 = vld [vmem:[#allocation6 + $0x30] sm:$0xf]
        %v430 = vld [vmem:[#allocation6 + $0x34] sm:$0xf]
        %v431 = vld [vmem:[#allocation6 + $0x38] sm:$0xf]
        %v432 = vld [vmem:[#allocation6 + $0x3c] sm:$0xf]
        %s433 = scalar_lea.vmem [#allocation6], 64
        %v434 = vld [vmem:[%s433] sm:$0xf]
        %v435 = vld [vmem:[%s433 + $0x4] sm:$0xf]
        %v436 = vld [vmem:[%s433 + $0x8] sm:$0xf]
        %v437 = vld [vmem:[%s433 + $0xc] sm:$0xf]
        %v438 = vld [vmem:[%s433 + $0x10] sm:$0xf]
        %v439 = vld [vmem:[%s433 + $0x14] sm:$0xf]
        %v440 = vld [vmem:[%s433 + $0x18] sm:$0xf]
        %v441 = vld [vmem:[%s433 + $0x1c] sm:$0xf]
        %v442 = vld [vmem:[%s433 + $0x20] sm:$0xf]
        %v443 = vld [vmem:[%s433 + $0x24] sm:$0xf]
        %v444 = vld [vmem:[%s433 + $0x28] sm:$0xf]
        %v445 = vld [vmem:[%s433 + $0x2c] sm:$0xf]
        %v446 = vld [vmem:[%s433 + $0x30] sm:$0xf]
        %v447 = vld [vmem:[%s433 + $0x34] sm:$0xf]
        %v448 = vld [vmem:[%s433 + $0x38] sm:$0xf]
        %v449 = vld [vmem:[%s433 + $0x3c] sm:$0xf]
        %vm450 = vsmask.f32 7424
        %v452 = vshrl.u32 %v408, 16
        %v454 = vshll.u32 %v408, 16
        %v456 = vrot.slane %v454, 1
        %v457 = vor.u32 %v452, %v456
        %v459 = vshll.u32 %v409, 16
        %v461 = vrot.slane %v459, 1
        %v462 = vsel %vm450, %v457, %v461
        %v463 = vshrl.u32 %v409, 16
        %v465 = vor.u32 %v463, %v461
        %v467 = vshll.u32 %v410, 16
        %v469 = vrot.slane %v467, 1
        %v470 = vsel %vm450, %v465, %v469
        %v471 = vshrl.u32 %v410, 16
        %v473 = vor.u32 %v471, %v469
        %v475 = vshll.u32 %v411, 16
        %v477 = vrot.slane %v475, 1
        %v478 = vsel %vm450, %v473, %v477
        %v479 = vshrl.u32 %v411, 16
        %v481 = vor.u32 %v479, %v477
        %v483 = vshll.u32 %v412, 16
        %v485 = vrot.slane %v483, 1
        %v486 = vsel %vm450, %v481, %v485
        %v487 = vshrl.u32 %v412, 16
        %v489 = vor.u32 %v487, %v485
        %v491 = vshll.u32 %v413, 16
        %v493 = vrot.slane %v491, 1
        %v494 = vsel %vm450, %v489, %v493
        %v495 = vshrl.u32 %v413, 16
        %v497 = vor.u32 %v495, %v493
        %v499 = vshll.u32 %v414, 16
        %v501 = vrot.slane %v499, 1
        %v502 = vsel %vm450, %v497, %v501
        %v503 = vshrl.u32 %v414, 16
        %v505 = vor.u32 %v503, %v501
        %v507 = vshll.u32 %v415, 16
        %v509 = vrot.slane %v507, 1
        %v510 = vsel %vm450, %v505, %v509
        %v511 = vshrl.u32 %v415, 16
        %v513 = vor.u32 %v511, %v509
        %v515 = vshll.u32 %v416, 16
        %v517 = vrot.slane %v515, 1
        %v518 = vsel %vm450, %v513, %v517
        %v519 = vshrl.u32 %v416, 16
        %v521 = vor.u32 %v519, %v517
        %v547 = vunpack.c.l.b16 %v434
        %v548 = vunpack.c.l.b16 %v435
        %v549 = vunpack.c.l.b16 %v436
        %v550 = vunpack.c.l.b16 %v437
        %v551 = vunpack.c.l.b16 %v438
        %v552 = vunpack.c.l.b16 %v439
        %v553 = vunpack.c.l.b16 %v440
        %v554 = vunpack.c.l.b16 %v441
        %v555 = vunpack.c.l.b16 %v442
        %v556 = vunpack.c.l.b16 %v443
        %v557 = vunpack.c.l.b16 %v444
        %v558 = vunpack.c.l.b16 %v445
        %v559 = vunpack.c.l.b16 %v446
        %v560 = vunpack.c.l.b16 %v447
        %v561 = vunpack.c.l.b16 %v448
        %v562 = vunpack.c.l.b16 %v449
        %v563 = vpack.c.b16 %v548, %v547
        %v564 = vpack.c.b16 %v550, %v549
        %v565 = vpack.c.b16 %v552, %v551
        %v566 = vpack.c.b16 %v554, %v553
        %v567 = vpack.c.b16 %v556, %v555
        %v568 = vpack.c.b16 %v558, %v557
        %v569 = vpack.c.b16 %v560, %v559
        %v570 = vpack.c.b16 %v562, %v561
        %579 = vmatprep.subr.bf16.mxu0 0
        %580 = vmatpush1.bf16.msra.mxu0 %v570
        %581 = vmatprep.subr.bf16.mxu0 0
        %582 = vmatpush1.bf16.msra.mxu0 %v569
        %583 = vmatprep.subr.bf16.mxu0 0
        %584 = vmatpush1.bf16.msra.mxu0 %v568
        %585 = vmatprep.subr.bf16.mxu0 0
        %586 = vmatpush1.bf16.msra.mxu0 %v567
        %587 = vmatprep.subr.bf16.mxu0 0
        %588 = vmatpush1.bf16.msra.mxu0 %v566
        %589 = vmatprep.subr.bf16.mxu0 0
        %590 = vmatpush1.bf16.msra.mxu0 %v565
        %591 = vmatprep.subr.bf16.mxu0 0
        %592 = vmatpush1.bf16.msra.mxu0 %v564
        %593 = vmatprep.subr.bf16.mxu0 0
        %594 = vmatpush1.bf16.msra.mxu0 %v563
        %595 = vmatprep.subr.bf16.mxu0 0
        %596 = vmatpush2.bf16.msra.mxu0 0
        %597 = vmatprep.subr.bf16.mxu0 0
        %598 = vmatpush2.bf16.msra.mxu0 0
        %599 = vmatprep.subr.bf16.mxu0 0
        %600 = vmatpush2.bf16.msra.mxu0 0
        %601 = vmatprep.subr.bf16.mxu0 0
        %602 = vmatpush2.bf16.msra.mxu0 0
        %603 = vmatprep.subr.bf16.mxu0 0
        %604 = vmatpush2.bf16.msra.mxu0 0
        %605 = vmatprep.subr.bf16.mxu0 0
        %606 = vmatpush2.bf16.msra.mxu0 0
        %607 = vmatprep.subr.bf16.mxu0 0
        %608 = vmatpush2.bf16.msra.mxu0 0
        %609 = vmatprep.subr.bf16.mxu0 0
        %610 = vmatpush2.bf16.msra.mxu0 0
        %611 = vmatprep.mubr.bf16.mxu0 0
        %612 = vmatmul.mubr.bf16.gmra.mxu0 %v462
        %v613 = vpop.f32.mrf.mxu0
        %v614 = vadd.f32 0.0, %v613
        %v615 = vpop.f32.mrf.mxu0
        %v616 = vpop.f32.mrf.mxu0
        %v617 = vadd.f32 0.0, %v616
        %v618 = vpop.f32.mrf.mxu0
        %619 = vmatprep.mubr.bf16.mxu0 0
        %620 = vmatmul.mubr.bf16.gmra.mxu0 %v470
        %v621 = vpop.f32.mrf.mxu0
        %v622 = vadd.f32 0.0, %v621
        %v623 = vpop.f32.mrf.mxu0
        %v624 = vpop.f32.mrf.mxu0
        %v625 = vadd.f32 0.0, %v624
        %v626 = vpop.f32.mrf.mxu0
        %627 = vmatprep.mubr.bf16.mxu0 0
        %628 = vmatmul.mubr.bf16.gmra.mxu0 %v478
        %v629 = vpop.f32.mrf.mxu0
        %v630 = vadd.f32 0.0, %v629
        %v631 = vpop.f32.mrf.mxu0
        %v632 = vpop.f32.mrf.mxu0
        %v633 = vadd.f32 0.0, %v632
        %v634 = vpop.f32.mrf.mxu0
        %635 = vmatprep.mubr.bf16.mxu0 0
        %636 = vmatmul.mubr.bf16.gmra.mxu0 %v486
        %v637 = vpop.f32.mrf.mxu0
        %v638 = vadd.f32 0.0, %v637
        %v639 = vpop.f32.mrf.mxu0
        %v640 = vpop.f32.mrf.mxu0
        %v641 = vadd.f32 0.0, %v640
        %v642 = vpop.f32.mrf.mxu0
        %643 = vmatprep.mubr.bf16.mxu0 0
        %644 = vmatmul.mubr.bf16.gmra.mxu0 %v494
        %v645 = vpop.f32.mrf.mxu0
        %v646 = vadd.f32 0.0, %v645
        %v647 = vpop.f32.mrf.mxu0
        %v648 = vpop.f32.mrf.mxu0
        %v649 = vadd.f32 0.0, %v648
        %v650 = vpop.f32.mrf.mxu0
        %651 = vmatprep.mubr.bf16.mxu0 0
        %652 = vmatmul.mubr.bf16.gmra.mxu0 %v502
        %v653 = vpop.f32.mrf.mxu0
        %v654 = vadd.f32 0.0, %v653
        %v655 = vpop.f32.mrf.mxu0
        %v656 = vpop.f32.mrf.mxu0
        %v657 = vadd.f32 0.0, %v656
        %v658 = vpop.f32.mrf.mxu0
        %659 = vmatprep.mubr.bf16.mxu0 0
        %660 = vmatmul.mubr.bf16.gmra.mxu0 %v510
        %v661 = vpop.f32.mrf.mxu0
        %v662 = vadd.f32 0.0, %v661
        %v663 = vpop.f32.mrf.mxu0
        %v664 = vpop.f32.mrf.mxu0
        %v665 = vadd.f32 0.0, %v664
        %v666 = vpop.f32.mrf.mxu0
        %667 = vmatprep.mubr.bf16.mxu0 0
        %668 = vmatmul.mubr.bf16.gmra.mxu0 %v518
        %v669 = vpop.f32.mrf.mxu0
        %v670 = vadd.f32 0.0, %v669
        %v671 = vpop.f32.mrf.mxu0
        %v672 = vpop.f32.mrf.mxu0
        %v673 = vadd.f32 0.0, %v672
        %v674 = vpop.f32.mrf.mxu0
        %675 = vmatprep.mubr.bf16.mxu0 0
        %676 = vmatmul.mubr.bf16.gmra.mxu0 %v521
        %v677 = vpop.f32.mrf.mxu0
        %v678 = vadd.f32 0.0, %v677
        %v679 = vpop.f32.mrf.mxu0
        %v680 = vpop.f32.mrf.mxu0
        %v681 = vadd.f32 0.0, %v680
        %v682 = vpop.f32.mrf.mxu0
        %683 = vdwg.mxu0
        %v700 = vunpack.c.l.b16 %v417
        %v701 = vunpack.c.l.b16 %v418
        %v702 = vunpack.c.l.b16 %v419
        %v703 = vunpack.c.l.b16 %v420
        %v704 = vunpack.c.l.b16 %v421
        %v705 = vunpack.c.l.b16 %v422
        %v706 = vunpack.c.l.b16 %v423
        %v707 = vunpack.c.l.b16 %v424
        %v708 = vunpack.c.l.b16 %v425
        %v709 = vunpack.c.l.b16 %v426
        %v710 = vunpack.c.l.b16 %v427
        %v711 = vunpack.c.l.b16 %v428
        %v712 = vunpack.c.l.b16 %v429
        %v713 = vunpack.c.l.b16 %v430
        %v714 = vunpack.c.l.b16 %v431
        %v715 = vunpack.c.l.b16 %v432
        %v716 = vpack.c.b16 %v701, %v700
        %v717 = vpack.c.b16 %v703, %v702
        %v718 = vpack.c.b16 %v705, %v704
        %v719 = vpack.c.b16 %v707, %v706
        %v720 = vpack.c.b16 %v709, %v708
        %v721 = vpack.c.b16 %v711, %v710
        %v722 = vpack.c.b16 %v713, %v712
        %v723 = vpack.c.b16 %v715, %v714
        %732 = vmatprep.subr.bf16.mxu0 0
        %733 = vmatpush1.bf16.msra.mxu0 %v723
        %734 = vmatprep.subr.bf16.mxu0 0
        %735 = vmatpush1.bf16.msra.mxu0 %v722
        %736 = vmatprep.subr.bf16.mxu0 0
        %737 = vmatpush1.bf16.msra.mxu0 %v721
        %738 = vmatprep.subr.bf16.mxu0 0
        %739 = vmatpush1.bf16.msra.mxu0 %v720
        %740 = vmatprep.subr.bf16.mxu0 0
        %741 = vmatpush1.bf16.msra.mxu0 %v719
        %742 = vmatprep.subr.bf16.mxu0 0
        %743 = vmatpush1.bf16.msra.mxu0 %v718
        %744 = vmatprep.subr.bf16.mxu0 0
        %745 = vmatpush1.bf16.msra.mxu0 %v717
        %746 = vmatprep.subr.bf16.mxu0 0
        %747 = vmatpush1.bf16.msra.mxu0 %v716
        %748 = vmatprep.subr.bf16.mxu0 0
        %749 = vmatpush2.bf16.msra.mxu0 0
        %750 = vmatprep.subr.bf16.mxu0 0
        %751 = vmatpush2.bf16.msra.mxu0 0
        %752 = vmatprep.subr.bf16.mxu0 0
        %753 = vmatpush2.bf16.msra.mxu0 0
        %754 = vmatprep.subr.bf16.mxu0 0
        %755 = vmatpush2.bf16.msra.mxu0 0
        %756 = vmatprep.subr.bf16.mxu0 0
        %757 = vmatpush2.bf16.msra.mxu0 0
        %758 = vmatprep.subr.bf16.mxu0 0
        %759 = vmatpush2.bf16.msra.mxu0 0
        %760 = vmatprep.subr.bf16.mxu0 0
        %761 = vmatpush2.bf16.msra.mxu0 0
        %762 = vmatprep.subr.bf16.mxu0 0
        %763 = vmatpush2.bf16.msra.mxu0 0
        %764 = vmatprep.mubr.bf16.mxu0 0
        %765 = vmatmul.mubr.bf16.gmra.mxu0 %v408
        %v766 = vpop.f32.mrf.mxu0
        %v767 = vadd.f32 %v614, %v766
        %v768 = vpop.f32.mrf.mxu0
        %v769 = vpop.f32.mrf.mxu0
        %v770 = vadd.f32 %v617, %v769
        %v771 = vpop.f32.mrf.mxu0
        %772 = vmatprep.mubr.bf16.mxu0 0
        %773 = vmatmul.mubr.bf16.gmra.mxu0 %v409
        %v774 = vpop.f32.mrf.mxu0
        %v775 = vadd.f32 %v622, %v774
        %v776 = vpop.f32.mrf.mxu0
        %v777 = vpop.f32.mrf.mxu0
        %v778 = vadd.f32 %v625, %v777
        %v779 = vpop.f32.mrf.mxu0
        %780 = vmatprep.mubr.bf16.mxu0 0
        %781 = vmatmul.mubr.bf16.gmra.mxu0 %v410
        %v782 = vpop.f32.mrf.mxu0
        %v783 = vadd.f32 %v630, %v782
        %v784 = vpop.f32.mrf.mxu0
        %v785 = vpop.f32.mrf.mxu0
        %v786 = vadd.f32 %v633, %v785
        %v787 = vpop.f32.mrf.mxu0
        %788 = vmatprep.mubr.bf16.mxu0 0
        %789 = vmatmul.mubr.bf16.gmra.mxu0 %v411
        %v790 = vpop.f32.mrf.mxu0
        %v791 = vadd.f32 %v638, %v790
        %v792 = vpop.f32.mrf.mxu0
        %v793 = vpop.f32.mrf.mxu0
        %v794 = vadd.f32 %v641, %v793
        %v795 = vpop.f32.mrf.mxu0
        %796 = vmatprep.mubr.bf16.mxu0 0
        %797 = vmatmul.mubr.bf16.gmra.mxu0 %v412
        %v798 = vpop.f32.mrf.mxu0
        %v799 = vadd.f32 %v646, %v798
        %v800 = vpop.f32.mrf.mxu0
        %v801 = vpop.f32.mrf.mxu0
        %v802 = vadd.f32 %v649, %v801
        %v803 = vpop.f32.mrf.mxu0
        %804 = vmatprep.mubr.bf16.mxu0 0
        %805 = vmatmul.mubr.bf16.gmra.mxu0 %v413
        %v806 = vpop.f32.mrf.mxu0
        %v807 = vadd.f32 %v654, %v806
        %v808 = vpop.f32.mrf.mxu0
        %v809 = vpop.f32.mrf.mxu0
        %v810 = vadd.f32 %v657, %v809
        %v811 = vpop.f32.mrf.mxu0
        %812 = vmatprep.mubr.bf16.mxu0 0
        %813 = vmatmul.mubr.bf16.gmra.mxu0 %v414
        %v814 = vpop.f32.mrf.mxu0
        %v815 = vadd.f32 %v662, %v814
        %v816 = vpop.f32.mrf.mxu0
        %v817 = vpop.f32.mrf.mxu0
        %v818 = vadd.f32 %v665, %v817
        %v819 = vpop.f32.mrf.mxu0
        %820 = vmatprep.mubr.bf16.mxu0 0
        %821 = vmatmul.mubr.bf16.gmra.mxu0 %v415
        %v822 = vpop.f32.mrf.mxu0
        %v823 = vadd.f32 %v670, %v822
        %v824 = vpop.f32.mrf.mxu0
        %v825 = vpop.f32.mrf.mxu0
        %v826 = vadd.f32 %v673, %v825
        %v827 = vpop.f32.mrf.mxu0
        %828 = vmatprep.mubr.bf16.mxu0 0
        %829 = vmatmul.mubr.bf16.gmra.mxu0 %v416
        %v830 = vpop.f32.mrf.mxu0
        %v831 = vadd.f32 %v678, %v830
        %v832 = vpop.f32.mrf.mxu0
        %v833 = vpop.f32.mrf.mxu0
        %v834 = vadd.f32 %v681, %v833
        %v835 = vpop.f32.mrf.mxu0
        %836 = vdwg.mxu0
        %s837 = scalar_lea.vmem [#allocation6], 128
        %v838 = vld [vmem:[%s837] sm:$0xf]
        %v839 = vld [vmem:[%s837 + $0x4] sm:$0xf]
        %v840 = vld [vmem:[%s837 + $0x8] sm:$0xf]
        %v841 = vld [vmem:[%s837 + $0xc] sm:$0xf]
        %v842 = vld [vmem:[%s837 + $0x10] sm:$0xf]
        %v843 = vld [vmem:[%s837 + $0x14] sm:$0xf]
        %v844 = vld [vmem:[%s837 + $0x18] sm:$0xf]
        %v845 = vld [vmem:[%s837 + $0x1c] sm:$0xf]
        %v846 = vld [vmem:[%s837 + $0x20] sm:$0xf]
        %v847 = vld [vmem:[%s837 + $0x24] sm:$0xf]
        %v848 = vld [vmem:[%s837 + $0x28] sm:$0xf]
        %v849 = vld [vmem:[%s837 + $0x2c] sm:$0xf]
        %v850 = vld [vmem:[%s837 + $0x30] sm:$0xf]
        %v851 = vld [vmem:[%s837 + $0x34] sm:$0xf]
        %v852 = vld [vmem:[%s837 + $0x38] sm:$0xf]
        %v853 = vld [vmem:[%s837 + $0x3c] sm:$0xf]
        %vm863 = vcmask 1046528
        %v864 = vrot.slane %v408, 1
        %v865 = vrot.slane %v409, 1
        %v866 = vsel %vm863, %v864, %v865
        %v867 = vrot.slane %v410, 1
        %v868 = vsel %vm863, %v865, %v867
        %v869 = vrot.slane %v411, 1
        %v870 = vsel %vm863, %v867, %v869
        %v871 = vrot.slane %v412, 1
        %v872 = vsel %vm863, %v869, %v871
        %v873 = vrot.slane %v413, 1
        %v874 = vsel %vm863, %v871, %v873
        %v875 = vrot.slane %v414, 1
        %v876 = vsel %vm863, %v873, %v875
        %v877 = vrot.slane %v415, 1
        %v878 = vsel %vm863, %v875, %v877
        %v879 = vrot.slane %v416, 1
        %v880 = vsel %vm863, %v877, %v879
        %v906 = vunpack.c.l.b16 %v838
        %v907 = vunpack.c.l.b16 %v839
        %v908 = vunpack.c.l.b16 %v840
        %v909 = vunpack.c.l.b16 %v841
        %v910 = vunpack.c.l.b16 %v842
        %v911 = vunpack.c.l.b16 %v843
        %v912 = vunpack.c.l.b16 %v844
        %v913 = vunpack.c.l.b16 %v845
        %v914 = vunpack.c.l.b16 %v846
        %v915 = vunpack.c.l.b16 %v847
        %v916 = vunpack.c.l.b16 %v848
        %v917 = vunpack.c.l.b16 %v849
        %v918 = vunpack.c.l.b16 %v850
        %v919 = vunpack.c.l.b16 %v851
        %v920 = vunpack.c.l.b16 %v852
        %v921 = vunpack.c.l.b16 %v853
        %v922 = vpack.c.b16 %v907, %v906
        %v923 = vpack.c.b16 %v909, %v908
        %v924 = vpack.c.b16 %v911, %v910
        %v925 = vpack.c.b16 %v913, %v912
        %v926 = vpack.c.b16 %v915, %v914
        %v927 = vpack.c.b16 %v917, %v916
        %v928 = vpack.c.b16 %v919, %v918
        %v929 = vpack.c.b16 %v921, %v920
        %938 = vmatprep.subr.bf16.mxu0 0
        %939 = vmatpush1.bf16.msra.mxu0 %v929
        %940 = vmatprep.subr.bf16.mxu0 0
        %941 = vmatpush1.bf16.msra.mxu0 %v928
        %942 = vmatprep.subr.bf16.mxu0 0
        %943 = vmatpush1.bf16.msra.mxu0 %v927
        %944 = vmatprep.subr.bf16.mxu0 0
        %945 = vmatpush1.bf16.msra.mxu0 %v926
        %946 = vmatprep.subr.bf16.mxu0 0
        %947 = vmatpush1.bf16.msra.mxu0 %v925
        %948 = vmatprep.subr.bf16.mxu0 0
        %949 = vmatpush1.bf16.msra.mxu0 %v924
        %950 = vmatprep.subr.bf16.mxu0 0
        %951 = vmatpush1.bf16.msra.mxu0 %v923
        %952 = vmatprep.subr.bf16.mxu0 0
        %953 = vmatpush1.bf16.msra.mxu0 %v922
        %954 = vmatprep.subr.bf16.mxu0 0
        %955 = vmatpush2.bf16.msra.mxu0 0
        %956 = vmatprep.subr.bf16.mxu0 0
        %957 = vmatpush2.bf16.msra.mxu0 0
        %958 = vmatprep.subr.bf16.mxu0 0
        %959 = vmatpush2.bf16.msra.mxu0 0
        %960 = vmatprep.subr.bf16.mxu0 0
        %961 = vmatpush2.bf16.msra.mxu0 0
        %962 = vmatprep.subr.bf16.mxu0 0
        %963 = vmatpush2.bf16.msra.mxu0 0
        %964 = vmatprep.subr.bf16.mxu0 0
        %965 = vmatpush2.bf16.msra.mxu0 0
        %966 = vmatprep.subr.bf16.mxu0 0
        %967 = vmatpush2.bf16.msra.mxu0 0
        %968 = vmatprep.subr.bf16.mxu0 0
        %969 = vmatpush2.bf16.msra.mxu0 0
        %970 = vmatprep.mubr.bf16.mxu0 0
        %971 = vmatmul.mubr.bf16.gmra.mxu0 %v866
        %v972 = vpop.f32.mrf.mxu0
        %v973 = vadd.f32 0.0, %v972
        %v974 = vpop.f32.mrf.mxu0
        %v975 = vpop.f32.mrf.mxu0
        %v976 = vadd.f32 0.0, %v975
        %v977 = vpop.f32.mrf.mxu0
        %978 = vmatprep.mubr.bf16.mxu0 0
        %979 = vmatmul.mubr.bf16.gmra.mxu0 %v868
        %v980 = vpop.f32.mrf.mxu0
        %v981 = vadd.f32 0.0, %v980
        %v982 = vpop.f32.mrf.mxu0
        %v983 = vpop.f32.mrf.mxu0
        %v984 = vadd.f32 0.0, %v983
        %v985 = vpop.f32.mrf.mxu0
        %986 = vmatprep.mubr.bf16.mxu0 0
        %987 = vmatmul.mubr.bf16.gmra.mxu0 %v870
        %v988 = vpop.f32.mrf.mxu0
        %v989 = vadd.f32 0.0, %v988
        %v990 = vpop.f32.mrf.mxu0
        %v991 = vpop.f32.mrf.mxu0
        %v992 = vadd.f32 0.0, %v991
        %v993 = vpop.f32.mrf.mxu0
        %994 = vmatprep.mubr.bf16.mxu0 0
        %995 = vmatmul.mubr.bf16.gmra.mxu0 %v872
        %v996 = vpop.f32.mrf.mxu0
        %v997 = vadd.f32 0.0, %v996
        %v998 = vpop.f32.mrf.mxu0
        %v999 = vpop.f32.mrf.mxu0
        %v1000 = vadd.f32 0.0, %v999
        %v1001 = vpop.f32.mrf.mxu0
        %1002 = vmatprep.mubr.bf16.mxu0 0
        %1003 = vmatmul.mubr.bf16.gmra.mxu0 %v874
        %v1004 = vpop.f32.mrf.mxu0
        %v1005 = vadd.f32 0.0, %v1004
        %v1006 = vpop.f32.mrf.mxu0
        %v1007 = vpop.f32.mrf.mxu0
        %v1008 = vadd.f32 0.0, %v1007
        %v1009 = vpop.f32.mrf.mxu0
        %1010 = vmatprep.mubr.bf16.mxu0 0
        %1011 = vmatmul.mubr.bf16.gmra.mxu0 %v876
        %v1012 = vpop.f32.mrf.mxu0
        %v1013 = vadd.f32 0.0, %v1012
        %v1014 = vpop.f32.mrf.mxu0
        %v1015 = vpop.f32.mrf.mxu0
        %v1016 = vadd.f32 0.0, %v1015
        %v1017 = vpop.f32.mrf.mxu0
        %1018 = vmatprep.mubr.bf16.mxu0 0
        %1019 = vmatmul.mubr.bf16.gmra.mxu0 %v878
        %v1020 = vpop.f32.mrf.mxu0
        %v1021 = vadd.f32 0.0, %v1020
        %v1022 = vpop.f32.mrf.mxu0
        %v1023 = vpop.f32.mrf.mxu0
        %v1024 = vadd.f32 0.0, %v1023
        %v1025 = vpop.f32.mrf.mxu0
        %1026 = vmatprep.mubr.bf16.mxu0 0
        %1027 = vmatmul.mubr.bf16.gmra.mxu0 %v880
        %v1028 = vpop.f32.mrf.mxu0
        %v1029 = vadd.f32 0.0, %v1028
        %v1030 = vpop.f32.mrf.mxu0
        %v1031 = vpop.f32.mrf.mxu0
        %v1032 = vadd.f32 0.0, %v1031
        %v1033 = vpop.f32.mrf.mxu0
        %1034 = vmatprep.mubr.bf16.mxu0 0
        %1035 = vmatmul.mubr.bf16.gmra.mxu0 %v879
        %v1036 = vpop.f32.mrf.mxu0
        %v1037 = vadd.f32 0.0, %v1036
        %v1038 = vpop.f32.mrf.mxu0
        %v1039 = vpop.f32.mrf.mxu0
        %v1040 = vadd.f32 0.0, %v1039
        %v1041 = vpop.f32.mrf.mxu0
        %1042 = vdwg.mxu0
        %v1043 = vadd.f32 %v767, %v973
        %v1044 = vadd.f32 %v770, %v976
        %v1045 = vadd.f32 %v775, %v981
        %v1046 = vadd.f32 %v778, %v984
        %v1047 = vadd.f32 %v783, %v989
        %v1048 = vadd.f32 %v786, %v992
        %v1049 = vadd.f32 %v791, %v997
        %v1050 = vadd.f32 %v794, %v1000
        %v1051 = vadd.f32 %v799, %v1005
        %v1052 = vadd.f32 %v802, %v1008
        %v1053 = vadd.f32 %v807, %v1013
        %v1054 = vadd.f32 %v810, %v1016
        %v1055 = vadd.f32 %v815, %v1021
        %v1056 = vadd.f32 %v818, %v1024
        %v1057 = vadd.f32 %v823, %v1029
        %v1058 = vadd.f32 %v826, %v1032
        %v1059 = vadd.f32 %v831, %v1037
        %v1060 = vadd.f32 %v834, %v1040
        %vm1061 = vcmask 113664
        %v1063 = vsel %vm1061, %v373, 0
        %vm1065 = vcmask 1045504
        %v1067 = vsel %vm1065, %v1060, 0
        %1069 = vmatprep.subr.mxu0 0.0
        %1070 = vmatpush1.msra.mxu0 %v1058
        %1071 = vmatprep.subr.mxu0 0.0
        %1072 = vmatpush1.msra.mxu0 %v1057
        %1073 = vmatprep.subr.mxu0 0.0
        %1074 = vmatpush1.msra.mxu0 %v1056
        %1075 = vmatprep.subr.mxu0 0.0
        %1076 = vmatpush1.msra.mxu0 %v1055
        %1077 = vmatprep.subr.mxu0 0.0
        %1078 = vmatpush1.msra.mxu0 %v1054
        %1079 = vmatprep.subr.mxu0 0.0
        %1080 = vmatpush1.msra.mxu0 %v1053
        %1081 = vmatprep.subr.mxu0 0.0
        %1082 = vmatpush1.msra.mxu0 %v1052
        %1083 = vmatprep.subr.mxu0 0.0
        %1084 = vmatpush1.msra.mxu0 %v1051
        %1085 = vmatprep.subr.mxu0 0.0
        %1086 = vmatpush1.msra.mxu0 %v1050
        %1087 = vmatprep.subr.mxu0 0.0
        %1088 = vmatpush1.msra.mxu0 %v1049
        %1089 = vmatprep.subr.mxu0 0.0
        %1090 = vmatpush1.msra.mxu0 %v1048
        %1091 = vmatprep.subr.mxu0 0.0
        %1092 = vmatpush1.msra.mxu0 %v1047
        %1093 = vmatprep.subr.mxu0 0.0
        %1094 = vmatpush1.msra.mxu0 %v1046
        %1095 = vmatprep.subr.mxu0 0.0
        %1096 = vmatpush1.msra.mxu0 %v1045
        %1097 = vmatprep.subr.mxu0 0.0
        %1098 = vmatpush1.msra.mxu0 %v1044
        %1099 = vmatprep.subr.mxu0 0.0
        %1100 = vmatpush1.msra.mxu0 %v1043
        %1101 = vmatprep.subr.mxu0 0.0
        %1102 = vmatpush2.msra.mxu0 0.0
        %1103 = vmatprep.subr.mxu0 0.0
        %1104 = vmatpush2.msra.mxu0 0.0
        %1105 = vmatprep.subr.mxu0 0.0
        %1106 = vmatpush2.msra.mxu0 0.0
        %1107 = vmatprep.subr.mxu0 0.0
        %1108 = vmatpush2.msra.mxu0 0.0
        %1109 = vmatprep.subr.mxu0 0.0
        %1110 = vmatpush2.msra.mxu0 0.0
        %1111 = vmatprep.subr.mxu0 0.0
        %1112 = vmatpush2.msra.mxu0 0.0
        %1113 = vmatprep.subr.mxu0 0.0
        %1114 = vmatpush2.msra.mxu0 0.0
        %1115 = vmatprep.subr.mxu0 0.0
        %1116 = vmatpush2.msra.mxu0 0.0
        %1117 = vmatprep.subr.mxu0 0.0
        %1118 = vmatpush2.msra.mxu0 0.0
        %1119 = vmatprep.subr.mxu0 0.0
        %1120 = vmatpush2.msra.mxu0 0.0
        %1121 = vmatprep.subr.mxu0 0.0
        %1122 = vmatpush2.msra.mxu0 0.0
        %1123 = vmatprep.subr.mxu0 0.0
        %1124 = vmatpush2.msra.mxu0 0.0
        %1125 = vmatprep.subr.mxu0 0.0
        %1126 = vmatpush2.msra.mxu0 0.0
        %1127 = vmatprep.subr.mxu0 0.0
        %1128 = vmatpush2.msra.mxu0 0.0
        %1129 = vmatprep.subr.mxu0 0.0
        %1130 = vmatpush2.msra.mxu0 %v1067
        %1131 = vmatprep.subr.mxu0 0.0
        %1132 = vmatpush2.msra.mxu0 %v1059
        %1133 = vmatprep.mubr.f32.mxu0 %v1063
        %1134 = vmatmul.mubr.f32.gmra.mxu0 %v372
        %v1135 = vpop.f32.mrf.mxu0
        %v1136 = vadd.f32 0.0, %v1135
        %v1137 = vpop.f32.mrf.mxu0
        %1138 = vdwg.mxu0
        %v1139 = vmul.f32 %v1043, %v1043
        %v1140 = vmul.f32 %v1044, %v1044
        %v1141 = vmul.f32 %v1045, %v1045
        %v1142 = vmul.f32 %v1046, %v1046
        %v1143 = vmul.f32 %v1047, %v1047
        %v1144 = vmul.f32 %v1048, %v1048
        %v1145 = vmul.f32 %v1049, %v1049
        %v1146 = vmul.f32 %v1050, %v1050
        %v1147 = vmul.f32 %v1051, %v1051
        %v1148 = vmul.f32 %v1052, %v1052
        %v1149 = vmul.f32 %v1053, %v1053
        %v1150 = vmul.f32 %v1054, %v1054
        %v1151 = vmul.f32 %v1055, %v1055
        %v1152 = vmul.f32 %v1056, %v1056
        %v1153 = vmul.f32 %v1057, %v1057
        %v1154 = vmul.f32 %v1058, %v1058
        %v1155 = vmul.f32 %v1059, %v1059
        %v1156 = vmul.f32 %v1060, %v1060
        %v1158 = vsel %vm1065, %v1156, 0
        %1160 = vmatprep.subr.mxu0 0.0
        %1161 = vmatpush1.msra.mxu0 %v1154
        %1162 = vmatprep.subr.mxu0 0.0
        %1163 = vmatpush1.msra.mxu0 %v1153
        %1164 = vmatprep.subr.mxu0 0.0
        %1165 = vmatpush1.msra.mxu0 %v1152
        %1166 = vmatprep.subr.mxu0 0.0
        %1167 = vmatpush1.msra.mxu0 %v1151
        %1168 = vmatprep.subr.mxu0 0.0
        %1169 = vmatpush1.msra.mxu0 %v1150
        %1170 = vmatprep.subr.mxu0 0.0
        %1171 = vmatpush1.msra.mxu0 %v1149
        %1172 = vmatprep.subr.mxu0 0.0
        %1173 = vmatpush1.msra.mxu0 %v1148
        %1174 = vmatprep.subr.mxu0 0.0
        %1175 = vmatpush1.msra.mxu0 %v1147
        %1176 = vmatprep.subr.mxu0 0.0
        %1177 = vmatpush1.msra.mxu0 %v1146
        %1178 = vmatprep.subr.mxu0 0.0
        %1179 = vmatpush1.msra.mxu0 %v1145
        %1180 = vmatprep.subr.mxu0 0.0
        %1181 = vmatpush1.msra.mxu0 %v1144
        %1182 = vmatprep.subr.mxu0 0.0
        %1183 = vmatpush1.msra.mxu0 %v1143
        %1184 = vmatprep.subr.mxu0 0.0
        %1185 = vmatpush1.msra.mxu0 %v1142
        %1186 = vmatprep.subr.mxu0 0.0
        %1187 = vmatpush1.msra.mxu0 %v1141
        %1188 = vmatprep.subr.mxu0 0.0
        %1189 = vmatpush1.msra.mxu0 %v1140
        %1190 = vmatprep.subr.mxu0 0.0
        %1191 = vmatpush1.msra.mxu0 %v1139
        %1192 = vmatprep.subr.mxu0 0.0
        %1193 = vmatpush2.msra.mxu0 0.0
        %1194 = vmatprep.subr.mxu0 0.0
        %1195 = vmatpush2.msra.mxu0 0.0
        %1196 = vmatprep.subr.mxu0 0.0
        %1197 = vmatpush2.msra.mxu0 0.0
        %1198 = vmatprep.subr.mxu0 0.0
        %1199 = vmatpush2.msra.mxu0 0.0
        %1200 = vmatprep.subr.mxu0 0.0
        %1201 = vmatpush2.msra.mxu0 0.0
        %1202 = vmatprep.subr.mxu0 0.0
        %1203 = vmatpush2.msra.mxu0 0.0
        %1204 = vmatprep.subr.mxu0 0.0
        %1205 = vmatpush2.msra.mxu0 0.0
        %1206 = vmatprep.subr.mxu0 0.0
        %1207 = vmatpush2.msra.mxu0 0.0
        %1208 = vmatprep.subr.mxu0 0.0
        %1209 = vmatpush2.msra.mxu0 0.0
        %1210 = vmatprep.subr.mxu0 0.0
        %1211 = vmatpush2.msra.mxu0 0.0
        %1212 = vmatprep.subr.mxu0 0.0
        %1213 = vmatpush2.msra.mxu0 0.0
        %1214 = vmatprep.subr.mxu0 0.0
        %1215 = vmatpush2.msra.mxu0 0.0
        %1216 = vmatprep.subr.mxu0 0.0
        %1217 = vmatpush2.msra.mxu0 0.0
        %1218 = vmatprep.subr.mxu0 0.0
        %1219 = vmatpush2.msra.mxu0 0.0
        %1220 = vmatprep.subr.mxu0 0.0
        %1221 = vmatpush2.msra.mxu0 %v1158
        %1222 = vmatprep.subr.mxu0 0.0
        %1223 = vmatpush2.msra.mxu0 %v1155
        %1224 = vmatprep.mubr.f32.mxu0 %v1063
        %1225 = vmatmul.mubr.f32.gmra.mxu0 %v372
        %v1226 = vpop.f32.mrf.mxu0
        %v1227 = vadd.f32 0.0, %v1226
        %v1228 = vpop.f32.mrf.mxu0
        %1229 = vdwg.mxu0
        %1230 = vmatprep.subr.mxu0 0.0
        %1231 = vmatpush1.msra.mxu0 %v407
        %1232 = vmatprep.subr.mxu0 0.0
        %1233 = vmatpush1.msra.mxu0 %v406
        %1234 = vmatprep.subr.mxu0 0.0
        %1235 = vmatpush1.msra.mxu0 %v405
        %1236 = vmatprep.subr.mxu0 0.0
        %1237 = vmatpush1.msra.mxu0 %v404
        %1238 = vmatprep.subr.mxu0 0.0
        %1239 = vmatpush1.msra.mxu0 %v403
        %1240 = vmatprep.subr.mxu0 0.0
        %1241 = vmatpush1.msra.mxu0 %v402
        %1242 = vmatprep.subr.mxu0 0.0
        %1243 = vmatpush1.msra.mxu0 %v401
        %1244 = vmatprep.subr.mxu0 0.0
        %1245 = vmatpush1.msra.mxu0 %v400
        %1246 = vmatprep.subr.mxu0 0.0
        %1247 = vmatpush1.msra.mxu0 %v399
        %1248 = vmatprep.subr.mxu0 0.0
        %1249 = vmatpush1.msra.mxu0 %v398
        %1250 = vmatprep.subr.mxu0 0.0
        %1251 = vmatpush1.msra.mxu0 %v397
        %1252 = vmatprep.subr.mxu0 0.0
        %1253 = vmatpush1.msra.mxu0 %v396
        %1254 = vmatprep.subr.mxu0 0.0
        %1255 = vmatpush1.msra.mxu0 %v395
        %1256 = vmatprep.subr.mxu0 0.0
        %1257 = vmatpush1.msra.mxu0 %v394
        %1258 = vmatprep.subr.mxu0 0.0
        %1259 = vmatpush1.msra.mxu0 %v393
        %1260 = vmatprep.subr.mxu0 0.0
        %1261 = vmatpush1.msra.mxu0 %v392
        %1262 = vmatprep.subr.mxu0 0.0
        %1263 = vmatpush2.msra.mxu0 0.0
        %1264 = vmatprep.subr.mxu0 0.0
        %1265 = vmatpush2.msra.mxu0 0.0
        %1266 = vmatprep.subr.mxu0 0.0
        %1267 = vmatpush2.msra.mxu0 0.0
        %1268 = vmatprep.subr.mxu0 0.0
        %1269 = vmatpush2.msra.mxu0 0.0
        %1270 = vmatprep.subr.mxu0 0.0
        %1271 = vmatpush2.msra.mxu0 0.0
        %1272 = vmatprep.subr.mxu0 0.0
        %1273 = vmatpush2.msra.mxu0 0.0
        %1274 = vmatprep.subr.mxu0 0.0
        %1275 = vmatpush2.msra.mxu0 0.0
        %1276 = vmatprep.subr.mxu0 0.0
        %1277 = vmatpush2.msra.mxu0 0.0
        %1278 = vmatprep.subr.mxu0 0.0
        %1279 = vmatpush2.msra.mxu0 0.0
        %1280 = vmatprep.subr.mxu0 0.0
        %1281 = vmatpush2.msra.mxu0 0.0
        %1282 = vmatprep.subr.mxu0 0.0
        %1283 = vmatpush2.msra.mxu0 0.0
        %1284 = vmatprep.subr.mxu0 0.0
        %1285 = vmatpush2.msra.mxu0 0.0
        %1286 = vmatprep.subr.mxu0 0.0
        %1287 = vmatpush2.msra.mxu0 0.0
        %1288 = vmatprep.subr.mxu0 0.0
        %1289 = vmatpush2.msra.mxu0 0.0
        %1290 = vmatprep.subr.mxu0 0.0
        %1291 = vmatpush2.msra.mxu0 0.0
        %1292 = vmatprep.subr.mxu0 0.0
        %1293 = vmatpush2.msra.mxu0 0.0
        %1294 = vmatprep.mubr.f32.mxu0 0.0
        %1295 = vmatmul.mubr.f32.gmra.mxu0 %v1136
        %v1296 = vpop.f32.mrf.mxu0
        %v1297 = vadd.f32 0.0, %v1296
        %v1298 = vpop.f32.mrf.mxu0
        %1299 = vdwg.mxu0
        %1300 = vmatprep.subr.mxu0 0.0
        %1301 = vmatpush1.msra.mxu0 %v407
        %1302 = vmatprep.subr.mxu0 0.0
        %1303 = vmatpush1.msra.mxu0 %v406
        %1304 = vmatprep.subr.mxu0 0.0
        %1305 = vmatpush1.msra.mxu0 %v405
        %1306 = vmatprep.subr.mxu0 0.0
        %1307 = vmatpush1.msra.mxu0 %v404
        %1308 = vmatprep.subr.mxu0 0.0
        %1309 = vmatpush1.msra.mxu0 %v403
        %1310 = vmatprep.subr.mxu0 0.0
        %1311 = vmatpush1.msra.mxu0 %v402
        %1312 = vmatprep.subr.mxu0 0.0
        %1313 = vmatpush1.msra.mxu0 %v401
        %1314 = vmatprep.subr.mxu0 0.0
        %1315 = vmatpush1.msra.mxu0 %v400
        %1316 = vmatprep.subr.mxu0 0.0
        %1317 = vmatpush1.msra.mxu0 %v399
        %1318 = vmatprep.subr.mxu0 0.0
        %1319 = vmatpush1.msra.mxu0 %v398
        %1320 = vmatprep.subr.mxu0 0.0
        %1321 = vmatpush1.msra.mxu0 %v397
        %1322 = vmatprep.subr.mxu0 0.0
        %1323 = vmatpush1.msra.mxu0 %v396
        %1324 = vmatprep.subr.mxu0 0.0
        %1325 = vmatpush1.msra.mxu0 %v395
        %1326 = vmatprep.subr.mxu0 0.0
        %1327 = vmatpush1.msra.mxu0 %v394
        %1328 = vmatprep.subr.mxu0 0.0
        %1329 = vmatpush1.msra.mxu0 %v393
        %1330 = vmatprep.subr.mxu0 0.0
        %1331 = vmatpush1.msra.mxu0 %v392
        %1332 = vmatprep.subr.mxu0 0.0
        %1333 = vmatpush2.msra.mxu0 0.0
        %1334 = vmatprep.subr.mxu0 0.0
        %1335 = vmatpush2.msra.mxu0 0.0
        %1336 = vmatprep.subr.mxu0 0.0
        %1337 = vmatpush2.msra.mxu0 0.0
        %1338 = vmatprep.subr.mxu0 0.0
        %1339 = vmatpush2.msra.mxu0 0.0
        %1340 = vmatprep.subr.mxu0 0.0
        %1341 = vmatpush2.msra.mxu0 0.0
        %1342 = vmatprep.subr.mxu0 0.0
        %1343 = vmatpush2.msra.mxu0 0.0
        %1344 = vmatprep.subr.mxu0 0.0
        %1345 = vmatpush2.msra.mxu0 0.0
        %1346 = vmatprep.subr.mxu0 0.0
        %1347 = vmatpush2.msra.mxu0 0.0
        %1348 = vmatprep.subr.mxu0 0.0
        %1349 = vmatpush2.msra.mxu0 0.0
        %1350 = vmatprep.subr.mxu0 0.0
        %1351 = vmatpush2.msra.mxu0 0.0
        %1352 = vmatprep.subr.mxu0 0.0
        %1353 = vmatpush2.msra.mxu0 0.0
        %1354 = vmatprep.subr.mxu0 0.0
        %1355 = vmatpush2.msra.mxu0 0.0
        %1356 = vmatprep.subr.mxu0 0.0
        %1357 = vmatpush2.msra.mxu0 0.0
        %1358 = vmatprep.subr.mxu0 0.0
        %1359 = vmatpush2.msra.mxu0 0.0
        %1360 = vmatprep.subr.mxu0 0.0
        %1361 = vmatpush2.msra.mxu0 0.0
        %1362 = vmatprep.subr.mxu0 0.0
        %1363 = vmatpush2.msra.mxu0 0.0
        %1364 = vmatprep.mubr.f32.mxu0 0.0
        %1365 = vmatmul.mubr.f32.gmra.mxu0 %v1227
        %v1366 = vpop.f32.mrf.mxu0
        %v1367 = vadd.f32 0.0, %v1366
        %v1368 = vpop.f32.mrf.mxu0
        %1369 = vdwg.mxu0
        %v1370 = vmul.f32 %v1297, %v1297
        %v1371 = vsub.f32 %v1367, %v1370
        %v1372 = vadd.f32 %v1371, 1e-05
        %v1373 = vrsqrt.pop %v1372
        %v1374 = vld [vmem:[%s6] sm:$0x1]
        %v1375 = vlaneseq
        %v1376 = vshrl.u32 %v1375, 7
        %v1377 = vsub.s32 0, %v1376
        %v1378 = vrot.slane %v1374, %v1377
        %v1379 = vmul.f32 %v1373, %v1378
        %v1380 = vld [vmem:[%s6 + $0x1] sm:$0x1]
        %v1381 = vmul.f32 %v1297, %v1379
        %v1382 = vlaneseq
        %v1383 = vshrl.u32 %v1382, 7
        %v1384 = vsub.s32 0, %v1383
        %v1385 = vrot.slane %v1380, %v1384
        %v1386 = vsub.f32 %v1385, %v1381
        %vm1387 = vcmask 64512
        %v1389 = vsel %vm1387, %v374, 0
        %v1392 = vsel %vm1387, %v375, 0
        %v1395 = vsel %vm1387, %v376, 0
        %v1398 = vsel %vm1387, %v377, 0
        %v1401 = vsel %vm1387, %v378, 0
        %v1404 = vsel %vm1387, %v379, 0
        %v1407 = vsel %vm1387, %v380, 0
        %v1410 = vsel %vm1387, %v381, 0
        %v1413 = vsel %vm1387, %v382, 0
        %v1416 = vsel %vm1387, %v383, 0
        %v1419 = vsel %vm1387, %v384, 0
        %v1422 = vsel %vm1387, %v385, 0
        %v1425 = vsel %vm1387, %v386, 0
        %v1428 = vsel %vm1387, %v387, 0
        %v1431 = vsel %vm1387, %v388, 0
        %v1434 = vsel %vm1387, %v389, 0
        %v1437 = vsel %vm1387, %v390, 0
        %v1440 = vsel %vm1387, %v391, 0
        %1442 = vmatprep.subr.mxu0 0.0
        %1443 = vmatpush1.msra.mxu0 0.0
        %1444 = vmatprep.subr.mxu0 0.0
        %1445 = vmatpush1.msra.mxu0 0.0
        %1446 = vmatprep.subr.mxu0 0.0
        %1447 = vmatpush1.msra.mxu0 0.0
        %1448 = vmatprep.subr.mxu0 0.0
        %1449 = vmatpush1.msra.mxu0 0.0
        %1450 = vmatprep.subr.mxu0 0.0
        %1451 = vmatpush1.msra.mxu0 0.0
        %1452 = vmatprep.subr.mxu0 0.0
        %1453 = vmatpush1.msra.mxu0 0.0
        %1454 = vmatprep.subr.mxu0 0.0
        %1455 = vmatpush1.msra.mxu0 0.0
        %1456 = vmatprep.subr.mxu0 0.0
        %1457 = vmatpush1.msra.mxu0 0.0
        %1458 = vmatprep.subr.mxu0 0.0
        %1459 = vmatpush1.msra.mxu0 0.0
        %1460 = vmatprep.subr.mxu0 0.0
        %1461 = vmatpush1.msra.mxu0 0.0
        %1462 = vmatprep.subr.mxu0 0.0
        %1463 = vmatpush1.msra.mxu0 0.0
        %1464 = vmatprep.subr.mxu0 0.0
        %1465 = vmatpush1.msra.mxu0 0.0
        %1466 = vmatprep.subr.mxu0 0.0
        %1467 = vmatpush1.msra.mxu0 0.0
        %1468 = vmatprep.subr.mxu0 0.0
        %1469 = vmatpush1.msra.mxu0 0.0
        %1470 = vmatprep.subr.mxu0 0.0
        %1471 = vmatpush1.msra.mxu0 0.0
        %1472 = vmatprep.subr.mxu0 0.0
        %1473 = vmatpush1.msra.mxu0 %v1379
        %1474 = vmatprep.subr.mxu0 0.0
        %1475 = vmatpush2.msra.mxu0 0.0
        %1476 = vmatprep.subr.mxu0 0.0
        %1477 = vmatpush2.msra.mxu0 0.0
        %1478 = vmatprep.subr.mxu0 0.0
        %1479 = vmatpush2.msra.mxu0 0.0
        %1480 = vmatprep.subr.mxu0 0.0
        %1481 = vmatpush2.msra.mxu0 0.0
        %1482 = vmatprep.subr.mxu0 0.0
        %1483 = vmatpush2.msra.mxu0 0.0
        %1484 = vmatprep.subr.mxu0 0.0
        %1485 = vmatpush2.msra.mxu0 0.0
        %1486 = vmatprep.subr.mxu0 0.0
        %1487 = vmatpush2.msra.mxu0 0.0
        %1488 = vmatprep.subr.mxu0 0.0
        %1489 = vmatpush2.msra.mxu0 0.0
        %1490 = vmatprep.subr.mxu0 0.0
        %1491 = vmatpush2.msra.mxu0 0.0
        %1492 = vmatprep.subr.mxu0 0.0
        %1493 = vmatpush2.msra.mxu0 0.0
        %1494 = vmatprep.subr.mxu0 0.0
        %1495 = vmatpush2.msra.mxu0 0.0
        %1496 = vmatprep.subr.mxu0 0.0
        %1497 = vmatpush2.msra.mxu0 0.0
        %1498 = vmatprep.subr.mxu0 0.0
        %1499 = vmatpush2.msra.mxu0 0.0
        %1500 = vmatprep.subr.mxu0 0.0
        %1501 = vmatpush2.msra.mxu0 0.0
        %1502 = vmatprep.subr.mxu0 0.0
        %1503 = vmatpush2.msra.mxu0 0.0
        %1504 = vmatprep.subr.mxu0 0.0
        %1505 = vmatpush2.msra.mxu0 0.0
        %1506 = vmatprep.mubr.f32.mxu0 0.0
        %1507 = vmatmul.mubr.f32.gmra.mxu0 %v1389
        %v1508 = vpop.f32.mrf.mxu0
        %v1509 = vadd.f32 0.0, %v1508
        %v1510 = vpop.f32.mrf.mxu0
        %1511 = vmatprep.mubr.f32.mxu0 0.0
        %1512 = vmatmul.mubr.f32.gmra.mxu0 %v1392
        %v1513 = vpop.f32.mrf.mxu0
        %v1514 = vadd.f32 0.0, %v1513
        %v1515 = vpop.f32.mrf.mxu0
        %1516 = vmatprep.mubr.f32.mxu0 0.0
        %1517 = vmatmul.mubr.f32.gmra.mxu0 %v1395
        %v1518 = vpop.f32.mrf.mxu0
        %v1519 = vadd.f32 0.0, %v1518
        %v1520 = vpop.f32.mrf.mxu0
        %1521 = vmatprep.mubr.f32.mxu0 0.0
        %1522 = vmatmul.mubr.f32.gmra.mxu0 %v1398
        %v1523 = vpop.f32.mrf.mxu0
        %v1524 = vadd.f32 0.0, %v1523
        %v1525 = vpop.f32.mrf.mxu0
        %1526 = vmatprep.mubr.f32.mxu0 0.0
        %1527 = vmatmul.mubr.f32.gmra.mxu0 %v1401
        %v1528 = vpop.f32.mrf.mxu0
        %v1529 = vadd.f32 0.0, %v1528
        %v1530 = vpop.f32.mrf.mxu0
        %1531 = vmatprep.mubr.f32.mxu0 0.0
        %1532 = vmatmul.mubr.f32.gmra.mxu0 %v1404
        %v1533 = vpop.f32.mrf.mxu0
        %v1534 = vadd.f32 0.0, %v1533
        %v1535 = vpop.f32.mrf.mxu0
        %1536 = vmatprep.mubr.f32.mxu0 0.0
        %1537 = vmatmul.mubr.f32.gmra.mxu0 %v1407
        %v1538 = vpop.f32.mrf.mxu0
        %v1539 = vadd.f32 0.0, %v1538
        %v1540 = vpop.f32.mrf.mxu0
        %1541 = vmatprep.mubr.f32.mxu0 0.0
        %1542 = vmatmul.mubr.f32.gmra.mxu0 %v1410
        %v1543 = vpop.f32.mrf.mxu0
        %v1544 = vadd.f32 0.0, %v1543
        %v1545 = vpop.f32.mrf.mxu0
        %1546 = vmatprep.mubr.f32.mxu0 0.0
        %1547 = vmatmul.mubr.f32.gmra.mxu0 %v1413
        %v1548 = vpop.f32.mrf.mxu0
        %v1549 = vadd.f32 0.0, %v1548
        %v1550 = vpop.f32.mrf.mxu0
        %1551 = vmatprep.mubr.f32.mxu0 0.0
        %1552 = vmatmul.mubr.f32.gmra.mxu0 %v1416
        %v1553 = vpop.f32.mrf.mxu0
        %v1554 = vadd.f32 0.0, %v1553
        %v1555 = vpop.f32.mrf.mxu0
        %1556 = vmatprep.mubr.f32.mxu0 0.0
        %1557 = vmatmul.mubr.f32.gmra.mxu0 %v1419
        %v1558 = vpop.f32.mrf.mxu0
        %v1559 = vadd.f32 0.0, %v1558
        %v1560 = vpop.f32.mrf.mxu0
        %1561 = vmatprep.mubr.f32.mxu0 0.0
        %1562 = vmatmul.mubr.f32.gmra.mxu0 %v1422
        %v1563 = vpop.f32.mrf.mxu0
        %v1564 = vadd.f32 0.0, %v1563
        %v1565 = vpop.f32.mrf.mxu0
        %1566 = vmatprep.mubr.f32.mxu0 0.0
        %1567 = vmatmul.mubr.f32.gmra.mxu0 %v1425
        %v1568 = vpop.f32.mrf.mxu0
        %v1569 = vadd.f32 0.0, %v1568
        %v1570 = vpop.f32.mrf.mxu0
        %1571 = vmatprep.mubr.f32.mxu0 0.0
        %1572 = vmatmul.mubr.f32.gmra.mxu0 %v1428
        %v1573 = vpop.f32.mrf.mxu0
        %v1574 = vadd.f32 0.0, %v1573
        %v1575 = vpop.f32.mrf.mxu0
        %1576 = vmatprep.mubr.f32.mxu0 0.0
        %1577 = vmatmul.mubr.f32.gmra.mxu0 %v1431
        %v1578 = vpop.f32.mrf.mxu0
        %v1579 = vadd.f32 0.0, %v1578
        %v1580 = vpop.f32.mrf.mxu0
        %1581 = vmatprep.mubr.f32.mxu0 0.0
        %1582 = vmatmul.mubr.f32.gmra.mxu0 %v1434
        %v1583 = vpop.f32.mrf.mxu0
        %v1584 = vadd.f32 0.0, %v1583
        %v1585 = vpop.f32.mrf.mxu0
        %1586 = vmatprep.mubr.f32.mxu0 0.0
        %1587 = vmatmul.mubr.f32.gmra.mxu0 %v1437
        %v1588 = vpop.f32.mrf.mxu0
        %v1589 = vadd.f32 0.0, %v1588
        %v1590 = vpop.f32.mrf.mxu0
        %1591 = vmatprep.mubr.f32.mxu0 0.0
        %1592 = vmatmul.mubr.f32.gmra.mxu0 %v1440
        %v1593 = vpop.f32.mrf.mxu0
        %v1594 = vadd.f32 0.0, %v1593
        %v1595 = vpop.f32.mrf.mxu0
        %1596 = vdwg.mxu0
        %1597 = vmatprep.subr.mxu0 0.0
        %1598 = vmatpush1.msra.mxu0 0.0
        %1599 = vmatprep.subr.mxu0 0.0
        %1600 = vmatpush1.msra.mxu0 0.0
        %1601 = vmatprep.subr.mxu0 0.0
        %1602 = vmatpush1.msra.mxu0 0.0
        %1603 = vmatprep.subr.mxu0 0.0
        %1604 = vmatpush1.msra.mxu0 0.0
        %1605 = vmatprep.subr.mxu0 0.0
        %1606 = vmatpush1.msra.mxu0 0.0
        %1607 = vmatprep.subr.mxu0 0.0
        %1608 = vmatpush1.msra.mxu0 0.0
        %1609 = vmatprep.subr.mxu0 0.0
        %1610 = vmatpush1.msra.mxu0 0.0
        %1611 = vmatprep.subr.mxu0 0.0
        %1612 = vmatpush1.msra.mxu0 0.0
        %1613 = vmatprep.subr.mxu0 0.0
        %1614 = vmatpush1.msra.mxu0 0.0
        %1615 = vmatprep.subr.mxu0 0.0
        %1616 = vmatpush1.msra.mxu0 0.0
        %1617 = vmatprep.subr.mxu0 0.0
        %1618 = vmatpush1.msra.mxu0 0.0
        %1619 = vmatprep.subr.mxu0 0.0
        %1620 = vmatpush1.msra.mxu0 0.0
        %1621 = vmatprep.subr.mxu0 0.0
        %1622 = vmatpush1.msra.mxu0 0.0
        %1623 = vmatprep.subr.mxu0 0.0
        %1624 = vmatpush1.msra.mxu0 0.0
        %1625 = vmatprep.subr.mxu0 0.0
        %1626 = vmatpush1.msra.mxu0 0.0
        %1627 = vmatprep.subr.mxu0 0.0
        %1628 = vmatpush1.msra.mxu0 %v1386
        %1629 = vmatprep.subr.mxu0 0.0
        %1630 = vmatpush2.msra.mxu0 0.0
        %1631 = vmatprep.subr.mxu0 0.0
        %1632 = vmatpush2.msra.mxu0 0.0
        %1633 = vmatprep.subr.mxu0 0.0
        %1634 = vmatpush2.msra.mxu0 0.0
        %1635 = vmatprep.subr.mxu0 0.0
        %1636 = vmatpush2.msra.mxu0 0.0
        %1637 = vmatprep.subr.mxu0 0.0
        %1638 = vmatpush2.msra.mxu0 0.0
        %1639 = vmatprep.subr.mxu0 0.0
        %1640 = vmatpush2.msra.mxu0 0.0
        %1641 = vmatprep.subr.mxu0 0.0
        %1642 = vmatpush2.msra.mxu0 0.0
        %1643 = vmatprep.subr.mxu0 0.0
        %1644 = vmatpush2.msra.mxu0 0.0
        %1645 = vmatprep.subr.mxu0 0.0
        %1646 = vmatpush2.msra.mxu0 0.0
        %1647 = vmatprep.subr.mxu0 0.0
        %1648 = vmatpush2.msra.mxu0 0.0
        %1649 = vmatprep.subr.mxu0 0.0
        %1650 = vmatpush2.msra.mxu0 0.0
        %1651 = vmatprep.subr.mxu0 0.0
        %1652 = vmatpush2.msra.mxu0 0.0
        %1653 = vmatprep.subr.mxu0 0.0
        %1654 = vmatpush2.msra.mxu0 0.0
        %1655 = vmatprep.subr.mxu0 0.0
        %1656 = vmatpush2.msra.mxu0 0.0
        %1657 = vmatprep.subr.mxu0 0.0
        %1658 = vmatpush2.msra.mxu0 0.0
        %1659 = vmatprep.subr.mxu0 0.0
        %1660 = vmatpush2.msra.mxu0 0.0
        %1661 = vmatprep.mubr.f32.mxu0 0.0
        %1662 = vmatmul.mubr.f32.gmra.mxu0 %v1389
        %v1663 = vpop.f32.mrf.mxu0
        %v1664 = vadd.f32 0.0, %v1663
        %v1665 = vpop.f32.mrf.mxu0
        %1666 = vmatprep.mubr.f32.mxu0 0.0
        %1667 = vmatmul.mubr.f32.gmra.mxu0 %v1392
        %v1668 = vpop.f32.mrf.mxu0
        %v1669 = vadd.f32 0.0, %v1668
        %v1670 = vpop.f32.mrf.mxu0
        %1671 = vmatprep.mubr.f32.mxu0 0.0
        %1672 = vmatmul.mubr.f32.gmra.mxu0 %v1395
        %v1673 = vpop.f32.mrf.mxu0
        %v1674 = vadd.f32 0.0, %v1673
        %v1675 = vpop.f32.mrf.mxu0
        %1676 = vmatprep.mubr.f32.mxu0 0.0
        %1677 = vmatmul.mubr.f32.gmra.mxu0 %v1398
        %v1678 = vpop.f32.mrf.mxu0
        %v1679 = vadd.f32 0.0, %v1678
        %v1680 = vpop.f32.mrf.mxu0
        %1681 = vmatprep.mubr.f32.mxu0 0.0
        %1682 = vmatmul.mubr.f32.gmra.mxu0 %v1401
        %v1683 = vpop.f32.mrf.mxu0
        %v1684 = vadd.f32 0.0, %v1683
        %v1685 = vpop.f32.mrf.mxu0
        %1686 = vmatprep.mubr.f32.mxu0 0.0
        %1687 = vmatmul.mubr.f32.gmra.mxu0 %v1404
        %v1688 = vpop.f32.mrf.mxu0
        %v1689 = vadd.f32 0.0, %v1688
        %v1690 = vpop.f32.mrf.mxu0
        %1691 = vmatprep.mubr.f32.mxu0 0.0
        %1692 = vmatmul.mubr.f32.gmra.mxu0 %v1407
        %v1693 = vpop.f32.mrf.mxu0
        %v1694 = vadd.f32 0.0, %v1693
        %v1695 = vpop.f32.mrf.mxu0
        %1696 = vmatprep.mubr.f32.mxu0 0.0
        %1697 = vmatmul.mubr.f32.gmra.mxu0 %v1410
        %v1698 = vpop.f32.mrf.mxu0
        %v1699 = vadd.f32 0.0, %v1698
        %v1700 = vpop.f32.mrf.mxu0
        %1701 = vmatprep.mubr.f32.mxu0 0.0
        %1702 = vmatmul.mubr.f32.gmra.mxu0 %v1413
        %v1703 = vpop.f32.mrf.mxu0
        %v1704 = vadd.f32 0.0, %v1703
        %v1705 = vpop.f32.mrf.mxu0
        %1706 = vmatprep.mubr.f32.mxu0 0.0
        %1707 = vmatmul.mubr.f32.gmra.mxu0 %v1416
        %v1708 = vpop.f32.mrf.mxu0
        %v1709 = vadd.f32 0.0, %v1708
        %v1710 = vpop.f32.mrf.mxu0
        %1711 = vmatprep.mubr.f32.mxu0 0.0
        %1712 = vmatmul.mubr.f32.gmra.mxu0 %v1419
        %v1713 = vpop.f32.mrf.mxu0
        %v1714 = vadd.f32 0.0, %v1713
        %v1715 = vpop.f32.mrf.mxu0
        %1716 = vmatprep.mubr.f32.mxu0 0.0
        %1717 = vmatmul.mubr.f32.gmra.mxu0 %v1422
        %v1718 = vpop.f32.mrf.mxu0
        %v1719 = vadd.f32 0.0, %v1718
        %v1720 = vpop.f32.mrf.mxu0
        %1721 = vmatprep.mubr.f32.mxu0 0.0
        %1722 = vmatmul.mubr.f32.gmra.mxu0 %v1425
        %v1723 = vpop.f32.mrf.mxu0
        %v1724 = vadd.f32 0.0, %v1723
        %v1725 = vpop.f32.mrf.mxu0
        %1726 = vmatprep.mubr.f32.mxu0 0.0
        %1727 = vmatmul.mubr.f32.gmra.mxu0 %v1428
        %v1728 = vpop.f32.mrf.mxu0
        %v1729 = vadd.f32 0.0, %v1728
        %v1730 = vpop.f32.mrf.mxu0
        %1731 = vmatprep.mubr.f32.mxu0 0.0
        %1732 = vmatmul.mubr.f32.gmra.mxu0 %v1431
        %v1733 = vpop.f32.mrf.mxu0
        %v1734 = vadd.f32 0.0, %v1733
        %v1735 = vpop.f32.mrf.mxu0
        %1736 = vmatprep.mubr.f32.mxu0 0.0
        %1737 = vmatmul.mubr.f32.gmra.mxu0 %v1434
        %v1738 = vpop.f32.mrf.mxu0
        %v1739 = vadd.f32 0.0, %v1738
        %v1740 = vpop.f32.mrf.mxu0
        %1741 = vmatprep.mubr.f32.mxu0 0.0
        %1742 = vmatmul.mubr.f32.gmra.mxu0 %v1437
        %v1743 = vpop.f32.mrf.mxu0
        %v1744 = vadd.f32 0.0, %v1743
        %v1745 = vpop.f32.mrf.mxu0
        %1746 = vmatprep.mubr.f32.mxu0 0.0
        %1747 = vmatmul.mubr.f32.gmra.mxu0 %v1440
        %v1748 = vpop.f32.mrf.mxu0
        %v1749 = vadd.f32 0.0, %v1748
        %v1750 = vpop.f32.mrf.mxu0
        %1751 = vdwg.mxu0
        %v1752 = vmul.f32 %v1043, %v1509
        %v1753 = vmul.f32 %v1044, %v1514
        %v1754 = vmul.f32 %v1045, %v1519
        %v1755 = vmul.f32 %v1046, %v1524
        %v1756 = vmul.f32 %v1047, %v1529
        %v1757 = vmul.f32 %v1048, %v1534
        %v1758 = vmul.f32 %v1049, %v1539
        %v1759 = vmul.f32 %v1050, %v1544
        %v1760 = vmul.f32 %v1051, %v1549
        %v1761 = vmul.f32 %v1052, %v1554
        %v1762 = vmul.f32 %v1053, %v1559
        %v1763 = vmul.f32 %v1054, %v1564
        %v1764 = vmul.f32 %v1055, %v1569
        %v1765 = vmul.f32 %v1056, %v1574
        %v1766 = vmul.f32 %v1057, %v1579
        %v1767 = vmul.f32 %v1058, %v1584
        %v1768 = vmul.f32 %v1059, %v1589
        %v1769 = vmul.f32 %v1060, %v1594
        %v1770 = vadd.f32 %v1752, %v1664
        %v1771 = vadd.f32 %v1753, %v1669
        %v1772 = vadd.f32 %v1754, %v1674
        %v1773 = vadd.f32 %v1755, %v1679
        %v1774 = vadd.f32 %v1756, %v1684
        %v1775 = vadd.f32 %v1757, %v1689
        %v1776 = vadd.f32 %v1758, %v1694
        %v1777 = vadd.f32 %v1759, %v1699
        %v1778 = vadd.f32 %v1760, %v1704
        %v1779 = vadd.f32 %v1761, %v1709
        %v1780 = vadd.f32 %v1762, %v1714
        %v1781 = vadd.f32 %v1763, %v1719
        %v1782 = vadd.f32 %v1764, %v1724
        %v1783 = vadd.f32 %v1765, %v1729
        %v1784 = vadd.f32 %v1766, %v1734
        %v1785 = vadd.f32 %v1767, %v1739
        %v1786 = vadd.f32 %v1768, %v1744
        %v1787 = vadd.f32 %v1769, %v1749
        %v1788 = vmax.f32 %v1770, 0.0
        %v1789 = vmax.f32 %v1771, 0.0
        %v1790 = vmax.f32 %v1772, 0.0
        %v1791 = vmax.f32 %v1773, 0.0
        %v1792 = vmax.f32 %v1774, 0.0
        %v1793 = vmax.f32 %v1775, 0.0
        %v1794 = vmax.f32 %v1776, 0.0
        %v1795 = vmax.f32 %v1777, 0.0
        %v1796 = vmax.f32 %v1778, 0.0
        %v1797 = vmax.f32 %v1779, 0.0
        %v1798 = vmax.f32 %v1780, 0.0
        %v1799 = vmax.f32 %v1781, 0.0
        %v1800 = vmax.f32 %v1782, 0.0
        %v1801 = vmax.f32 %v1783, 0.0
        %v1802 = vmax.f32 %v1784, 0.0
        %v1803 = vmax.f32 %v1785, 0.0
        %v1804 = vmax.f32 %v1786, 0.0
        %v1805 = vmax.f32 %v1787, 0.0
        %1806 = vst [vmem:[#allocation2] sm:$0x1] 0.0
        %1807 = vst [vmem:[#allocation2 + $0x8f] sm:$0x1] 0.0
        %1808 = vst [vmem:[#allocation2 + $0x1] sm:$0xff] %v1788
        %1809 = vst [vmem:[#allocation2 + $0x9] sm:$0xff] %v1789
        %1810 = vst [vmem:[#allocation2 + $0x11] sm:$0xff] %v1790
        %1811 = vst [vmem:[#allocation2 + $0x19] sm:$0xff] %v1791
        %1812 = vst [vmem:[#allocation2 + $0x21] sm:$0xff] %v1792
        %1813 = vst [vmem:[#allocation2 + $0x29] sm:$0xff] %v1793
        %1814 = vst [vmem:[#allocation2 + $0x31] sm:$0xff] %v1794
        %1815 = vst [vmem:[#allocation2 + $0x39] sm:$0xff] %v1795
        %1816 = vst [vmem:[#allocation2 + $0x41] sm:$0xff] %v1796
        %1817 = vst [vmem:[#allocation2 + $0x49] sm:$0xff] %v1797
        %1818 = vst [vmem:[#allocation2 + $0x51] sm:$0xff] %v1798
        %1819 = vst [vmem:[#allocation2 + $0x59] sm:$0xff] %v1799
        %1820 = vst [vmem:[#allocation2 + $0x61] sm:$0xff] %v1800
        %1821 = vst [vmem:[#allocation2 + $0x69] sm:$0xff] %v1801
        %1822 = vst [vmem:[#allocation2 + $0x71] sm:$0xff] %v1802
        %1823 = vst [vmem:[#allocation2 + $0x79] sm:$0xff] %v1803
        %1824 = vst [vmem:[#allocation2 + $0x81] sm:$0xff] %v1804
        %1825 = vst [vmem:[#allocation2 + $0x89] sm:$0x3f] %v1805
        %v1826 = vld [vmem:[#allocation2] sm:$0xff]
        %v1827 = vld [vmem:[#allocation2 + $0x8] sm:$0xff]
        %v1828 = vld [vmem:[#allocation2 + $0x10] sm:$0xff]
        %v1829 = vld [vmem:[#allocation2 + $0x18] sm:$0xff]
        %v1830 = vld [vmem:[#allocation2 + $0x20] sm:$0xff]
        %v1831 = vld [vmem:[#allocation2 + $0x28] sm:$0xff]
        %v1832 = vld [vmem:[#allocation2 + $0x30] sm:$0xff]
        %v1833 = vld [vmem:[#allocation2 + $0x38] sm:$0xff]
        %v1834 = vld [vmem:[#allocation2 + $0x40] sm:$0xff]
        %v1835 = vld [vmem:[#allocation2 + $0x48] sm:$0xff]
        %v1836 = vld [vmem:[#allocation2 + $0x50] sm:$0xff]
        %v1837 = vld [vmem:[#allocation2 + $0x58] sm:$0xff]
        %v1838 = vld [vmem:[#allocation2 + $0x60] sm:$0xff]
        %v1839 = vld [vmem:[#allocation2 + $0x68] sm:$0xff]
        %v1840 = vld [vmem:[#allocation2 + $0x70] sm:$0xff]
        %v1841 = vld [vmem:[#allocation2 + $0x78] sm:$0xff]
        %v1842 = vld [vmem:[#allocation2 + $0x80] sm:$0xff]
        %v1843 = vld [vmem:[#allocation2 + $0x88] sm:$0x3f]
        %v1844 = vpack.c.bf16 %v1827, %v1826
        %v1845 = vpack.c.bf16 %v1829, %v1828
        %v1846 = vpack.c.bf16 %v1831, %v1830
        %v1847 = vpack.c.bf16 %v1833, %v1832
        %v1848 = vpack.c.bf16 %v1835, %v1834
        %v1849 = vpack.c.bf16 %v1837, %v1836
        %v1850 = vpack.c.bf16 %v1839, %v1838
        %v1851 = vpack.c.bf16 %v1841, %v1840
        %v1852 = vpack.c.bf16 %v1843, %v1842
        %v1853 = vld [vmem:[#allocation8] sm:$0xf]
        %v1854 = vld [vmem:[#allocation8 + $0x4] sm:$0xf]
        %v1855 = vld [vmem:[#allocation8 + $0x8] sm:$0xf]
        %v1856 = vld [vmem:[#allocation8 + $0xc] sm:$0xf]
        %v1857 = vld [vmem:[#allocation8 + $0x10] sm:$0xf]
        %v1858 = vld [vmem:[#allocation8 + $0x14] sm:$0xf]
        %v1859 = vld [vmem:[#allocation8 + $0x18] sm:$0xf]
        %v1860 = vld [vmem:[#allocation8 + $0x1c] sm:$0xf]
        %v1861 = vld [vmem:[#allocation8 + $0x20] sm:$0xf]
        %v1862 = vld [vmem:[#allocation8 + $0x24] sm:$0xf]
        %v1863 = vld [vmem:[#allocation8 + $0x28] sm:$0xf]
        %v1864 = vld [vmem:[#allocation8 + $0x2c] sm:$0xf]
        %v1865 = vld [vmem:[#allocation8 + $0x30] sm:$0xf]
        %v1866 = vld [vmem:[#allocation8 + $0x34] sm:$0xf]
        %v1867 = vld [vmem:[#allocation8 + $0x38] sm:$0xf]
        %v1868 = vld [vmem:[#allocation8 + $0x3c] sm:$0xf]
        %v1869 = vld [vmem:[#allocation2 + $0x1] sm:$0xff]
        %v1870 = vld [vmem:[#allocation2 + $0x9] sm:$0xff]
        %v1871 = vld [vmem:[#allocation2 + $0x11] sm:$0xff]
        %v1872 = vld [vmem:[#allocation2 + $0x19] sm:$0xff]
        %v1873 = vld [vmem:[#allocation2 + $0x21] sm:$0xff]
        %v1874 = vld [vmem:[#allocation2 + $0x29] sm:$0xff]
        %v1875 = vld [vmem:[#allocation2 + $0x31] sm:$0xff]
        %v1876 = vld [vmem:[#allocation2 + $0x39] sm:$0xff]
        %v1877 = vld [vmem:[#allocation2 + $0x41] sm:$0xff]
        %v1878 = vld [vmem:[#allocation2 + $0x49] sm:$0xff]
        %v1879 = vld [vmem:[#allocation2 + $0x51] sm:$0xff]
        %v1880 = vld [vmem:[#allocation2 + $0x59] sm:$0xff]
        %v1881 = vld [vmem:[#allocation2 + $0x61] sm:$0xff]
        %v1882 = vld [vmem:[#allocation2 + $0x69] sm:$0xff]
        %v1883 = vld [vmem:[#allocation2 + $0x71] sm:$0xff]
        %v1884 = vld [vmem:[#allocation2 + $0x79] sm:$0xff]
        %v1885 = vld [vmem:[#allocation2 + $0x81] sm:$0xff]
        %v1886 = vld [vmem:[#allocation2 + $0x89] sm:$0x3f]
        %v1887 = vpack.c.bf16 %v1870, %v1869
        %v1888 = vpack.c.bf16 %v1872, %v1871
        %v1889 = vpack.c.bf16 %v1874, %v1873
        %v1890 = vpack.c.bf16 %v1876, %v1875
        %v1891 = vpack.c.bf16 %v1878, %v1877
        %v1892 = vpack.c.bf16 %v1880, %v1879
        %v1893 = vpack.c.bf16 %v1882, %v1881
        %v1894 = vpack.c.bf16 %v1884, %v1883
        %v1895 = vpack.c.bf16 %v1886, %v1885
        %s1896 = scalar_lea.vmem [#allocation8], 64
        %v1897 = vld [vmem:[%s1896] sm:$0xf]
        %v1898 = vld [vmem:[%s1896 + $0x4] sm:$0xf]
        %v1899 = vld [vmem:[%s1896 + $0x8] sm:$0xf]
        %v1900 = vld [vmem:[%s1896 + $0xc] sm:$0xf]
        %v1901 = vld [vmem:[%s1896 + $0x10] sm:$0xf]
        %v1902 = vld [vmem:[%s1896 + $0x14] sm:$0xf]
        %v1903 = vld [vmem:[%s1896 + $0x18] sm:$0xf]
        %v1904 = vld [vmem:[%s1896 + $0x1c] sm:$0xf]
        %v1905 = vld [vmem:[%s1896 + $0x20] sm:$0xf]
        %v1906 = vld [vmem:[%s1896 + $0x24] sm:$0xf]
        %v1907 = vld [vmem:[%s1896 + $0x28] sm:$0xf]
        %v1908 = vld [vmem:[%s1896 + $0x2c] sm:$0xf]
        %v1909 = vld [vmem:[%s1896 + $0x30] sm:$0xf]
        %v1910 = vld [vmem:[%s1896 + $0x34] sm:$0xf]
        %v1911 = vld [vmem:[%s1896 + $0x38] sm:$0xf]
        %v1912 = vld [vmem:[%s1896 + $0x3c] sm:$0xf]
        %v1929 = vunpack.c.l.b16 %v1897
        %v1930 = vunpack.c.l.b16 %v1898
        %v1931 = vunpack.c.l.b16 %v1899
        %v1932 = vunpack.c.l.b16 %v1900
        %v1933 = vunpack.c.l.b16 %v1901
        %v1934 = vunpack.c.l.b16 %v1902
        %v1935 = vunpack.c.l.b16 %v1903
        %v1936 = vunpack.c.l.b16 %v1904
        %v1937 = vunpack.c.l.b16 %v1905
        %v1938 = vunpack.c.l.b16 %v1906
        %v1939 = vunpack.c.l.b16 %v1907
        %v1940 = vunpack.c.l.b16 %v1908
        %v1941 = vunpack.c.l.b16 %v1909
        %v1942 = vunpack.c.l.b16 %v1910
        %v1943 = vunpack.c.l.b16 %v1911
        %v1944 = vunpack.c.l.b16 %v1912
        %v1945 = vpack.c.b16 %v1930, %v1929
        %v1946 = vpack.c.b16 %v1932, %v1931
        %v1947 = vpack.c.b16 %v1934, %v1933
        %v1948 = vpack.c.b16 %v1936, %v1935
        %v1949 = vpack.c.b16 %v1938, %v1937
        %v1950 = vpack.c.b16 %v1940, %v1939
        %v1951 = vpack.c.b16 %v1942, %v1941
        %v1952 = vpack.c.b16 %v1944, %v1943
        %1961 = vmatprep.subr.bf16.mxu0 0
        %1962 = vmatpush1.bf16.msra.mxu0 %v1952
        %1963 = vmatprep.subr.bf16.mxu0 0
        %1964 = vmatpush1.bf16.msra.mxu0 %v1951
        %1965 = vmatprep.subr.bf16.mxu0 0
        %1966 = vmatpush1.bf16.msra.mxu0 %v1950
        %1967 = vmatprep.subr.bf16.mxu0 0
        %1968 = vmatpush1.bf16.msra.mxu0 %v1949
        %1969 = vmatprep.subr.bf16.mxu0 0
        %1970 = vmatpush1.bf16.msra.mxu0 %v1948
        %1971 = vmatprep.subr.bf16.mxu0 0
        %1972 = vmatpush1.bf16.msra.mxu0 %v1947
        %1973 = vmatprep.subr.bf16.mxu0 0
        %1974 = vmatpush1.bf16.msra.mxu0 %v1946
        %1975 = vmatprep.subr.bf16.mxu0 0
        %1976 = vmatpush1.bf16.msra.mxu0 %v1945
        %1977 = vmatprep.subr.bf16.mxu0 0
        %1978 = vmatpush2.bf16.msra.mxu0 0
        %1979 = vmatprep.subr.bf16.mxu0 0
        %1980 = vmatpush2.bf16.msra.mxu0 0
        %1981 = vmatprep.subr.bf16.mxu0 0
        %1982 = vmatpush2.bf16.msra.mxu0 0
        %1983 = vmatprep.subr.bf16.mxu0 0
        %1984 = vmatpush2.bf16.msra.mxu0 0
        %1985 = vmatprep.subr.bf16.mxu0 0
        %1986 = vmatpush2.bf16.msra.mxu0 0
        %1987 = vmatprep.subr.bf16.mxu0 0
        %1988 = vmatpush2.bf16.msra.mxu0 0
        %1989 = vmatprep.subr.bf16.mxu0 0
        %1990 = vmatpush2.bf16.msra.mxu0 0
        %1991 = vmatprep.subr.bf16.mxu0 0
        %1992 = vmatpush2.bf16.msra.mxu0 0
        %1993 = vmatprep.mubr.bf16.mxu0 0
        %1994 = vmatmul.mubr.bf16.gmra.mxu0 %v1887
        %v1995 = vpop.f32.mrf.mxu0
        %v1996 = vadd.f32 0.0, %v1995
        %v1997 = vpop.f32.mrf.mxu0
        %v1998 = vpop.f32.mrf.mxu0
        %v1999 = vadd.f32 0.0, %v1998
        %v2000 = vpop.f32.mrf.mxu0
        %2001 = vmatprep.mubr.bf16.mxu0 0
        %2002 = vmatmul.mubr.bf16.gmra.mxu0 %v1888
        %v2003 = vpop.f32.mrf.mxu0
        %v2004 = vadd.f32 0.0, %v2003
        %v2005 = vpop.f32.mrf.mxu0
        %v2006 = vpop.f32.mrf.mxu0
        %v2007 = vadd.f32 0.0, %v2006
        %v2008 = vpop.f32.mrf.mxu0
        %2009 = vmatprep.mubr.bf16.mxu0 0
        %2010 = vmatmul.mubr.bf16.gmra.mxu0 %v1889
        %v2011 = vpop.f32.mrf.mxu0
        %v2012 = vadd.f32 0.0, %v2011
        %v2013 = vpop.f32.mrf.mxu0
        %v2014 = vpop.f32.mrf.mxu0
        %v2015 = vadd.f32 0.0, %v2014
        %v2016 = vpop.f32.mrf.mxu0
        %2017 = vmatprep.mubr.bf16.mxu0 0
        %2018 = vmatmul.mubr.bf16.gmra.mxu0 %v1890
        %v2019 = vpop.f32.mrf.mxu0
        %v2020 = vadd.f32 0.0, %v2019
        %v2021 = vpop.f32.mrf.mxu0
        %v2022 = vpop.f32.mrf.mxu0
        %v2023 = vadd.f32 0.0, %v2022
        %v2024 = vpop.f32.mrf.mxu0
        %2025 = vmatprep.mubr.bf16.mxu0 0
        %2026 = vmatmul.mubr.bf16.gmra.mxu0 %v1891
        %v2027 = vpop.f32.mrf.mxu0
        %v2028 = vadd.f32 0.0, %v2027
        %v2029 = vpop.f32.mrf.mxu0
        %v2030 = vpop.f32.mrf.mxu0
        %v2031 = vadd.f32 0.0, %v2030
        %v2032 = vpop.f32.mrf.mxu0
        %2033 = vmatprep.mubr.bf16.mxu0 0
        %2034 = vmatmul.mubr.bf16.gmra.mxu0 %v1892
        %v2035 = vpop.f32.mrf.mxu0
        %v2036 = vadd.f32 0.0, %v2035
        %v2037 = vpop.f32.mrf.mxu0
        %v2038 = vpop.f32.mrf.mxu0
        %v2039 = vadd.f32 0.0, %v2038
        %v2040 = vpop.f32.mrf.mxu0
        %2041 = vmatprep.mubr.bf16.mxu0 0
        %2042 = vmatmul.mubr.bf16.gmra.mxu0 %v1893
        %v2043 = vpop.f32.mrf.mxu0
        %v2044 = vadd.f32 0.0, %v2043
        %v2045 = vpop.f32.mrf.mxu0
        %v2046 = vpop.f32.mrf.mxu0
        %v2047 = vadd.f32 0.0, %v2046
        %v2048 = vpop.f32.mrf.mxu0
        %2049 = vmatprep.mubr.bf16.mxu0 0
        %2050 = vmatmul.mubr.bf16.gmra.mxu0 %v1894
        %v2051 = vpop.f32.mrf.mxu0
        %v2052 = vadd.f32 0.0, %v2051
        %v2053 = vpop.f32.mrf.mxu0
        %v2054 = vpop.f32.mrf.mxu0
        %v2055 = vadd.f32 0.0, %v2054
        %v2056 = vpop.f32.mrf.mxu0
        %2057 = vmatprep.mubr.bf16.mxu0 0
        %2058 = vmatmul.mubr.bf16.gmra.mxu0 %v1895
        %v2059 = vpop.f32.mrf.mxu0
        %v2060 = vadd.f32 0.0, %v2059
        %v2061 = vpop.f32.mrf.mxu0
        %v2062 = vpop.f32.mrf.mxu0
        %v2063 = vadd.f32 0.0, %v2062
        %v2064 = vpop.f32.mrf.mxu0
        %2065 = vdwg.mxu0
        %v2082 = vunpack.c.l.b16 %v1853
        %v2083 = vunpack.c.l.b16 %v1854
        %v2084 = vunpack.c.l.b16 %v1855
        %v2085 = vunpack.c.l.b16 %v1856
        %v2086 = vunpack.c.l.b16 %v1857
        %v2087 = vunpack.c.l.b16 %v1858
        %v2088 = vunpack.c.l.b16 %v1859
        %v2089 = vunpack.c.l.b16 %v1860
        %v2090 = vunpack.c.l.b16 %v1861
        %v2091 = vunpack.c.l.b16 %v1862
        %v2092 = vunpack.c.l.b16 %v1863
        %v2093 = vunpack.c.l.b16 %v1864
        %v2094 = vunpack.c.l.b16 %v1865
        %v2095 = vunpack.c.l.b16 %v1866
        %v2096 = vunpack.c.l.b16 %v1867
        %v2097 = vunpack.c.l.b16 %v1868
        %v2098 = vpack.c.b16 %v2083, %v2082
        %v2099 = vpack.c.b16 %v2085, %v2084
        %v2100 = vpack.c.b16 %v2087, %v2086
        %v2101 = vpack.c.b16 %v2089, %v2088
        %v2102 = vpack.c.b16 %v2091, %v2090
        %v2103 = vpack.c.b16 %v2093, %v2092
        %v2104 = vpack.c.b16 %v2095, %v2094
        %v2105 = vpack.c.b16 %v2097, %v2096
        %2114 = vmatprep.subr.bf16.mxu0 0
        %2115 = vmatpush1.bf16.msra.mxu0 %v2105
        %2116 = vmatprep.subr.bf16.mxu0 0
        %2117 = vmatpush1.bf16.msra.mxu0 %v2104
        %2118 = vmatprep.subr.bf16.mxu0 0
        %2119 = vmatpush1.bf16.msra.mxu0 %v2103
        %2120 = vmatprep.subr.bf16.mxu0 0
        %2121 = vmatpush1.bf16.msra.mxu0 %v2102
        %2122 = vmatprep.subr.bf16.mxu0 0
        %2123 = vmatpush1.bf16.msra.mxu0 %v2101
        %2124 = vmatprep.subr.bf16.mxu0 0
        %2125 = vmatpush1.bf16.msra.mxu0 %v2100
        %2126 = vmatprep.subr.bf16.mxu0 0
        %2127 = vmatpush1.bf16.msra.mxu0 %v2099
        %2128 = vmatprep.subr.bf16.mxu0 0
        %2129 = vmatpush1.bf16.msra.mxu0 %v2098
        %2130 = vmatprep.subr.bf16.mxu0 0
        %2131 = vmatpush2.bf16.msra.mxu0 0
        %2132 = vmatprep.subr.bf16.mxu0 0
        %2133 = vmatpush2.bf16.msra.mxu0 0
        %2134 = vmatprep.subr.bf16.mxu0 0
        %2135 = vmatpush2.bf16.msra.mxu0 0
        %2136 = vmatprep.subr.bf16.mxu0 0
        %2137 = vmatpush2.bf16.msra.mxu0 0
        %2138 = vmatprep.subr.bf16.mxu0 0
        %2139 = vmatpush2.bf16.msra.mxu0 0
        %2140 = vmatprep.subr.bf16.mxu0 0
        %2141 = vmatpush2.bf16.msra.mxu0 0
        %2142 = vmatprep.subr.bf16.mxu0 0
        %2143 = vmatpush2.bf16.msra.mxu0 0
        %2144 = vmatprep.subr.bf16.mxu0 0
        %2145 = vmatpush2.bf16.msra.mxu0 0
        %2146 = vmatprep.mubr.bf16.mxu0 0
        %2147 = vmatmul.mubr.bf16.gmra.mxu0 %v1844
        %v2148 = vpop.f32.mrf.mxu0
        %v2149 = vadd.f32 %v1996, %v2148
        %v2150 = vpop.f32.mrf.mxu0
        %v2151 = vpop.f32.mrf.mxu0
        %v2152 = vadd.f32 %v1999, %v2151
        %v2153 = vpop.f32.mrf.mxu0
        %2154 = vmatprep.mubr.bf16.mxu0 0
        %2155 = vmatmul.mubr.bf16.gmra.mxu0 %v1845
        %v2156 = vpop.f32.mrf.mxu0
        %v2157 = vadd.f32 %v2004, %v2156
        %v2158 = vpop.f32.mrf.mxu0
        %v2159 = vpop.f32.mrf.mxu0
        %v2160 = vadd.f32 %v2007, %v2159
        %v2161 = vpop.f32.mrf.mxu0
        %2162 = vmatprep.mubr.bf16.mxu0 0
        %2163 = vmatmul.mubr.bf16.gmra.mxu0 %v1846
        %v2164 = vpop.f32.mrf.mxu0
        %v2165 = vadd.f32 %v2012, %v2164
        %v2166 = vpop.f32.mrf.mxu0
        %v2167 = vpop.f32.mrf.mxu0
        %v2168 = vadd.f32 %v2015, %v2167
        %v2169 = vpop.f32.mrf.mxu0
        %2170 = vmatprep.mubr.bf16.mxu0 0
        %2171 = vmatmul.mubr.bf16.gmra.mxu0 %v1847
        %v2172 = vpop.f32.mrf.mxu0
        %v2173 = vadd.f32 %v2020, %v2172
        %v2174 = vpop.f32.mrf.mxu0
        %v2175 = vpop.f32.mrf.mxu0
        %v2176 = vadd.f32 %v2023, %v2175
        %v2177 = vpop.f32.mrf.mxu0
        %2178 = vmatprep.mubr.bf16.mxu0 0
        %2179 = vmatmul.mubr.bf16.gmra.mxu0 %v1848
        %v2180 = vpop.f32.mrf.mxu0
        %v2181 = vadd.f32 %v2028, %v2180
        %v2182 = vpop.f32.mrf.mxu0
        %v2183 = vpop.f32.mrf.mxu0
        %v2184 = vadd.f32 %v2031, %v2183
        %v2185 = vpop.f32.mrf.mxu0
        %2186 = vmatprep.mubr.bf16.mxu0 0
        %2187 = vmatmul.mubr.bf16.gmra.mxu0 %v1849
        %v2188 = vpop.f32.mrf.mxu0
        %v2189 = vadd.f32 %v2036, %v2188
        %v2190 = vpop.f32.mrf.mxu0
        %v2191 = vpop.f32.mrf.mxu0
        %v2192 = vadd.f32 %v2039, %v2191
        %v2193 = vpop.f32.mrf.mxu0
        %2194 = vmatprep.mubr.bf16.mxu0 0
        %2195 = vmatmul.mubr.bf16.gmra.mxu0 %v1850
        %v2196 = vpop.f32.mrf.mxu0
        %v2197 = vadd.f32 %v2044, %v2196
        %v2198 = vpop.f32.mrf.mxu0
        %v2199 = vpop.f32.mrf.mxu0
        %v2200 = vadd.f32 %v2047, %v2199
        %v2201 = vpop.f32.mrf.mxu0
        %2202 = vmatprep.mubr.bf16.mxu0 0
        %2203 = vmatmul.mubr.bf16.gmra.mxu0 %v1851
        %v2204 = vpop.f32.mrf.mxu0
        %v2205 = vadd.f32 %v2052, %v2204
        %v2206 = vpop.f32.mrf.mxu0
        %v2207 = vpop.f32.mrf.mxu0
        %v2208 = vadd.f32 %v2055, %v2207
        %v2209 = vpop.f32.mrf.mxu0
        %2210 = vmatprep.mubr.bf16.mxu0 0
        %2211 = vmatmul.mubr.bf16.gmra.mxu0 %v1852
        %v2212 = vpop.f32.mrf.mxu0
        %v2213 = vadd.f32 %v2060, %v2212
        %v2214 = vpop.f32.mrf.mxu0
        %v2215 = vpop.f32.mrf.mxu0
        %v2216 = vadd.f32 %v2063, %v2215
        %v2217 = vpop.f32.mrf.mxu0
        %2218 = vdwg.mxu0
        %v2219 = vld [vmem:[#allocation2 + $0x2] sm:$0xff]
        %v2220 = vld [vmem:[#allocation2 + $0xa] sm:$0xff]
        %v2221 = vld [vmem:[#allocation2 + $0x12] sm:$0xff]
        %v2222 = vld [vmem:[#allocation2 + $0x1a] sm:$0xff]
        %v2223 = vld [vmem:[#allocation2 + $0x22] sm:$0xff]
        %v2224 = vld [vmem:[#allocation2 + $0x2a] sm:$0xff]
        %v2225 = vld [vmem:[#allocation2 + $0x32] sm:$0xff]
        %v2226 = vld [vmem:[#allocation2 + $0x3a] sm:$0xff]
        %v2227 = vld [vmem:[#allocation2 + $0x42] sm:$0xff]
        %v2228 = vld [vmem:[#allocation2 + $0x4a] sm:$0xff]
        %v2229 = vld [vmem:[#allocation2 + $0x52] sm:$0xff]
        %v2230 = vld [vmem:[#allocation2 + $0x5a] sm:$0xff]
        %v2231 = vld [vmem:[#allocation2 + $0x62] sm:$0xff]
        %v2232 = vld [vmem:[#allocation2 + $0x6a] sm:$0xff]
        %v2233 = vld [vmem:[#allocation2 + $0x72] sm:$0xff]
        %v2234 = vld [vmem:[#allocation2 + $0x7a] sm:$0xff]
        %v2235 = vld [vmem:[#allocation2 + $0x82] sm:$0xff]
        %v2236 = vld [vmem:[#allocation2 + $0x8a] sm:$0x3f]
        %v2237 = vpack.c.bf16 %v2220, %v2219
        %v2238 = vpack.c.bf16 %v2222, %v2221
        %v2239 = vpack.c.bf16 %v2224, %v2223
        %v2240 = vpack.c.bf16 %v2226, %v2225
        %v2241 = vpack.c.bf16 %v2228, %v2227
        %v2242 = vpack.c.bf16 %v2230, %v2229
        %v2243 = vpack.c.bf16 %v2232, %v2231
        %v2244 = vpack.c.bf16 %v2234, %v2233
        %v2245 = vpack.c.bf16 %v2236, %v2235
        %s2246 = scalar_lea.vmem [#allocation8], 128
        %v2247 = vld [vmem:[%s2246] sm:$0xf]
        %v2248 = vld [vmem:[%s2246 + $0x4] sm:$0xf]
        %v2249 = vld [vmem:[%s2246 + $0x8] sm:$0xf]
        %v2250 = vld [vmem:[%s2246 + $0xc] sm:$0xf]
        %v2251 = vld [vmem:[%s2246 + $0x10] sm:$0xf]
        %v2252 = vld [vmem:[%s2246 + $0x14] sm:$0xf]
        %v2253 = vld [vmem:[%s2246 + $0x18] sm:$0xf]
        %v2254 = vld [vmem:[%s2246 + $0x1c] sm:$0xf]
        %v2255 = vld [vmem:[%s2246 + $0x20] sm:$0xf]
        %v2256 = vld [vmem:[%s2246 + $0x24] sm:$0xf]
        %v2257 = vld [vmem:[%s2246 + $0x28] sm:$0xf]
        %v2258 = vld [vmem:[%s2246 + $0x2c] sm:$0xf]
        %v2259 = vld [vmem:[%s2246 + $0x30] sm:$0xf]
        %v2260 = vld [vmem:[%s2246 + $0x34] sm:$0xf]
        %v2261 = vld [vmem:[%s2246 + $0x38] sm:$0xf]
        %v2262 = vld [vmem:[%s2246 + $0x3c] sm:$0xf]
        %v2279 = vunpack.c.l.b16 %v2247
        %v2280 = vunpack.c.l.b16 %v2248
        %v2281 = vunpack.c.l.b16 %v2249
        %v2282 = vunpack.c.l.b16 %v2250
        %v2283 = vunpack.c.l.b16 %v2251
        %v2284 = vunpack.c.l.b16 %v2252
        %v2285 = vunpack.c.l.b16 %v2253
        %v2286 = vunpack.c.l.b16 %v2254
        %v2287 = vunpack.c.l.b16 %v2255
        %v2288 = vunpack.c.l.b16 %v2256
        %v2289 = vunpack.c.l.b16 %v2257
        %v2290 = vunpack.c.l.b16 %v2258
        %v2291 = vunpack.c.l.b16 %v2259
        %v2292 = vunpack.c.l.b16 %v2260
        %v2293 = vunpack.c.l.b16 %v2261
        %v2294 = vunpack.c.l.b16 %v2262
        %v2295 = vpack.c.b16 %v2280, %v2279
        %v2296 = vpack.c.b16 %v2282, %v2281
        %v2297 = vpack.c.b16 %v2284, %v2283
        %v2298 = vpack.c.b16 %v2286, %v2285
        %v2299 = vpack.c.b16 %v2288, %v2287
        %v2300 = vpack.c.b16 %v2290, %v2289
        %v2301 = vpack.c.b16 %v2292, %v2291
        %v2302 = vpack.c.b16 %v2294, %v2293
        %2311 = vmatprep.subr.bf16.mxu0 0
        %2312 = vmatpush1.bf16.msra.mxu0 %v2302
        %2313 = vmatprep.subr.bf16.mxu0 0
        %2314 = vmatpush1.bf16.msra.mxu0 %v2301
        %2315 = vmatprep.subr.bf16.mxu0 0
        %2316 = vmatpush1.bf16.msra.mxu0 %v2300
        %2317 = vmatprep.subr.bf16.mxu0 0
        %2318 = vmatpush1.bf16.msra.mxu0 %v2299
        %2319 = vmatprep.subr.bf16.mxu0 0
        %2320 = vmatpush1.bf16.msra.mxu0 %v2298
        %2321 = vmatprep.subr.bf16.mxu0 0
        %2322 = vmatpush1.bf16.msra.mxu0 %v2297
        %2323 = vmatprep.subr.bf16.mxu0 0
        %2324 = vmatpush1.bf16.msra.mxu0 %v2296
        %2325 = vmatprep.subr.bf16.mxu0 0
        %2326 = vmatpush1.bf16.msra.mxu0 %v2295
        %2327 = vmatprep.subr.bf16.mxu0 0
        %2328 = vmatpush2.bf16.msra.mxu0 0
        %2329 = vmatprep.subr.bf16.mxu0 0
        %2330 = vmatpush2.bf16.msra.mxu0 0
        %2331 = vmatprep.subr.bf16.mxu0 0
        %2332 = vmatpush2.bf16.msra.mxu0 0
        %2333 = vmatprep.subr.bf16.mxu0 0
        %2334 = vmatpush2.bf16.msra.mxu0 0
        %2335 = vmatprep.subr.bf16.mxu0 0
        %2336 = vmatpush2.bf16.msra.mxu0 0
        %2337 = vmatprep.subr.bf16.mxu0 0
        %2338 = vmatpush2.bf16.msra.mxu0 0
        %2339 = vmatprep.subr.bf16.mxu0 0
        %2340 = vmatpush2.bf16.msra.mxu0 0
        %2341 = vmatprep.subr.bf16.mxu0 0
        %2342 = vmatpush2.bf16.msra.mxu0 0
        %2343 = vmatprep.mubr.bf16.mxu0 0
        %2344 = vmatmul.mubr.bf16.gmra.mxu0 %v2237
        %v2345 = vpop.f32.mrf.mxu0
        %v2346 = vadd.f32 0.0, %v2345
        %v2347 = vpop.f32.mrf.mxu0
        %v2348 = vpop.f32.mrf.mxu0
        %v2349 = vadd.f32 0.0, %v2348
        %v2350 = vpop.f32.mrf.mxu0
        %2351 = vmatprep.mubr.bf16.mxu0 0
        %2352 = vmatmul.mubr.bf16.gmra.mxu0 %v2238
        %v2353 = vpop.f32.mrf.mxu0
        %v2354 = vadd.f32 0.0, %v2353
        %v2355 = vpop.f32.mrf.mxu0
        %v2356 = vpop.f32.mrf.mxu0
        %v2357 = vadd.f32 0.0, %v2356
        %v2358 = vpop.f32.mrf.mxu0
        %2359 = vmatprep.mubr.bf16.mxu0 0
        %2360 = vmatmul.mubr.bf16.gmra.mxu0 %v2239
        %v2361 = vpop.f32.mrf.mxu0
        %v2362 = vadd.f32 0.0, %v2361
        %v2363 = vpop.f32.mrf.mxu0
        %v2364 = vpop.f32.mrf.mxu0
        %v2365 = vadd.f32 0.0, %v2364
        %v2366 = vpop.f32.mrf.mxu0
        %2367 = vmatprep.mubr.bf16.mxu0 0
        %2368 = vmatmul.mubr.bf16.gmra.mxu0 %v2240
        %v2369 = vpop.f32.mrf.mxu0
        %v2370 = vadd.f32 0.0, %v2369
        %v2371 = vpop.f32.mrf.mxu0
        %v2372 = vpop.f32.mrf.mxu0
        %v2373 = vadd.f32 0.0, %v2372
        %v2374 = vpop.f32.mrf.mxu0
        %2375 = vmatprep.mubr.bf16.mxu0 0
        %2376 = vmatmul.mubr.bf16.gmra.mxu0 %v2241
        %v2377 = vpop.f32.mrf.mxu0
        %v2378 = vadd.f32 0.0, %v2377
        %v2379 = vpop.f32.mrf.mxu0
        %v2380 = vpop.f32.mrf.mxu0
        %v2381 = vadd.f32 0.0, %v2380
        %v2382 = vpop.f32.mrf.mxu0
        %2383 = vmatprep.mubr.bf16.mxu0 0
        %2384 = vmatmul.mubr.bf16.gmra.mxu0 %v2242
        %v2385 = vpop.f32.mrf.mxu0
        %v2386 = vadd.f32 0.0, %v2385
        %v2387 = vpop.f32.mrf.mxu0
        %v2388 = vpop.f32.mrf.mxu0
        %v2389 = vadd.f32 0.0, %v2388
        %v2390 = vpop.f32.mrf.mxu0
        %2391 = vmatprep.mubr.bf16.mxu0 0
        %2392 = vmatmul.mubr.bf16.gmra.mxu0 %v2243
        %v2393 = vpop.f32.mrf.mxu0
        %v2394 = vadd.f32 0.0, %v2393
        %v2395 = vpop.f32.mrf.mxu0
        %v2396 = vpop.f32.mrf.mxu0
        %v2397 = vadd.f32 0.0, %v2396
        %v2398 = vpop.f32.mrf.mxu0
        %2399 = vmatprep.mubr.bf16.mxu0 0
        %2400 = vmatmul.mubr.bf16.gmra.mxu0 %v2244
        %v2401 = vpop.f32.mrf.mxu0
        %v2402 = vadd.f32 0.0, %v2401
        %v2403 = vpop.f32.mrf.mxu0
        %v2404 = vpop.f32.mrf.mxu0
        %v2405 = vadd.f32 0.0, %v2404
        %v2406 = vpop.f32.mrf.mxu0
        %2407 = vmatprep.mubr.bf16.mxu0 0
        %2408 = vmatmul.mubr.bf16.gmra.mxu0 %v2245
        %v2409 = vpop.f32.mrf.mxu0
        %v2410 = vadd.f32 0.0, %v2409
        %v2411 = vpop.f32.mrf.mxu0
        %v2412 = vpop.f32.mrf.mxu0
        %v2413 = vadd.f32 0.0, %v2412
        %v2414 = vpop.f32.mrf.mxu0
        %2415 = vdwg.mxu0
        %v2416 = vadd.f32 %v2149, %v2346
        %v2417 = vadd.f32 %v2152, %v2349
        %v2418 = vadd.f32 %v2157, %v2354
        %v2419 = vadd.f32 %v2160, %v2357
        %v2420 = vadd.f32 %v2165, %v2362
        %v2421 = vadd.f32 %v2168, %v2365
        %v2422 = vadd.f32 %v2173, %v2370
        %v2423 = vadd.f32 %v2176, %v2373
        %v2424 = vadd.f32 %v2181, %v2378
        %v2425 = vadd.f32 %v2184, %v2381
        %v2426 = vadd.f32 %v2189, %v2386
        %v2427 = vadd.f32 %v2192, %v2389
        %v2428 = vadd.f32 %v2197, %v2394
        %v2429 = vadd.f32 %v2200, %v2397
        %v2430 = vadd.f32 %v2205, %v2402
        %v2431 = vadd.f32 %v2208, %v2405
        %v2432 = vadd.f32 %v2213, %v2410
        %v2433 = vadd.f32 %v2216, %v2413
        %v2435 = vsel %vm1065, %v2433, 0
        %2437 = vmatprep.subr.mxu0 0.0
        %2438 = vmatpush1.msra.mxu0 %v2431
        %2439 = vmatprep.subr.mxu0 0.0
        %2440 = vmatpush1.msra.mxu0 %v2430
        %2441 = vmatprep.subr.mxu0 0.0
        %2442 = vmatpush1.msra.mxu0 %v2429
        %2443 = vmatprep.subr.mxu0 0.0
        %2444 = vmatpush1.msra.mxu0 %v2428
        %2445 = vmatprep.subr.mxu0 0.0
        %2446 = vmatpush1.msra.mxu0 %v2427
        %2447 = vmatprep.subr.mxu0 0.0
        %2448 = vmatpush1.msra.mxu0 %v2426
        %2449 = vmatprep.subr.mxu0 0.0
        %2450 = vmatpush1.msra.mxu0 %v2425
        %2451 = vmatprep.subr.mxu0 0.0
        %2452 = vmatpush1.msra.mxu0 %v2424
        %2453 = vmatprep.subr.mxu0 0.0
        %2454 = vmatpush1.msra.mxu0 %v2423
        %2455 = vmatprep.subr.mxu0 0.0
        %2456 = vmatpush1.msra.mxu0 %v2422
        %2457 = vmatprep.subr.mxu0 0.0
        %2458 = vmatpush1.msra.mxu0 %v2421
        %2459 = vmatprep.subr.mxu0 0.0
        %2460 = vmatpush1.msra.mxu0 %v2420
        %2461 = vmatprep.subr.mxu0 0.0
        %2462 = vmatpush1.msra.mxu0 %v2419
        %2463 = vmatprep.subr.mxu0 0.0
        %2464 = vmatpush1.msra.mxu0 %v2418
        %2465 = vmatprep.subr.mxu0 0.0
        %2466 = vmatpush1.msra.mxu0 %v2417
        %2467 = vmatprep.subr.mxu0 0.0
        %2468 = vmatpush1.msra.mxu0 %v2416
        %2469 = vmatprep.subr.mxu0 0.0
        %2470 = vmatpush2.msra.mxu0 0.0
        %2471 = vmatprep.subr.mxu0 0.0
        %2472 = vmatpush2.msra.mxu0 0.0
        %2473 = vmatprep.subr.mxu0 0.0
        %2474 = vmatpush2.msra.mxu0 0.0
        %2475 = vmatprep.subr.mxu0 0.0
        %2476 = vmatpush2.msra.mxu0 0.0
        %2477 = vmatprep.subr.mxu0 0.0
        %2478 = vmatpush2.msra.mxu0 0.0
        %2479 = vmatprep.subr.mxu0 0.0
        %2480 = vmatpush2.msra.mxu0 0.0
        %2481 = vmatprep.subr.mxu0 0.0
        %2482 = vmatpush2.msra.mxu0 0.0
        %2483 = vmatprep.subr.mxu0 0.0
        %2484 = vmatpush2.msra.mxu0 0.0
        %2485 = vmatprep.subr.mxu0 0.0
        %2486 = vmatpush2.msra.mxu0 0.0
        %2487 = vmatprep.subr.mxu0 0.0
        %2488 = vmatpush2.msra.mxu0 0.0
        %2489 = vmatprep.subr.mxu0 0.0
        %2490 = vmatpush2.msra.mxu0 0.0
        %2491 = vmatprep.subr.mxu0 0.0
        %2492 = vmatpush2.msra.mxu0 0.0
        %2493 = vmatprep.subr.mxu0 0.0
        %2494 = vmatpush2.msra.mxu0 0.0
        %2495 = vmatprep.subr.mxu0 0.0
        %2496 = vmatpush2.msra.mxu0 0.0
        %2497 = vmatprep.subr.mxu0 0.0
        %2498 = vmatpush2.msra.mxu0 %v2435
        %2499 = vmatprep.subr.mxu0 0.0
        %2500 = vmatpush2.msra.mxu0 %v2432
        %2501 = vmatprep.mubr.f32.mxu0 %v1063
        %2502 = vmatmul.mubr.f32.gmra.mxu0 %v372
        %v2503 = vpop.f32.mrf.mxu0
        %v2504 = vadd.f32 0.0, %v2503
        %v2505 = vpop.f32.mrf.mxu0
        %2506 = vdwg.mxu0
        %v2507 = vmul.f32 %v2416, %v2416
        %v2508 = vmul.f32 %v2417, %v2417
        %v2509 = vmul.f32 %v2418, %v2418
        %v2510 = vmul.f32 %v2419, %v2419
        %v2511 = vmul.f32 %v2420, %v2420
        %v2512 = vmul.f32 %v2421, %v2421
        %v2513 = vmul.f32 %v2422, %v2422
        %v2514 = vmul.f32 %v2423, %v2423
        %v2515 = vmul.f32 %v2424, %v2424
        %v2516 = vmul.f32 %v2425, %v2425
        %v2517 = vmul.f32 %v2426, %v2426
        %v2518 = vmul.f32 %v2427, %v2427
        %v2519 = vmul.f32 %v2428, %v2428
        %v2520 = vmul.f32 %v2429, %v2429
        %v2521 = vmul.f32 %v2430, %v2430
        %v2522 = vmul.f32 %v2431, %v2431
        %v2523 = vmul.f32 %v2432, %v2432
        %v2524 = vmul.f32 %v2433, %v2433
        %v2526 = vsel %vm1065, %v2524, 0
        %2528 = vmatprep.subr.mxu0 0.0
        %2529 = vmatpush1.msra.mxu0 %v2522
        %2530 = vmatprep.subr.mxu0 0.0
        %2531 = vmatpush1.msra.mxu0 %v2521
        %2532 = vmatprep.subr.mxu0 0.0
        %2533 = vmatpush1.msra.mxu0 %v2520
        %2534 = vmatprep.subr.mxu0 0.0
        %2535 = vmatpush1.msra.mxu0 %v2519
        %2536 = vmatprep.subr.mxu0 0.0
        %2537 = vmatpush1.msra.mxu0 %v2518
        %2538 = vmatprep.subr.mxu0 0.0
        %2539 = vmatpush1.msra.mxu0 %v2517
        %2540 = vmatprep.subr.mxu0 0.0
        %2541 = vmatpush1.msra.mxu0 %v2516
        %2542 = vmatprep.subr.mxu0 0.0
        %2543 = vmatpush1.msra.mxu0 %v2515
        %2544 = vmatprep.subr.mxu0 0.0
        %2545 = vmatpush1.msra.mxu0 %v2514
        %2546 = vmatprep.subr.mxu0 0.0
        %2547 = vmatpush1.msra.mxu0 %v2513
        %2548 = vmatprep.subr.mxu0 0.0
        %2549 = vmatpush1.msra.mxu0 %v2512
        %2550 = vmatprep.subr.mxu0 0.0
        %2551 = vmatpush1.msra.mxu0 %v2511
        %2552 = vmatprep.subr.mxu0 0.0
        %2553 = vmatpush1.msra.mxu0 %v2510
        %2554 = vmatprep.subr.mxu0 0.0
        %2555 = vmatpush1.msra.mxu0 %v2509
        %2556 = vmatprep.subr.mxu0 0.0
        %2557 = vmatpush1.msra.mxu0 %v2508
        %2558 = vmatprep.subr.mxu0 0.0
        %2559 = vmatpush1.msra.mxu0 %v2507
        %2560 = vmatprep.subr.mxu0 0.0
        %2561 = vmatpush2.msra.mxu0 0.0
        %2562 = vmatprep.subr.mxu0 0.0
        %2563 = vmatpush2.msra.mxu0 0.0
        %2564 = vmatprep.subr.mxu0 0.0
        %2565 = vmatpush2.msra.mxu0 0.0
        %2566 = vmatprep.subr.mxu0 0.0
        %2567 = vmatpush2.msra.mxu0 0.0
        %2568 = vmatprep.subr.mxu0 0.0
        %2569 = vmatpush2.msra.mxu0 0.0
        %2570 = vmatprep.subr.mxu0 0.0
        %2571 = vmatpush2.msra.mxu0 0.0
        %2572 = vmatprep.subr.mxu0 0.0
        %2573 = vmatpush2.msra.mxu0 0.0
        %2574 = vmatprep.subr.mxu0 0.0
        %2575 = vmatpush2.msra.mxu0 0.0
        %2576 = vmatprep.subr.mxu0 0.0
        %2577 = vmatpush2.msra.mxu0 0.0
        %2578 = vmatprep.subr.mxu0 0.0
        %2579 = vmatpush2.msra.mxu0 0.0
        %2580 = vmatprep.subr.mxu0 0.0
        %2581 = vmatpush2.msra.mxu0 0.0
        %2582 = vmatprep.subr.mxu0 0.0
        %2583 = vmatpush2.msra.mxu0 0.0
        %2584 = vmatprep.subr.mxu0 0.0
        %2585 = vmatpush2.msra.mxu0 0.0
        %2586 = vmatprep.subr.mxu0 0.0
        %2587 = vmatpush2.msra.mxu0 0.0
        %2588 = vmatprep.subr.mxu0 0.0
        %2589 = vmatpush2.msra.mxu0 %v2526
        %2590 = vmatprep.subr.mxu0 0.0
        %2591 = vmatpush2.msra.mxu0 %v2523
        %2592 = vmatprep.mubr.f32.mxu0 %v1063
        %2593 = vmatmul.mubr.f32.gmra.mxu0 %v372
        %v2594 = vpop.f32.mrf.mxu0
        %v2595 = vadd.f32 0.0, %v2594
        %v2596 = vpop.f32.mrf.mxu0
        %2597 = vdwg.mxu0
        %2598 = vmatprep.subr.mxu0 0.0
        %2599 = vmatpush1.msra.mxu0 %v407
        %2600 = vmatprep.subr.mxu0 0.0
        %2601 = vmatpush1.msra.mxu0 %v406
        %2602 = vmatprep.subr.mxu0 0.0
        %2603 = vmatpush1.msra.mxu0 %v405
        %2604 = vmatprep.subr.mxu0 0.0
        %2605 = vmatpush1.msra.mxu0 %v404
        %2606 = vmatprep.subr.mxu0 0.0
        %2607 = vmatpush1.msra.mxu0 %v403
        %2608 = vmatprep.subr.mxu0 0.0
        %2609 = vmatpush1.msra.mxu0 %v402
        %2610 = vmatprep.subr.mxu0 0.0
        %2611 = vmatpush1.msra.mxu0 %v401
        %2612 = vmatprep.subr.mxu0 0.0
        %2613 = vmatpush1.msra.mxu0 %v400
        %2614 = vmatprep.subr.mxu0 0.0
        %2615 = vmatpush1.msra.mxu0 %v399
        %2616 = vmatprep.subr.mxu0 0.0
        %2617 = vmatpush1.msra.mxu0 %v398
        %2618 = vmatprep.subr.mxu0 0.0
        %2619 = vmatpush1.msra.mxu0 %v397
        %2620 = vmatprep.subr.mxu0 0.0
        %2621 = vmatpush1.msra.mxu0 %v396
        %2622 = vmatprep.subr.mxu0 0.0
        %2623 = vmatpush1.msra.mxu0 %v395
        %2624 = vmatprep.subr.mxu0 0.0
        %2625 = vmatpush1.msra.mxu0 %v394
        %2626 = vmatprep.subr.mxu0 0.0
        %2627 = vmatpush1.msra.mxu0 %v393
        %2628 = vmatprep.subr.mxu0 0.0
        %2629 = vmatpush1.msra.mxu0 %v392
        %2630 = vmatprep.subr.mxu0 0.0
        %2631 = vmatpush2.msra.mxu0 0.0
        %2632 = vmatprep.subr.mxu0 0.0
        %2633 = vmatpush2.msra.mxu0 0.0
        %2634 = vmatprep.subr.mxu0 0.0
        %2635 = vmatpush2.msra.mxu0 0.0
        %2636 = vmatprep.subr.mxu0 0.0
        %2637 = vmatpush2.msra.mxu0 0.0
        %2638 = vmatprep.subr.mxu0 0.0
        %2639 = vmatpush2.msra.mxu0 0.0
        %2640 = vmatprep.subr.mxu0 0.0
        %2641 = vmatpush2.msra.mxu0 0.0
        %2642 = vmatprep.subr.mxu0 0.0
        %2643 = vmatpush2.msra.mxu0 0.0
        %2644 = vmatprep.subr.mxu0 0.0
        %2645 = vmatpush2.msra.mxu0 0.0
        %2646 = vmatprep.subr.mxu0 0.0
        %2647 = vmatpush2.msra.mxu0 0.0
        %2648 = vmatprep.subr.mxu0 0.0
        %2649 = vmatpush2.msra.mxu0 0.0
        %2650 = vmatprep.subr.mxu0 0.0
        %2651 = vmatpush2.msra.mxu0 0.0
        %2652 = vmatprep.subr.mxu0 0.0
        %2653 = vmatpush2.msra.mxu0 0.0
        %2654 = vmatprep.subr.mxu0 0.0
        %2655 = vmatpush2.msra.mxu0 0.0
        %2656 = vmatprep.subr.mxu0 0.0
        %2657 = vmatpush2.msra.mxu0 0.0
        %2658 = vmatprep.subr.mxu0 0.0
        %2659 = vmatpush2.msra.mxu0 0.0
        %2660 = vmatprep.subr.mxu0 0.0
        %2661 = vmatpush2.msra.mxu0 0.0
        %2662 = vmatprep.mubr.f32.mxu0 0.0
        %2663 = vmatmul.mubr.f32.gmra.mxu0 %v2504
        %v2664 = vpop.f32.mrf.mxu0
        %v2665 = vadd.f32 0.0, %v2664
        %v2666 = vpop.f32.mrf.mxu0
        %2667 = vdwg.mxu0
        %2668 = vmatprep.subr.mxu0 0.0
        %2669 = vmatpush1.msra.mxu0 %v407
        %2670 = vmatprep.subr.mxu0 0.0
        %2671 = vmatpush1.msra.mxu0 %v406
        %2672 = vmatprep.subr.mxu0 0.0
        %2673 = vmatpush1.msra.mxu0 %v405
        %2674 = vmatprep.subr.mxu0 0.0
        %2675 = vmatpush1.msra.mxu0 %v404
        %2676 = vmatprep.subr.mxu0 0.0
        %2677 = vmatpush1.msra.mxu0 %v403
        %2678 = vmatprep.subr.mxu0 0.0
        %2679 = vmatpush1.msra.mxu0 %v402
        %2680 = vmatprep.subr.mxu0 0.0
        %2681 = vmatpush1.msra.mxu0 %v401
        %2682 = vmatprep.subr.mxu0 0.0
        %2683 = vmatpush1.msra.mxu0 %v400
        %2684 = vmatprep.subr.mxu0 0.0
        %2685 = vmatpush1.msra.mxu0 %v399
        %2686 = vmatprep.subr.mxu0 0.0
        %2687 = vmatpush1.msra.mxu0 %v398
        %2688 = vmatprep.subr.mxu0 0.0
        %2689 = vmatpush1.msra.mxu0 %v397
        %2690 = vmatprep.subr.mxu0 0.0
        %2691 = vmatpush1.msra.mxu0 %v396
        %2692 = vmatprep.subr.mxu0 0.0
        %2693 = vmatpush1.msra.mxu0 %v395
        %2694 = vmatprep.subr.mxu0 0.0
        %2695 = vmatpush1.msra.mxu0 %v394
        %2696 = vmatprep.subr.mxu0 0.0
        %2697 = vmatpush1.msra.mxu0 %v393
        %2698 = vmatprep.subr.mxu0 0.0
        %2699 = vmatpush1.msra.mxu0 %v392
        %2700 = vmatprep.subr.mxu0 0.0
        %2701 = vmatpush2.msra.mxu0 0.0
        %2702 = vmatprep.subr.mxu0 0.0
        %2703 = vmatpush2.msra.mxu0 0.0
        %2704 = vmatprep.subr.mxu0 0.0
        %2705 = vmatpush2.msra.mxu0 0.0
        %2706 = vmatprep.subr.mxu0 0.0
        %2707 = vmatpush2.msra.mxu0 0.0
        %2708 = vmatprep.subr.mxu0 0.0
        %2709 = vmatpush2.msra.mxu0 0.0
        %2710 = vmatprep.subr.mxu0 0.0
        %2711 = vmatpush2.msra.mxu0 0.0
        %2712 = vmatprep.subr.mxu0 0.0
        %2713 = vmatpush2.msra.mxu0 0.0
        %2714 = vmatprep.subr.mxu0 0.0
        %2715 = vmatpush2.msra.mxu0 0.0
        %2716 = vmatprep.subr.mxu0 0.0
        %2717 = vmatpush2.msra.mxu0 0.0
        %2718 = vmatprep.subr.mxu0 0.0
        %2719 = vmatpush2.msra.mxu0 0.0
        %2720 = vmatprep.subr.mxu0 0.0
        %2721 = vmatpush2.msra.mxu0 0.0
        %2722 = vmatprep.subr.mxu0 0.0
        %2723 = vmatpush2.msra.mxu0 0.0
        %2724 = vmatprep.subr.mxu0 0.0
        %2725 = vmatpush2.msra.mxu0 0.0
        %2726 = vmatprep.subr.mxu0 0.0
        %2727 = vmatpush2.msra.mxu0 0.0
        %2728 = vmatprep.subr.mxu0 0.0
        %2729 = vmatpush2.msra.mxu0 0.0
        %2730 = vmatprep.subr.mxu0 0.0
        %2731 = vmatpush2.msra.mxu0 0.0
        %2732 = vmatprep.mubr.f32.mxu0 0.0
        %2733 = vmatmul.mubr.f32.gmra.mxu0 %v2595
        %v2734 = vpop.f32.mrf.mxu0
        %v2735 = vadd.f32 0.0, %v2734
        %v2736 = vpop.f32.mrf.mxu0
        %2737 = vdwg.mxu0
        %v2738 = vmul.f32 %v2665, %v2665
        %v2739 = vsub.f32 %v2735, %v2738
        %v2740 = vadd.f32 %v2739, 1e-05
        %v2741 = vrsqrt.pop %v2740
        %v2742 = vld [vmem:[%s7] sm:$0x1]
        %v2743 = vlaneseq
        %v2744 = vshrl.u32 %v2743, 7
        %v2745 = vsub.s32 0, %v2744
        %v2746 = vrot.slane %v2742, %v2745
        %v2747 = vmul.f32 %v2741, %v2746
        %v2748 = vld [vmem:[%s7 + $0x1] sm:$0x1]
        %v2749 = vmul.f32 %v2665, %v2747
        %v2750 = vlaneseq
        %v2751 = vshrl.u32 %v2750, 7
        %v2752 = vsub.s32 0, %v2751
        %v2753 = vrot.slane %v2748, %v2752
        %v2754 = vsub.f32 %v2753, %v2749
        %2755 = vmatprep.subr.mxu0 0.0
        %2756 = vmatpush1.msra.mxu0 0.0
        %2757 = vmatprep.subr.mxu0 0.0
        %2758 = vmatpush1.msra.mxu0 0.0
        %2759 = vmatprep.subr.mxu0 0.0
        %2760 = vmatpush1.msra.mxu0 0.0
        %2761 = vmatprep.subr.mxu0 0.0
        %2762 = vmatpush1.msra.mxu0 0.0
        %2763 = vmatprep.subr.mxu0 0.0
        %2764 = vmatpush1.msra.mxu0 0.0
        %2765 = vmatprep.subr.mxu0 0.0
        %2766 = vmatpush1.msra.mxu0 0.0
        %2767 = vmatprep.subr.mxu0 0.0
        %2768 = vmatpush1.msra.mxu0 0.0
        %2769 = vmatprep.subr.mxu0 0.0
        %2770 = vmatpush1.msra.mxu0 0.0
        %2771 = vmatprep.subr.mxu0 0.0
        %2772 = vmatpush1.msra.mxu0 0.0
        %2773 = vmatprep.subr.mxu0 0.0
        %2774 = vmatpush1.msra.mxu0 0.0
        %2775 = vmatprep.subr.mxu0 0.0
        %2776 = vmatpush1.msra.mxu0 0.0
        %2777 = vmatprep.subr.mxu0 0.0
        %2778 = vmatpush1.msra.mxu0 0.0
        %2779 = vmatprep.subr.mxu0 0.0
        %2780 = vmatpush1.msra.mxu0 0.0
        %2781 = vmatprep.subr.mxu0 0.0
        %2782 = vmatpush1.msra.mxu0 0.0
        %2783 = vmatprep.subr.mxu0 0.0
        %2784 = vmatpush1.msra.mxu0 0.0
        %2785 = vmatprep.subr.mxu0 0.0
        %2786 = vmatpush1.msra.mxu0 %v2747
        %2787 = vmatprep.subr.mxu0 0.0
        %2788 = vmatpush2.msra.mxu0 0.0
        %2789 = vmatprep.subr.mxu0 0.0
        %2790 = vmatpush2.msra.mxu0 0.0
        %2791 = vmatprep.subr.mxu0 0.0
        %2792 = vmatpush2.msra.mxu0 0.0
        %2793 = vmatprep.subr.mxu0 0.0
        %2794 = vmatpush2.msra.mxu0 0.0
        %2795 = vmatprep.subr.mxu0 0.0
        %2796 = vmatpush2.msra.mxu0 0.0
        %2797 = vmatprep.subr.mxu0 0.0
        %2798 = vmatpush2.msra.mxu0 0.0
        %2799 = vmatprep.subr.mxu0 0.0
        %2800 = vmatpush2.msra.mxu0 0.0
        %2801 = vmatprep.subr.mxu0 0.0
        %2802 = vmatpush2.msra.mxu0 0.0
        %2803 = vmatprep.subr.mxu0 0.0
        %2804 = vmatpush2.msra.mxu0 0.0
        %2805 = vmatprep.subr.mxu0 0.0
        %2806 = vmatpush2.msra.mxu0 0.0
        %2807 = vmatprep.subr.mxu0 0.0
        %2808 = vmatpush2.msra.mxu0 0.0
        %2809 = vmatprep.subr.mxu0 0.0
        %2810 = vmatpush2.msra.mxu0 0.0
        %2811 = vmatprep.subr.mxu0 0.0
        %2812 = vmatpush2.msra.mxu0 0.0
        %2813 = vmatprep.subr.mxu0 0.0
        %2814 = vmatpush2.msra.mxu0 0.0
        %2815 = vmatprep.subr.mxu0 0.0
        %2816 = vmatpush2.msra.mxu0 0.0
        %2817 = vmatprep.subr.mxu0 0.0
        %2818 = vmatpush2.msra.mxu0 0.0
        %2819 = vmatprep.mubr.f32.mxu0 0.0
        %2820 = vmatmul.mubr.f32.gmra.mxu0 %v1389
        %v2821 = vpop.f32.mrf.mxu0
        %v2822 = vadd.f32 0.0, %v2821
        %v2823 = vpop.f32.mrf.mxu0
        %2824 = vmatprep.mubr.f32.mxu0 0.0
        %2825 = vmatmul.mubr.f32.gmra.mxu0 %v1392
        %v2826 = vpop.f32.mrf.mxu0
        %v2827 = vadd.f32 0.0, %v2826
        %v2828 = vpop.f32.mrf.mxu0
        %2829 = vmatprep.mubr.f32.mxu0 0.0
        %2830 = vmatmul.mubr.f32.gmra.mxu0 %v1395
        %v2831 = vpop.f32.mrf.mxu0
        %v2832 = vadd.f32 0.0, %v2831
        %v2833 = vpop.f32.mrf.mxu0
        %2834 = vmatprep.mubr.f32.mxu0 0.0
        %2835 = vmatmul.mubr.f32.gmra.mxu0 %v1398
        %v2836 = vpop.f32.mrf.mxu0
        %v2837 = vadd.f32 0.0, %v2836
        %v2838 = vpop.f32.mrf.mxu0
        %2839 = vmatprep.mubr.f32.mxu0 0.0
        %2840 = vmatmul.mubr.f32.gmra.mxu0 %v1401
        %v2841 = vpop.f32.mrf.mxu0
        %v2842 = vadd.f32 0.0, %v2841
        %v2843 = vpop.f32.mrf.mxu0
        %2844 = vmatprep.mubr.f32.mxu0 0.0
        %2845 = vmatmul.mubr.f32.gmra.mxu0 %v1404
        %v2846 = vpop.f32.mrf.mxu0
        %v2847 = vadd.f32 0.0, %v2846
        %v2848 = vpop.f32.mrf.mxu0
        %2849 = vmatprep.mubr.f32.mxu0 0.0
        %2850 = vmatmul.mubr.f32.gmra.mxu0 %v1407
        %v2851 = vpop.f32.mrf.mxu0
        %v2852 = vadd.f32 0.0, %v2851
        %v2853 = vpop.f32.mrf.mxu0
        %2854 = vmatprep.mubr.f32.mxu0 0.0
        %2855 = vmatmul.mubr.f32.gmra.mxu0 %v1410
        %v2856 = vpop.f32.mrf.mxu0
        %v2857 = vadd.f32 0.0, %v2856
        %v2858 = vpop.f32.mrf.mxu0
        %2859 = vmatprep.mubr.f32.mxu0 0.0
        %2860 = vmatmul.mubr.f32.gmra.mxu0 %v1413
        %v2861 = vpop.f32.mrf.mxu0
        %v2862 = vadd.f32 0.0, %v2861
        %v2863 = vpop.f32.mrf.mxu0
        %2864 = vmatprep.mubr.f32.mxu0 0.0
        %2865 = vmatmul.mubr.f32.gmra.mxu0 %v1416
        %v2866 = vpop.f32.mrf.mxu0
        %v2867 = vadd.f32 0.0, %v2866
        %v2868 = vpop.f32.mrf.mxu0
        %2869 = vmatprep.mubr.f32.mxu0 0.0
        %2870 = vmatmul.mubr.f32.gmra.mxu0 %v1419
        %v2871 = vpop.f32.mrf.mxu0
        %v2872 = vadd.f32 0.0, %v2871
        %v2873 = vpop.f32.mrf.mxu0
        %2874 = vmatprep.mubr.f32.mxu0 0.0
        %2875 = vmatmul.mubr.f32.gmra.mxu0 %v1422
        %v2876 = vpop.f32.mrf.mxu0
        %v2877 = vadd.f32 0.0, %v2876
        %v2878 = vpop.f32.mrf.mxu0
        %2879 = vmatprep.mubr.f32.mxu0 0.0
        %2880 = vmatmul.mubr.f32.gmra.mxu0 %v1425
        %v2881 = vpop.f32.mrf.mxu0
        %v2882 = vadd.f32 0.0, %v2881
        %v2883 = vpop.f32.mrf.mxu0
        %2884 = vmatprep.mubr.f32.mxu0 0.0
        %2885 = vmatmul.mubr.f32.gmra.mxu0 %v1428
        %v2886 = vpop.f32.mrf.mxu0
        %v2887 = vadd.f32 0.0, %v2886
        %v2888 = vpop.f32.mrf.mxu0
        %2889 = vmatprep.mubr.f32.mxu0 0.0
        %2890 = vmatmul.mubr.f32.gmra.mxu0 %v1431
        %v2891 = vpop.f32.mrf.mxu0
        %v2892 = vadd.f32 0.0, %v2891
        %v2893 = vpop.f32.mrf.mxu0
        %2894 = vmatprep.mubr.f32.mxu0 0.0
        %2895 = vmatmul.mubr.f32.gmra.mxu0 %v1434
        %v2896 = vpop.f32.mrf.mxu0
        %v2897 = vadd.f32 0.0, %v2896
        %v2898 = vpop.f32.mrf.mxu0
        %2899 = vmatprep.mubr.f32.mxu0 0.0
        %2900 = vmatmul.mubr.f32.gmra.mxu0 %v1437
        %v2901 = vpop.f32.mrf.mxu0
        %v2902 = vadd.f32 0.0, %v2901
        %v2903 = vpop.f32.mrf.mxu0
        %2904 = vmatprep.mubr.f32.mxu0 0.0
        %2905 = vmatmul.mubr.f32.gmra.mxu0 %v1440
        %v2906 = vpop.f32.mrf.mxu0
        %v2907 = vadd.f32 0.0, %v2906
        %v2908 = vpop.f32.mrf.mxu0
        %2909 = vdwg.mxu0
        %2910 = vmatprep.subr.mxu0 0.0
        %2911 = vmatpush1.msra.mxu0 0.0
        %2912 = vmatprep.subr.mxu0 0.0
        %2913 = vmatpush1.msra.mxu0 0.0
        %2914 = vmatprep.subr.mxu0 0.0
        %2915 = vmatpush1.msra.mxu0 0.0
        %2916 = vmatprep.subr.mxu0 0.0
        %2917 = vmatpush1.msra.mxu0 0.0
        %2918 = vmatprep.subr.mxu0 0.0
        %2919 = vmatpush1.msra.mxu0 0.0
        %2920 = vmatprep.subr.mxu0 0.0
        %2921 = vmatpush1.msra.mxu0 0.0
        %2922 = vmatprep.subr.mxu0 0.0
        %2923 = vmatpush1.msra.mxu0 0.0
        %2924 = vmatprep.subr.mxu0 0.0
        %2925 = vmatpush1.msra.mxu0 0.0
        %2926 = vmatprep.subr.mxu0 0.0
        %2927 = vmatpush1.msra.mxu0 0.0
        %2928 = vmatprep.subr.mxu0 0.0
        %2929 = vmatpush1.msra.mxu0 0.0
        %2930 = vmatprep.subr.mxu0 0.0
        %2931 = vmatpush1.msra.mxu0 0.0
        %2932 = vmatprep.subr.mxu0 0.0
        %2933 = vmatpush1.msra.mxu0 0.0
        %2934 = vmatprep.subr.mxu0 0.0
        %2935 = vmatpush1.msra.mxu0 0.0
        %2936 = vmatprep.subr.mxu0 0.0
        %2937 = vmatpush1.msra.mxu0 0.0
        %2938 = vmatprep.subr.mxu0 0.0
        %2939 = vmatpush1.msra.mxu0 0.0
        %2940 = vmatprep.subr.mxu0 0.0
        %2941 = vmatpush1.msra.mxu0 %v2754
        %2942 = vmatprep.subr.mxu0 0.0
        %2943 = vmatpush2.msra.mxu0 0.0
        %2944 = vmatprep.subr.mxu0 0.0
        %2945 = vmatpush2.msra.mxu0 0.0
        %2946 = vmatprep.subr.mxu0 0.0
        %2947 = vmatpush2.msra.mxu0 0.0
        %2948 = vmatprep.subr.mxu0 0.0
        %2949 = vmatpush2.msra.mxu0 0.0
        %2950 = vmatprep.subr.mxu0 0.0
        %2951 = vmatpush2.msra.mxu0 0.0
        %2952 = vmatprep.subr.mxu0 0.0
        %2953 = vmatpush2.msra.mxu0 0.0
        %2954 = vmatprep.subr.mxu0 0.0
        %2955 = vmatpush2.msra.mxu0 0.0
        %2956 = vmatprep.subr.mxu0 0.0
        %2957 = vmatpush2.msra.mxu0 0.0
        %2958 = vmatprep.subr.mxu0 0.0
        %2959 = vmatpush2.msra.mxu0 0.0
        %2960 = vmatprep.subr.mxu0 0.0
        %2961 = vmatpush2.msra.mxu0 0.0
        %2962 = vmatprep.subr.mxu0 0.0
        %2963 = vmatpush2.msra.mxu0 0.0
        %2964 = vmatprep.subr.mxu0 0.0
        %2965 = vmatpush2.msra.mxu0 0.0
        %2966 = vmatprep.subr.mxu0 0.0
        %2967 = vmatpush2.msra.mxu0 0.0
        %2968 = vmatprep.subr.mxu0 0.0
        %2969 = vmatpush2.msra.mxu0 0.0
        %2970 = vmatprep.subr.mxu0 0.0
        %2971 = vmatpush2.msra.mxu0 0.0
        %2972 = vmatprep.subr.mxu0 0.0
        %2973 = vmatpush2.msra.mxu0 0.0
        %2974 = vmatprep.mubr.f32.mxu0 0.0
        %2975 = vmatmul.mubr.f32.gmra.mxu0 %v1389
        %v2976 = vpop.f32.mrf.mxu0
        %v2977 = vadd.f32 0.0, %v2976
        %v2978 = vpop.f32.mrf.mxu0
        %2979 = vmatprep.mubr.f32.mxu0 0.0
        %2980 = vmatmul.mubr.f32.gmra.mxu0 %v1392
        %v2981 = vpop.f32.mrf.mxu0
        %v2982 = vadd.f32 0.0, %v2981
        %v2983 = vpop.f32.mrf.mxu0
        %2984 = vmatprep.mubr.f32.mxu0 0.0
        %2985 = vmatmul.mubr.f32.gmra.mxu0 %v1395
        %v2986 = vpop.f32.mrf.mxu0
        %v2987 = vadd.f32 0.0, %v2986
        %v2988 = vpop.f32.mrf.mxu0
        %2989 = vmatprep.mubr.f32.mxu0 0.0
        %2990 = vmatmul.mubr.f32.gmra.mxu0 %v1398
        %v2991 = vpop.f32.mrf.mxu0
        %v2992 = vadd.f32 0.0, %v2991
        %v2993 = vpop.f32.mrf.mxu0
        %2994 = vmatprep.mubr.f32.mxu0 0.0
        %2995 = vmatmul.mubr.f32.gmra.mxu0 %v1401
        %v2996 = vpop.f32.mrf.mxu0
        %v2997 = vadd.f32 0.0, %v2996
        %v2998 = vpop.f32.mrf.mxu0
        %2999 = vmatprep.mubr.f32.mxu0 0.0
        %3000 = vmatmul.mubr.f32.gmra.mxu0 %v1404
        %v3001 = vpop.f32.mrf.mxu0
        %v3002 = vadd.f32 0.0, %v3001
        %v3003 = vpop.f32.mrf.mxu0
        %3004 = vmatprep.mubr.f32.mxu0 0.0
        %3005 = vmatmul.mubr.f32.gmra.mxu0 %v1407
        %v3006 = vpop.f32.mrf.mxu0
        %v3007 = vadd.f32 0.0, %v3006
        %v3008 = vpop.f32.mrf.mxu0
        %3009 = vmatprep.mubr.f32.mxu0 0.0
        %3010 = vmatmul.mubr.f32.gmra.mxu0 %v1410
        %v3011 = vpop.f32.mrf.mxu0
        %v3012 = vadd.f32 0.0, %v3011
        %v3013 = vpop.f32.mrf.mxu0
        %3014 = vmatprep.mubr.f32.mxu0 0.0
        %3015 = vmatmul.mubr.f32.gmra.mxu0 %v1413
        %v3016 = vpop.f32.mrf.mxu0
        %v3017 = vadd.f32 0.0, %v3016
        %v3018 = vpop.f32.mrf.mxu0
        %3019 = vmatprep.mubr.f32.mxu0 0.0
        %3020 = vmatmul.mubr.f32.gmra.mxu0 %v1416
        %v3021 = vpop.f32.mrf.mxu0
        %v3022 = vadd.f32 0.0, %v3021
        %v3023 = vpop.f32.mrf.mxu0
        %3024 = vmatprep.mubr.f32.mxu0 0.0
        %3025 = vmatmul.mubr.f32.gmra.mxu0 %v1419
        %v3026 = vpop.f32.mrf.mxu0
        %v3027 = vadd.f32 0.0, %v3026
        %v3028 = vpop.f32.mrf.mxu0
        %3029 = vmatprep.mubr.f32.mxu0 0.0
        %3030 = vmatmul.mubr.f32.gmra.mxu0 %v1422
        %v3031 = vpop.f32.mrf.mxu0
        %v3032 = vadd.f32 0.0, %v3031
        %v3033 = vpop.f32.mrf.mxu0
        %3034 = vmatprep.mubr.f32.mxu0 0.0
        %3035 = vmatmul.mubr.f32.gmra.mxu0 %v1425
        %v3036 = vpop.f32.mrf.mxu0
        %v3037 = vadd.f32 0.0, %v3036
        %v3038 = vpop.f32.mrf.mxu0
        %3039 = vmatprep.mubr.f32.mxu0 0.0
        %3040 = vmatmul.mubr.f32.gmra.mxu0 %v1428
        %v3041 = vpop.f32.mrf.mxu0
        %v3042 = vadd.f32 0.0, %v3041
        %v3043 = vpop.f32.mrf.mxu0
        %3044 = vmatprep.mubr.f32.mxu0 0.0
        %3045 = vmatmul.mubr.f32.gmra.mxu0 %v1431
        %v3046 = vpop.f32.mrf.mxu0
        %v3047 = vadd.f32 0.0, %v3046
        %v3048 = vpop.f32.mrf.mxu0
        %3049 = vmatprep.mubr.f32.mxu0 0.0
        %3050 = vmatmul.mubr.f32.gmra.mxu0 %v1434
        %v3051 = vpop.f32.mrf.mxu0
        %v3052 = vadd.f32 0.0, %v3051
        %v3053 = vpop.f32.mrf.mxu0
        %3054 = vmatprep.mubr.f32.mxu0 0.0
        %3055 = vmatmul.mubr.f32.gmra.mxu0 %v1437
        %v3056 = vpop.f32.mrf.mxu0
        %v3057 = vadd.f32 0.0, %v3056
        %v3058 = vpop.f32.mrf.mxu0
        %3059 = vmatprep.mubr.f32.mxu0 0.0
        %3060 = vmatmul.mubr.f32.gmra.mxu0 %v1440
        %v3061 = vpop.f32.mrf.mxu0
        %v3062 = vadd.f32 0.0, %v3061
        %v3063 = vpop.f32.mrf.mxu0
        %3064 = vdwg.mxu0
        %v3065 = vmul.f32 %v2416, %v2822
        %v3066 = vmul.f32 %v2417, %v2827
        %v3067 = vmul.f32 %v2418, %v2832
        %v3068 = vmul.f32 %v2419, %v2837
        %v3069 = vmul.f32 %v2420, %v2842
        %v3070 = vmul.f32 %v2421, %v2847
        %v3071 = vmul.f32 %v2422, %v2852
        %v3072 = vmul.f32 %v2423, %v2857
        %v3073 = vmul.f32 %v2424, %v2862
        %v3074 = vmul.f32 %v2425, %v2867
        %v3075 = vmul.f32 %v2426, %v2872
        %v3076 = vmul.f32 %v2427, %v2877
        %v3077 = vmul.f32 %v2428, %v2882
        %v3078 = vmul.f32 %v2429, %v2887
        %v3079 = vmul.f32 %v2430, %v2892
        %v3080 = vmul.f32 %v2431, %v2897
        %v3081 = vmul.f32 %v2432, %v2902
        %v3082 = vmul.f32 %v2433, %v2907
        %v3083 = vadd.f32 %v3065, %v2977
        %v3084 = vadd.f32 %v3066, %v2982
        %v3085 = vadd.f32 %v3067, %v2987
        %v3086 = vadd.f32 %v3068, %v2992
        %v3087 = vadd.f32 %v3069, %v2997
        %v3088 = vadd.f32 %v3070, %v3002
        %v3089 = vadd.f32 %v3071, %v3007
        %v3090 = vadd.f32 %v3072, %v3012
        %v3091 = vadd.f32 %v3073, %v3017
        %v3092 = vadd.f32 %v3074, %v3022
        %v3093 = vadd.f32 %v3075, %v3027
        %v3094 = vadd.f32 %v3076, %v3032
        %v3095 = vadd.f32 %v3077, %v3037
        %v3096 = vadd.f32 %v3078, %v3042
        %v3097 = vadd.f32 %v3079, %v3047
        %v3098 = vadd.f32 %v3080, %v3052
        %v3099 = vadd.f32 %v3081, %v3057
        %v3100 = vadd.f32 %v3082, %v3062
        %vm3119 = vcmask 1046528
        %v3120 = vrot.slane %v354, 1
        %v3121 = vrot.slane %v355, 1
        %v3122 = vsel %vm3119, %v3120, %v3121
        %v3123 = vrot.slane %v356, 1
        %v3124 = vsel %vm3119, %v3121, %v3123
        %v3125 = vrot.slane %v357, 1
        %v3126 = vsel %vm3119, %v3123, %v3125
        %v3127 = vrot.slane %v358, 1
        %v3128 = vsel %vm3119, %v3125, %v3127
        %v3129 = vrot.slane %v359, 1
        %v3130 = vsel %vm3119, %v3127, %v3129
        %v3131 = vrot.slane %v360, 1
        %v3132 = vsel %vm3119, %v3129, %v3131
        %v3133 = vrot.slane %v361, 1
        %v3134 = vsel %vm3119, %v3131, %v3133
        %v3135 = vrot.slane %v362, 1
        %v3136 = vsel %vm3119, %v3133, %v3135
        %v3137 = vrot.slane %v363, 1
        %v3138 = vsel %vm3119, %v3135, %v3137
        %v3139 = vrot.slane %v364, 1
        %v3140 = vsel %vm3119, %v3137, %v3139
        %v3141 = vrot.slane %v365, 1
        %v3142 = vsel %vm3119, %v3139, %v3141
        %v3143 = vrot.slane %v366, 1
        %v3144 = vsel %vm3119, %v3141, %v3143
        %v3145 = vrot.slane %v367, 1
        %v3146 = vsel %vm3119, %v3143, %v3145
        %v3147 = vrot.slane %v368, 1
        %v3148 = vsel %vm3119, %v3145, %v3147
        %v3149 = vrot.slane %v369, 1
        %v3150 = vsel %vm3119, %v3147, %v3149
        %v3151 = vrot.slane %v370, 1
        %v3152 = vsel %vm3119, %v3149, %v3151
        %v3153 = vrot.slane %v371, 1
        %v3154 = vsel %vm3119, %v3151, %v3153
        %v3173 = vadd.f32 %v3083, %v3122
        %v3174 = vadd.f32 %v3084, %v3124
        %v3175 = vadd.f32 %v3085, %v3126
        %v3176 = vadd.f32 %v3086, %v3128
        %v3177 = vadd.f32 %v3087, %v3130
        %v3178 = vadd.f32 %v3088, %v3132
        %v3179 = vadd.f32 %v3089, %v3134
        %v3180 = vadd.f32 %v3090, %v3136
        %v3181 = vadd.f32 %v3091, %v3138
        %v3182 = vadd.f32 %v3092, %v3140
        %v3183 = vadd.f32 %v3093, %v3142
        %v3184 = vadd.f32 %v3094, %v3144
        %v3185 = vadd.f32 %v3095, %v3146
        %v3186 = vadd.f32 %v3096, %v3148
        %v3187 = vadd.f32 %v3097, %v3150
        %v3188 = vadd.f32 %v3098, %v3152
        %v3189 = vadd.f32 %v3099, %v3154
        %v3190 = vadd.f32 %v3100, %v3153
        %v3191 = vmax.f32 %v3173, 0.0
        %v3192 = vmax.f32 %v3174, 0.0
        %v3193 = vmax.f32 %v3175, 0.0
        %v3194 = vmax.f32 %v3176, 0.0
        %v3195 = vmax.f32 %v3177, 0.0
        %v3196 = vmax.f32 %v3178, 0.0
        %v3197 = vmax.f32 %v3179, 0.0
        %v3198 = vmax.f32 %v3180, 0.0
        %v3199 = vmax.f32 %v3181, 0.0
        %v3200 = vmax.f32 %v3182, 0.0
        %v3201 = vmax.f32 %v3183, 0.0
        %v3202 = vmax.f32 %v3184, 0.0
        %v3203 = vmax.f32 %v3185, 0.0
        %v3204 = vmax.f32 %v3186, 0.0
        %v3205 = vmax.f32 %v3187, 0.0
        %v3206 = vmax.f32 %v3188, 0.0
        %v3207 = vmax.f32 %v3189, 0.0
        %v3208 = vmax.f32 %v3190, 0.0
        %3209 = vst [vmem:[%s352] sm:$0xff] %v3191
        %3210 = vst [vmem:[%s352 + $0x8] sm:$0xff] %v3192
        %3211 = vst [vmem:[%s352 + $0x10] sm:$0xff] %v3193
        %3212 = vst [vmem:[%s352 + $0x18] sm:$0xff] %v3194
        %3213 = vst [vmem:[%s352 + $0x20] sm:$0xff] %v3195
        %3214 = vst [vmem:[%s352 + $0x28] sm:$0xff] %v3196
        %3215 = vst [vmem:[%s352 + $0x30] sm:$0xff] %v3197
        %3216 = vst [vmem:[%s352 + $0x38] sm:$0xff] %v3198
        %3217 = vst [vmem:[%s352 + $0x40] sm:$0xff] %v3199
        %3218 = vst [vmem:[%s352 + $0x48] sm:$0xff] %v3200
        %3219 = vst [vmem:[%s352 + $0x50] sm:$0xff] %v3201
        %3220 = vst [vmem:[%s352 + $0x58] sm:$0xff] %v3202
        %3221 = vst [vmem:[%s352 + $0x60] sm:$0xff] %v3203
        %3222 = vst [vmem:[%s352 + $0x68] sm:$0xff] %v3204
        %3223 = vst [vmem:[%s352 + $0x70] sm:$0xff] %v3205
        %3224 = vst [vmem:[%s352 + $0x78] sm:$0xff] %v3206
        %3225 = vst [vmem:[%s352 + $0x80] sm:$0xff] %v3207
        %3226 = vst [vmem:[%s352 + $0x88] sm:$0x3f] %v3208
        %3227 = vst [vmem:[%s352 + $0x8e] sm:$0x3] 0.0
        %s3228 = sand.u32 %s207, 1
        %s3229 = scalar_lea.sflag [#allocation5], %s3228
        %s3230 = sand.u32 %s207, 1
        %s3231 = smul.addr %s3230, 144
        %s3232 = scalar_lea.vmem [#allocation9], %s3231
        // Predicated region
        $region65: #{tpu_custom_call.1} parent=51 // pred_check
          %p3233 = pneg %p217
        $region66: #{tpu_custom_call.1} parent=51 // pred_check_branch
          %3235 = sbr.rel (%p3233) target = $region68
        $region67: #{tpu_custom_call.1} parent=51 // pred_region
          %s3237 = ssub.s32 2304, 2304
          %3238 = vsyncadd %s3229, %s3237
          %s3239 = smul.addr %s26, 18
          %s3240 = smul.addr %s3239, 128
          %s3241 = scalar_lea.hbm %s8, %s3240
          %s3242 = sshll.u32 %s3232, 4
          %s3243 = int_to_ptr.vmem [resolvable:$true] %s3242
          %3248 = dma.vmem_to_hbm [thread:$0]  %s3243, 2304, %s3241, %s3229, 128, 128, 8
        $region68: #{tpu_custom_call.1} parent=51 // pred_fallthru
          _
      $region52: #{tpu_custom_call.1} parent=5 // pred_fallthru
        _
      %p3249 = scmp.le.s32.totalorder 2, %s21
      // Predicated region
      $region69: #{tpu_custom_call.1} parent=5 // pred_check
        %p3250 = pneg %p3249
      $region70: #{tpu_custom_call.1} parent=5 // pred_check_branch
        %3252 = sbr.rel (%p3250) target = $region72
      $region71: #{tpu_custom_call.1} parent=5 // pred_region
        %s3253 = ssub.s32 %s21, 2
        // Predicated region
        $region73: #{tpu_custom_call.1} parent=71 // pred_check
          %p3254 = pneg %p223
        $region74: #{tpu_custom_call.1} parent=71 // pred_check_branch
          %3256 = sbr.rel (%p3254) target = $region76
        $region75: #{tpu_custom_call.1} parent=71 // pred_region
          %s3257 = sand.u32 %s208, 1
          %s3258 = scalar_lea.sflag [#allocation5], %s3257
          %s3259 = sand.u32 %s208, 1
          %s3260 = smul.addr %s3259, 144
          %s3261 = scalar_lea.vmem [#allocation9], %s3260
          %3262 = dma.done %s3258, 2304
        $region76: #{tpu_custom_call.1} parent=71 // pred_fallthru
          _
      $region72: #{tpu_custom_call.1} parent=5 // pred_fallthru
        _
    $region6: #{tpu_custom_call.1} parent=1 // loop_footer
      %s25 = sadd.s32 1, %s21
    $region7: #{tpu_custom_call.1} parent=1 // loop_footer_branch
      %20 = sbr.rel target = $region3
    $region8: #{tpu_custom_call.1} parent=1 // loop_exit
      _
    %3263 = vsyncpa [#allocation4], 1
    %s3264 = scalar_lea.sflag [#allocation4], 1
    %3265 = vsyncpa %s3264, 1
    %3266 = vsyncpa [#allocation7], 1
    %3267 = vsyncpa [#allocation5], 1
    %s3268 = scalar_lea.sflag [#allocation5], 1
    %3269 = vsyncpa %s3268, 1

</llo_original>
